<compile_context>
chip_gen: v5e
topology: v5e:2x2
jax: 0.10.0
libtpu: 0.0.40
codegen_flags: <defaults>
</compile_context>

<pallas_src>
import functools

import jax
import jax.numpy as jnp
from jax.experimental import pallas as pl
from jax.experimental.pallas import tpu as pltpu


def _mlp_kernel(x_ref, w1_ref, b1_ref, w2_ref, b2_ref, w3_ref, b3_ref, o_ref):
    # Layer 1: cast the f32 x tile to bf16 in-register (the only HBM pass over x
    # is the pipelined tile DMA), MXU matmul with f32 accumulation, VPU bias+ReLU.
    x = x_ref[...].astype(jnp.bfloat16)                                # (tb, D)
    h1 = jnp.dot(x, w1_ref[...], preferred_element_type=jnp.float32)   # (tb, 128)
    h1 = jnp.maximum(h1 + b1_ref[...], 0.0)

    # Layer 2: H2 zero-padded to 128 in the wrapper, so h2 vregs are lane-full.
    h2 = jnp.dot(h1.astype(jnp.bfloat16), w2_ref[...],
                 preferred_element_type=jnp.float32)                   # (tb, 128)
    h2 = jnp.maximum(h2 + b2_ref[...], 0.0)

    # Layer 3 (out_features == 1): a matmul would fill 1 MXU output column, so do
    # it as a VPU broadcast-multiply + XLU lane reduction (padded w3 rows are 0).
    col = jnp.sum(h2 * w3_ref[...], axis=-1, keepdims=True) + b3_ref[...]   # (tb, 1)

    # Lane-dense store: relayout (tb, 1) -> (1, 1, tb) so the output is written
    # with full-lane stores and a dense output DMA (XLU/relayout work only).
    o_ref[...] = col.reshape(o_ref.shape).astype(o_ref.dtype)


def _reference_forward(x, params, precision=None):
    """Pure-JAX reference / small-batch fallback path (f32)."""
    h1 = jnp.maximum(
        jnp.dot(x, params["w1"], precision=precision) + params["b1"], 0.0)
    h2 = jnp.maximum(
        jnp.dot(h1, params["w2"], precision=precision) + params["b2"], 0.0)
    return jnp.dot(h2, params["w3"], precision=precision) + params["b3"]


def _matched_reference(x, params):
    """Reference that mirrors the kernel's bf16-input / f32-accumulate path."""
    xb = x.astype(jnp.bfloat16)
    w1b = params["w1"].astype(jnp.bfloat16)
    w2b = params["w2"].astype(jnp.bfloat16)
    h1 = jnp.maximum(
        jnp.dot(xb, w1b, preferred_element_type=jnp.float32) + params["b1"], 0.0)
    h2 = jnp.maximum(
        jnp.dot(h1.astype(jnp.bfloat16), w2b,
                preferred_element_type=jnp.float32) + params["b2"], 0.0)
    return (jnp.sum(h2 * params["w3"].reshape(1, -1), axis=-1, keepdims=True)
            + params["b3"])


@functools.partial(jax.jit, static_argnames=("block_b", "min_pallas_batch"))
def sales_model_forward(x, params, *, block_b=2048, min_pallas_batch=256):
    """Forward pass of SalesModel.

    x: (B, input_dim) float32
    params: w1 (D,128), b1 (128,), w2 (128,64), b2 (64,), w3 (64,1), b3 (1,)
    returns: (B, 1) float32
    """
    B, D = x.shape
    w1, b1 = params["w1"], params["b1"]
    w2, b2 = params["w2"], params["b2"]
    w3, b3 = params["w3"], params["b3"]
    H1 = w1.shape[1]                       # 128
    H2 = w2.shape[1]                       # 64
    H2P = max(128, pl.cdiv(H2, 128) * 128)  # lane-pad the 64-wide hidden to 128

    # Tiny batches: per-grid-step + pallas_call overhead dominates a model this
    # small, so let XLA's fused HLO handle it.
    if B < min_pallas_batch:
        return _reference_forward(x, params)

    # Batch tiling: clamp the tile to B (single full-array block, any B), else a
    # multiple-of-8 tile with a ragged (overhanging) last block whose garbage
    # rows are independent and sliced off below.
    if B <= block_b:
        block_b = B
    else:
        assert block_b % 8 == 0, "block_b must be a multiple of the sublane count"
    n_blocks = pl.cdiv(B, block_b)
    # NOTE(v7x): the 1-D "parallel" grid is what shards across the 2 TensorCores;
    # for large B prefer a block_b that makes n_blocks even.

    # Weights/biases: one-time tiny prep (bf16 for the MXU, H2 padded to 128).
    w1_bf16 = w1.astype(jnp.bfloat16)                                    # (D, 128)
    w2_bf16 = jnp.pad(w2, ((0, 0), (0, H2P - H2))).astype(jnp.bfloat16)  # (128, 128)
    b1_2d = b1.reshape(1, H1).astype(jnp.float32)                        # (1, 128)
    b2_2d = jnp.pad(b2, (0, H2P - H2)).reshape(1, H2P).astype(jnp.float32)
    w3_row = jnp.pad(w3.reshape(-1), (0, H2P - H2)).reshape(1, H2P).astype(jnp.float32)
    b3_2d = b3.reshape(1, 1).astype(jnp.float32)

    # TODO(synk): for large input_dim, single-buffer the constant-index weight
    # specs (pipeline_mode=pl.Buffered(1)) and set vmem_limit_bytes explicitly
    # (v5e scoped default is 16 MiB, v7x physical VMEM is 64 MiB).
    out = pl.pallas_call(
        _mlp_kernel,
        out_shape=jax.ShapeDtypeStruct((n_blocks, 1, block_b), jnp.float32),
        grid_spec=pltpu.PrefetchScalarGridSpec(
            num_scalar_prefetch=0,
            grid=(n_blocks,),
            in_specs=[
                pl.BlockSpec((block_b, D), lambda i: (i, 0)),   # x tile (pipelined)
                pl.BlockSpec((D, H1), lambda i: (0, 0)),        # w1 (resident)
                pl.BlockSpec((1, H1), lambda i: (0, 0)),        # b1
                pl.BlockSpec((H1, H2P), lambda i: (0, 0)),      # w2 (padded)
                pl.BlockSpec((1, H2P), lambda i: (0, 0)),       # b2 (padded)
                pl.BlockSpec((1, H2P), lambda i: (0, 0)),       # w3 row (VPU path)
                pl.BlockSpec((1, 1), lambda i: (0, 0)),         # b3
            ],
            out_specs=pl.BlockSpec((1, 1, block_b), lambda i: (i, 0, 0)),
        ),
        compiler_params=pltpu.CompilerParams(
            dimension_semantics=("parallel",),   # shards grid across v7x's 2 TCs
        ),
    )(x, w1_bf16, b1_2d, w2_bf16, b2_2d, w3_row, b3_2d)

    # (n_blocks, 1, block_b) row-major == (n_blocks*block_b, 1) batch order.
    return out.reshape(n_blocks * block_b, 1)[:B]


def init_params(key, input_dim):
    """Deterministic init mimicking nn.Linear's U(-1/sqrt(fan_in), 1/sqrt(fan_in))."""
    def linear_init(k, fan_in, fan_out):
        kw, kb = jax.random.split(k)
        bound = 1.0 / jnp.sqrt(fan_in)
        w = jax.random.uniform(kw, (fan_in, fan_out), jnp.float32, -bound, bound)
        b = jax.random.uniform(kb, (fan_out,), jnp.float32, -bound, bound)
        return w, b

    k1, k2, k3 = jax.random.split(key, 3)
    w1, b1 = linear_init(k1, input_dim, 128)
    w2, b2 = linear_init(k2, 128, 64)
    w3, b3 = linear_init(k3, 64, 1)
    return {"w1": w1, "b1": b1, "w2": w2, "b2": b2, "w3": w3, "b3": b3}


if __name__ == "__main__":
    key = jax.random.PRNGKey(0)
    k_x, k_x2, k_xs, k_p = jax.random.split(key, 4)

    INPUT_DIM = 32
    params = init_params(k_p, INPUT_DIM)

    # 1) Pallas path, single block (block clamped to B, exercises lane-dense out).
    B = 1000
    x = jax.random.normal(k_x, (B, INPUT_DIM), jnp.float32)
    y = jax.block_until_ready(sales_model_forward(x, params))
    assert y.shape == (B, 1), y.shape
    y_matched = _matched_reference(x, params)      # same bf16-input path
    y_f32 = _reference_forward(x, params, precision=jax.lax.Precision.HIGHEST)
    assert jnp.allclose(y, y_matched, atol=2e-3, rtol=2e-3), "mismatch (matched ref)"
    assert jnp.allclose(y, y_f32, atol=5e-2, rtol=5e-2), "mismatch (f32 ref)"

    # 2) Pallas path, multi-block grid with a ragged last block (1000 = 3*256+232).
    x2 = jax.random.normal(k_x2, (B, INPUT_DIM), jnp.float32)
    y2 = jax.block_until_ready(sales_model_forward(x2, params, block_b=256))
    assert y2.shape == (B, 1), y2.shape
    assert jnp.allclose(y2, _matched_reference(x2, params), atol=2e-3, rtol=2e-3), \
        "mismatch (multi-block)"

    # 3) Tiny batch: routed to the fused pure-JAX fallback.
    Bs = 8
    xs = jax.random.normal(k_xs, (Bs, INPUT_DIM), jnp.float32)
    ys = jax.block_until_ready(sales_model_forward(xs, params))
    ys_ref = _reference_forward(xs, params)
    assert ys.shape == (Bs, 1), ys.shape
    assert jnp.allclose(ys, ys_ref, atol=1e-5, rtol=1e-5), "mismatch (fallback)"

    print("KERNEL_OK")
</pallas_src>

<mosaic_0001>
module attributes {stable_mosaic.version = 11 : i64} {
  func.func @_mlp_kernel(%arg0: i32, %arg1: memref<1000x32xf32, #tpu.memory_space<vmem>>, %arg2: memref<32x128xbf16, #tpu.memory_space<vmem>>, %arg3: memref<1x128xf32, #tpu.memory_space<vmem>>, %arg4: memref<128x128xbf16, #tpu.memory_space<vmem>>, %arg5: memref<1x128xf32, #tpu.memory_space<vmem>>, %arg6: memref<1x128xf32, #tpu.memory_space<vmem>>, %arg7: memref<1x1xf32, #tpu.memory_space<vmem>>, %arg8: memref<1x1x1000xf32, #tpu.memory_space<vmem>>) attributes {dimension_semantics = [#tpu.dimension_semantics<parallel>], iteration_bounds = array<i64: 1>, scalar_prefetch = 0 : i64, scratch_operands = 0 : i64, tpu.core_type = #tpu.core_type<tc>, window_params = [{transform_indices = @transform_0, window_bounds = array<i64: 1000, 32>}, {pipeline_mode = #tpu.pipeline_mode<synchronous>, transform_indices = @transform_1, window_bounds = array<i64: 32, 128>}, {pipeline_mode = #tpu.pipeline_mode<synchronous>, transform_indices = @transform_2, window_bounds = array<i64: 1, 128>}, {pipeline_mode = #tpu.pipeline_mode<synchronous>, transform_indices = @transform_3, window_bounds = array<i64: 128, 128>}, {pipeline_mode = #tpu.pipeline_mode<synchronous>, transform_indices = @transform_4, window_bounds = array<i64: 1, 128>}, {pipeline_mode = #tpu.pipeline_mode<synchronous>, transform_indices = @transform_5, window_bounds = array<i64: 1, 128>}, {pipeline_mode = #tpu.pipeline_mode<synchronous>, transform_indices = @transform_6, window_bounds = array<i64: 1, 1>}, {transform_indices = @transform_7, window_bounds = array<i64: 1, 1, 1000>}]} {
    %c0 = arith.constant 0 : index
    %c0_0 = arith.constant 0 : index
    %0 = vector.load %arg1[%c0, %c0_0] : memref<1000x32xf32, #tpu.memory_space<vmem>>, vector<1000x32xf32>
    %1 = arith.truncf %0 : vector<1000x32xf32> to vector<1000x32xbf16>
    %c0_1 = arith.constant 0 : index
    %c0_2 = arith.constant 0 : index
    %2 = vector.load %arg2[%c0_1, %c0_2] : memref<32x128xbf16, #tpu.memory_space<vmem>>, vector<32x128xbf16>
    %cst = arith.constant dense<0.000000e+00> : vector<1000x128xf32>
    %3 = tpu.matmul %1, %2, %cst {dimension_numbers = #tpu.dot_dimension_numbers<[1], [0], [0], [1], [0, 0, 1, 1], [], []>} : vector<1000x32xbf16>, vector<32x128xbf16>, vector<1000x128xf32> -> vector<1000x128xf32>
    %c0_3 = arith.constant 0 : index
    %c0_4 = arith.constant 0 : index
    %4 = vector.load %arg3[%c0_3, %c0_4] : memref<1x128xf32, #tpu.memory_space<vmem>>, vector<1x128xf32>
    %5 = vector.broadcast %4 : vector<1x128xf32> to vector<1000x128xf32>
    %6 = arith.addf %3, %5 : vector<1000x128xf32>
    %cst_5 = arith.constant 0.000000e+00 : f32
    %7 = vector.broadcast %cst_5 : f32 to vector<1000x128xf32>
    %8 = arith.maximumf %6, %7 : vector<1000x128xf32>
    %9 = arith.truncf %8 : vector<1000x128xf32> to vector<1000x128xbf16>
    %c0_6 = arith.constant 0 : index
    %c0_7 = arith.constant 0 : index
    %10 = vector.load %arg4[%c0_6, %c0_7] : memref<128x128xbf16, #tpu.memory_space<vmem>>, vector<128x128xbf16>
    %cst_8 = arith.constant dense<0.000000e+00> : vector<1000x128xf32>
    %11 = tpu.matmul %9, %10, %cst_8 {dimension_numbers = #tpu.dot_dimension_numbers<[1], [0], [0], [1], [0, 0, 1, 1], [], []>} : vector<1000x128xbf16>, vector<128x128xbf16>, vector<1000x128xf32> -> vector<1000x128xf32>
    %c0_9 = arith.constant 0 : index
    %c0_10 = arith.constant 0 : index
    %12 = vector.load %arg5[%c0_9, %c0_10] : memref<1x128xf32, #tpu.memory_space<vmem>>, vector<1x128xf32>
    %13 = vector.broadcast %12 : vector<1x128xf32> to vector<1000x128xf32>
    %14 = arith.addf %11, %13 : vector<1000x128xf32>
    %cst_11 = arith.constant 0.000000e+00 : f32
    %15 = vector.broadcast %cst_11 : f32 to vector<1000x128xf32>
    %16 = arith.maximumf %14, %15 : vector<1000x128xf32>
    %c0_12 = arith.constant 0 : index
    %c0_13 = arith.constant 0 : index
    %17 = vector.load %arg6[%c0_12, %c0_13] : memref<1x128xf32, #tpu.memory_space<vmem>>, vector<1x128xf32>
    %18 = vector.broadcast %17 : vector<1x128xf32> to vector<1000x128xf32>
    %19 = arith.mulf %16, %18 : vector<1000x128xf32>
    %cst_14 = arith.constant dense<0.000000e+00> : vector<1000xf32>
    %20 = vector.multi_reduction <add>, %19, %cst_14 [1] : vector<1000x128xf32> to vector<1000xf32>
    %21 = vector.shape_cast %20 : vector<1000xf32> to vector<1000x1xf32>
    %c0_15 = arith.constant 0 : index
    %c0_16 = arith.constant 0 : index
    %22 = vector.load %arg7[%c0_15, %c0_16] : memref<1x1xf32, #tpu.memory_space<vmem>>, vector<1x1xf32>
    %23 = vector.broadcast %22 : vector<1x1xf32> to vector<1000x1xf32>
    %24 = arith.addf %21, %23 : vector<1000x1xf32>
    %25 = vector.shape_cast %24 : vector<1000x1xf32> to vector<1x1x1000xf32>
    %c0_17 = arith.constant 0 : index
    %c0_18 = arith.constant 0 : index
    %c0_19 = arith.constant 0 : index
    %26 = vector.load %arg8[%c0_17, %c0_18, %c0_19] : memref<1x1x1000xf32, #tpu.memory_space<vmem>>, vector<1x1x1000xf32>
    tpu.vector_store %arg8[%c0_17, %c0_18, %c0_19], %25 {strides = array<i32>} : memref<1x1x1000xf32, #tpu.memory_space<vmem>>, vector<1x1x1000xf32>,
    return
  }
  func.func @transform_0(%arg0: i32) -> (i32, i32) {
    %c0_i32 = arith.constant 0 : i32
    %c0_i32_0 = arith.constant 0 : i32
    return %arg0, %c0_i32 : i32, i32
  }
  func.func @transform_1(%arg0: i32) -> (i32, i32) {
    %c0_i32 = arith.constant 0 : i32
    %c0_i32_0 = arith.constant 0 : i32
    %c0_i32_1 = arith.constant 0 : i32
    return %c0_i32, %c0_i32_0 : i32, i32
  }
  func.func @transform_2(%arg0: i32) -> (i32, i32) {
    %c0_i32 = arith.constant 0 : i32
    %c0_i32_0 = arith.constant 0 : i32
    %c0_i32_1 = arith.constant 0 : i32
    return %c0_i32, %c0_i32_0 : i32, i32
  }
  func.func @transform_3(%arg0: i32) -> (i32, i32) {
    %c0_i32 = arith.constant 0 : i32
    %c0_i32_0 = arith.constant 0 : i32
    %c0_i32_1 = arith.constant 0 : i32
    return %c0_i32, %c0_i32_0 : i32, i32
  }
  func.func @transform_4(%arg0: i32) -> (i32, i32) {
    %c0_i32 = arith.constant 0 : i32
    %c0_i32_0 = arith.constant 0 : i32
    %c0_i32_1 = arith.constant 0 : i32
    return %c0_i32, %c0_i32_0 : i32, i32
  }
  func.func @transform_5(%arg0: i32) -> (i32, i32) {
    %c0_i32 = arith.constant 0 : i32
    %c0_i32_0 = arith.constant 0 : i32
    %c0_i32_1 = arith.constant 0 : i32
    return %c0_i32, %c0_i32_0 : i32, i32
  }
  func.func @transform_6(%arg0: i32) -> (i32, i32) {
    %c0_i32 = arith.constant 0 : i32
    %c0_i32_0 = arith.constant 0 : i32
    %c0_i32_1 = arith.constant 0 : i32
    return %c0_i32, %c0_i32_0 : i32, i32
  }
  func.func @transform_7(%arg0: i32) -> (i32, i32, i32) {
    %c0_i32 = arith.constant 0 : i32
    %c0_i32_0 = arith.constant 0 : i32
    %c0_i32_1 = arith.constant 0 : i32
    return %arg0, %c0_i32, %c0_i32_0 : i32, i32, i32
  }
}

</mosaic_0001>

<llo_original>
// kernel: sales_model_forward.1
$region0: #{sales_model_forward.1}
  #allocation0 [shape = 'u32[]', space=smem, size = 0x4, offset = 0x4, fixed_abs, tag = 'smem constant byte address 0x4 - core index']
  #allocation1 [shape = 'u32[72,128]{1,0:T(1,128)}', space=vmem, size = 0x9000, scoped, tag = 'internal scratch']
  #allocation2 [shape = 'f32[1,1]{1,0:T(1,128)S(1)}', space=vmem, size = 0x200, scoped, tag = 'scoped memory for sales_model_forward.1']
  %s0 = inlined_call_operand.vmem [shape: f32[1000,32], index: 0, kind: input, shape index: {}]
  %s1 = inlined_call_operand.vmem [shape: bf16[32,128], index: 1, kind: input, shape index: {}]
  %s2 = inlined_call_operand.vmem [shape: f32[1,128], index: 2, kind: input, shape index: {}]
  %s3 = inlined_call_operand.vmem [shape: bf16[128,128], index: 3, kind: input, shape index: {}]
  %s4 = inlined_call_operand.vmem [shape: f32[1,128], index: 4, kind: input, shape index: {}]
  %s5 = inlined_call_operand.vmem [shape: f32[1,128], index: 5, kind: input, shape index: {}]
  %s6 = inlined_call_operand.<no memory space> [shape: f32[1,1], index: 6, kind: input, shape index: {}]
  %s7 = inlined_call_operand.hbm [shape: f32[1,1,1000], index: 7, kind: output, shape index: {}]
  %s8 = sld [smem:[#allocation0]]
  $region38: #{sales_model_forward.1} parent=0
    _
  %s10 = ssub.s32 1, %s8
  %s11 = scalar_select 0, %s10, %s8
  %v12 = vstv %s6
  %13 = vst [vmem:[#allocation2] sm:$0x1] %v12
  $region1: #{sales_model_forward.1} parent=0
    #allocation3 [shape = 'u8[4096]{0}', space=vmem, size = 0x1000, scoped, tag = 'output window, operand 0, single buffered']
    #allocation4 [shape = 's32[1]{0}', space=sflag, size = 0x4, scoped, tag = 'scoped memory for sales_model_forward.1']
    %14 = vsyncpa [#allocation4], 0
    // Predicated region
    $region2: #{sales_model_forward.1} parent=1 // pred_check
      _
    $region3: #{sales_model_forward.1} parent=1 // pred_check_branch
      %16 = sbr.rel (0) target = $region5
    $region4: #{sales_model_forward.1} parent=1 // pred_region
      _
    $region5: #{sales_model_forward.1} parent=1 // pred_fallthru
      _
    // Predicated region
    $region6: #{sales_model_forward.1} parent=1 // pred_check
      _
    $region7: #{sales_model_forward.1} parent=1 // pred_check_branch
      %18 = sbr.rel (0) target = $region9
    $region8: #{sales_model_forward.1} parent=1 // pred_region
      _
    $region9: #{sales_model_forward.1} parent=1 // pred_fallthru
      _
    // Predicated region
    $region10: #{sales_model_forward.1} parent=1 // pred_check
      _
    $region11: #{sales_model_forward.1} parent=1 // pred_check_branch
      %20 = sbr.rel (0) target = $region13
    $region12: #{sales_model_forward.1} parent=1 // pred_region
      _
    $region13: #{sales_model_forward.1} parent=1 // pred_fallthru
      _
    // Predicated region
    $region14: #{sales_model_forward.1} parent=1 // pred_check
      _
    $region15: #{sales_model_forward.1} parent=1 // pred_check_branch
      %22 = sbr.rel (0) target = $region17
    $region16: #{sales_model_forward.1} parent=1 // pred_region
      _
    $region17: #{sales_model_forward.1} parent=1 // pred_fallthru
      _
    // Predicated region
    $region18: #{sales_model_forward.1} parent=1 // pred_check
      _
    $region19: #{sales_model_forward.1} parent=1 // pred_check_branch
      %24 = sbr.rel (0) target = $region21
    $region20: #{sales_model_forward.1} parent=1 // pred_region
      _
    $region21: #{sales_model_forward.1} parent=1 // pred_fallthru
      _
    // Predicated region
    $region22: #{sales_model_forward.1} parent=1 // pred_check
      _
    $region23: #{sales_model_forward.1} parent=1 // pred_check_branch
      %26 = sbr.rel (0) target = $region25
    $region24: #{sales_model_forward.1} parent=1 // pred_region
      _
    $region25: #{sales_model_forward.1} parent=1 // pred_fallthru
      _
    // Predicated region
    $region26: #{sales_model_forward.1} parent=1 // pred_check
      _
    $region27: #{sales_model_forward.1} parent=1 // pred_check_branch
      %28 = sbr.rel (0) target = $region29
    $region28: #{sales_model_forward.1} parent=1 // pred_region
      _
    $region29: #{sales_model_forward.1} parent=1 // pred_fallthru
      _
    %v30 = vld [vmem:[%s0] sm:$0xff]
    %v31 = vld [vmem:[%s0 + $0x8] sm:$0xff]
    %v32 = vld [vmem:[%s0 + $0x10] sm:$0xff]
    %v33 = vld [vmem:[%s0 + $0x18] sm:$0xff]
    %v34 = vld [vmem:[%s0 + $0x20] sm:$0xff]
    %v35 = vld [vmem:[%s0 + $0x28] sm:$0xff]
    %v36 = vld [vmem:[%s0 + $0x30] sm:$0xff]
    %v37 = vld [vmem:[%s0 + $0x38] sm:$0xff]
    %v38 = vld [vmem:[%s0 + $0x40] sm:$0xff]
    %v39 = vld [vmem:[%s0 + $0x48] sm:$0xff]
    %v40 = vld [vmem:[%s0 + $0x50] sm:$0xff]
    %v41 = vld [vmem:[%s0 + $0x58] sm:$0xff]
    %v42 = vld [vmem:[%s0 + $0x60] sm:$0xff]
    %v43 = vld [vmem:[%s0 + $0x68] sm:$0xff]
    %v44 = vld [vmem:[%s0 + $0x70] sm:$0xff]
    %v45 = vld [vmem:[%s0 + $0x78] sm:$0xff]
    %v46 = vld [vmem:[%s0 + $0x80] sm:$0xff]
    %v47 = vld [vmem:[%s0 + $0x88] sm:$0xff]
    %v48 = vld [vmem:[%s0 + $0x90] sm:$0xff]
    %v49 = vld [vmem:[%s0 + $0x98] sm:$0xff]
    %v50 = vld [vmem:[%s0 + $0xa0] sm:$0xff]
    %v51 = vld [vmem:[%s0 + $0xa8] sm:$0xff]
    %v52 = vld [vmem:[%s0 + $0xb0] sm:$0xff]
    %v53 = vld [vmem:[%s0 + $0xb8] sm:$0xff]
    %v54 = vld [vmem:[%s0 + $0xc0] sm:$0xff]
    %v55 = vld [vmem:[%s0 + $0xc8] sm:$0xff]
    %v56 = vld [vmem:[%s0 + $0xd0] sm:$0xff]
    %v57 = vld [vmem:[%s0 + $0xd8] sm:$0xff]
    %v58 = vld [vmem:[%s0 + $0xe0] sm:$0xff]
    %v59 = vld [vmem:[%s0 + $0xe8] sm:$0xff]
    %v60 = vld [vmem:[%s0 + $0xf0] sm:$0xff]
    %v61 = vld [vmem:[%s0 + $0xf8] sm:$0xff]
    %v62 = vld [vmem:[%s0 + $0x100] sm:$0xff]
    %v63 = vld [vmem:[%s0 + $0x108] sm:$0xff]
    %v64 = vld [vmem:[%s0 + $0x110] sm:$0xff]
    %v65 = vld [vmem:[%s0 + $0x118] sm:$0xff]
    %v66 = vld [vmem:[%s0 + $0x120] sm:$0xff]
    %v67 = vld [vmem:[%s0 + $0x128] sm:$0xff]
    %v68 = vld [vmem:[%s0 + $0x130] sm:$0xff]
    %v69 = vld [vmem:[%s0 + $0x138] sm:$0xff]
    %v70 = vld [vmem:[%s0 + $0x140] sm:$0xff]
    %v71 = vld [vmem:[%s0 + $0x148] sm:$0xff]
    %v72 = vld [vmem:[%s0 + $0x150] sm:$0xff]
    %v73 = vld [vmem:[%s0 + $0x158] sm:$0xff]
    %v74 = vld [vmem:[%s0 + $0x160] sm:$0xff]
    %v75 = vld [vmem:[%s0 + $0x168] sm:$0xff]
    %v76 = vld [vmem:[%s0 + $0x170] sm:$0xff]
    %v77 = vld [vmem:[%s0 + $0x178] sm:$0xff]
    %v78 = vld [vmem:[%s0 + $0x180] sm:$0xff]
    %v79 = vld [vmem:[%s0 + $0x188] sm:$0xff]
    %v80 = vld [vmem:[%s0 + $0x190] sm:$0xff]
    %v81 = vld [vmem:[%s0 + $0x198] sm:$0xff]
    %v82 = vld [vmem:[%s0 + $0x1a0] sm:$0xff]
    %v83 = vld [vmem:[%s0 + $0x1a8] sm:$0xff]
    %v84 = vld [vmem:[%s0 + $0x1b0] sm:$0xff]
    %v85 = vld [vmem:[%s0 + $0x1b8] sm:$0xff]
    %v86 = vld [vmem:[%s0 + $0x1c0] sm:$0xff]
    %v87 = vld [vmem:[%s0 + $0x1c8] sm:$0xff]
    %v88 = vld [vmem:[%s0 + $0x1d0] sm:$0xff]
    %v89 = vld [vmem:[%s0 + $0x1d8] sm:$0xff]
    %v90 = vld [vmem:[%s0 + $0x1e0] sm:$0xff]
    %v91 = vld [vmem:[%s0 + $0x1e8] sm:$0xff]
    %v92 = vld [vmem:[%s0 + $0x1f0] sm:$0xff]
    %v93 = vld [vmem:[%s0 + $0x1f8] sm:$0xff]
    %v94 = vld [vmem:[%s0 + $0x200] sm:$0xff]
    %v95 = vld [vmem:[%s0 + $0x208] sm:$0xff]
    %v96 = vld [vmem:[%s0 + $0x210] sm:$0xff]
    %v97 = vld [vmem:[%s0 + $0x218] sm:$0xff]
    %v98 = vld [vmem:[%s0 + $0x220] sm:$0xff]
    %v99 = vld [vmem:[%s0 + $0x228] sm:$0xff]
    %v100 = vld [vmem:[%s0 + $0x230] sm:$0xff]
    %v101 = vld [vmem:[%s0 + $0x238] sm:$0xff]
    %v102 = vld [vmem:[%s0 + $0x240] sm:$0xff]
    %v103 = vld [vmem:[%s0 + $0x248] sm:$0xff]
    %v104 = vld [vmem:[%s0 + $0x250] sm:$0xff]
    %v105 = vld [vmem:[%s0 + $0x258] sm:$0xff]
    %v106 = vld [vmem:[%s0 + $0x260] sm:$0xff]
    %v107 = vld [vmem:[%s0 + $0x268] sm:$0xff]
    %v108 = vld [vmem:[%s0 + $0x270] sm:$0xff]
    %v109 = vld [vmem:[%s0 + $0x278] sm:$0xff]
    %v110 = vld [vmem:[%s0 + $0x280] sm:$0xff]
    %v111 = vld [vmem:[%s0 + $0x288] sm:$0xff]
    %v112 = vld [vmem:[%s0 + $0x290] sm:$0xff]
    %v113 = vld [vmem:[%s0 + $0x298] sm:$0xff]
    %v114 = vld [vmem:[%s0 + $0x2a0] sm:$0xff]
    %v115 = vld [vmem:[%s0 + $0x2a8] sm:$0xff]
    %v116 = vld [vmem:[%s0 + $0x2b0] sm:$0xff]
    %v117 = vld [vmem:[%s0 + $0x2b8] sm:$0xff]
    %v118 = vld [vmem:[%s0 + $0x2c0] sm:$0xff]
    %v119 = vld [vmem:[%s0 + $0x2c8] sm:$0xff]
    %v120 = vld [vmem:[%s0 + $0x2d0] sm:$0xff]
    %v121 = vld [vmem:[%s0 + $0x2d8] sm:$0xff]
    %v122 = vld [vmem:[%s0 + $0x2e0] sm:$0xff]
    %v123 = vld [vmem:[%s0 + $0x2e8] sm:$0xff]
    %v124 = vld [vmem:[%s0 + $0x2f0] sm:$0xff]
    %v125 = vld [vmem:[%s0 + $0x2f8] sm:$0xff]
    %v126 = vld [vmem:[%s0 + $0x300] sm:$0xff]
    %v127 = vld [vmem:[%s0 + $0x308] sm:$0xff]
    %v128 = vld [vmem:[%s0 + $0x310] sm:$0xff]
    %v129 = vld [vmem:[%s0 + $0x318] sm:$0xff]
    %v130 = vld [vmem:[%s0 + $0x320] sm:$0xff]
    %v131 = vld [vmem:[%s0 + $0x328] sm:$0xff]
    %v132 = vld [vmem:[%s0 + $0x330] sm:$0xff]
    %v133 = vld [vmem:[%s0 + $0x338] sm:$0xff]
    %v134 = vld [vmem:[%s0 + $0x340] sm:$0xff]
    %v135 = vld [vmem:[%s0 + $0x348] sm:$0xff]
    %v136 = vld [vmem:[%s0 + $0x350] sm:$0xff]
    %v137 = vld [vmem:[%s0 + $0x358] sm:$0xff]
    %v138 = vld [vmem:[%s0 + $0x360] sm:$0xff]
    %v139 = vld [vmem:[%s0 + $0x368] sm:$0xff]
    %v140 = vld [vmem:[%s0 + $0x370] sm:$0xff]
    %v141 = vld [vmem:[%s0 + $0x378] sm:$0xff]
    %v142 = vld [vmem:[%s0 + $0x380] sm:$0xff]
    %v143 = vld [vmem:[%s0 + $0x388] sm:$0xff]
    %v144 = vld [vmem:[%s0 + $0x390] sm:$0xff]
    %v145 = vld [vmem:[%s0 + $0x398] sm:$0xff]
    %v146 = vld [vmem:[%s0 + $0x3a0] sm:$0xff]
    %v147 = vld [vmem:[%s0 + $0x3a8] sm:$0xff]
    %v148 = vld [vmem:[%s0 + $0x3b0] sm:$0xff]
    %v149 = vld [vmem:[%s0 + $0x3b8] sm:$0xff]
    %v150 = vld [vmem:[%s0 + $0x3c0] sm:$0xff]
    %v151 = vld [vmem:[%s0 + $0x3c8] sm:$0xff]
    %v152 = vld [vmem:[%s0 + $0x3d0] sm:$0xff]
    %v153 = vld [vmem:[%s0 + $0x3d8] sm:$0xff]
    %v154 = vld [vmem:[%s0 + $0x3e0] sm:$0xff]
    %v155 = vpack.c.bf16 %v31, %v30
    %v156 = vpack.c.bf16 %v33, %v32
    %v157 = vpack.c.bf16 %v35, %v34
    %v158 = vpack.c.bf16 %v37, %v36
    %v159 = vpack.c.bf16 %v39, %v38
    %v160 = vpack.c.bf16 %v41, %v40
    %v161 = vpack.c.bf16 %v43, %v42
    %v162 = vpack.c.bf16 %v45, %v44
    %v163 = vpack.c.bf16 %v47, %v46
    %v164 = vpack.c.bf16 %v49, %v48
    %v165 = vpack.c.bf16 %v51, %v50
    %v166 = vpack.c.bf16 %v53, %v52
    %v167 = vpack.c.bf16 %v55, %v54
    %v168 = vpack.c.bf16 %v57, %v56
    %v169 = vpack.c.bf16 %v59, %v58
    %v170 = vpack.c.bf16 %v61, %v60
    %v171 = vpack.c.bf16 %v63, %v62
    %v172 = vpack.c.bf16 %v65, %v64
    %v173 = vpack.c.bf16 %v67, %v66
    %v174 = vpack.c.bf16 %v69, %v68
    %v175 = vpack.c.bf16 %v71, %v70
    %v176 = vpack.c.bf16 %v73, %v72
    %v177 = vpack.c.bf16 %v75, %v74
    %v178 = vpack.c.bf16 %v77, %v76
    %v179 = vpack.c.bf16 %v79, %v78
    %v180 = vpack.c.bf16 %v81, %v80
    %v181 = vpack.c.bf16 %v83, %v82
    %v182 = vpack.c.bf16 %v85, %v84
    %v183 = vpack.c.bf16 %v87, %v86
    %v184 = vpack.c.bf16 %v89, %v88
    %v185 = vpack.c.bf16 %v91, %v90
    %v186 = vpack.c.bf16 %v93, %v92
    %v187 = vpack.c.bf16 %v95, %v94
    %v188 = vpack.c.bf16 %v97, %v96
    %v189 = vpack.c.bf16 %v99, %v98
    %v190 = vpack.c.bf16 %v101, %v100
    %v191 = vpack.c.bf16 %v103, %v102
    %v192 = vpack.c.bf16 %v105, %v104
    %v193 = vpack.c.bf16 %v107, %v106
    %v194 = vpack.c.bf16 %v109, %v108
    %v195 = vpack.c.bf16 %v111, %v110
    %v196 = vpack.c.bf16 %v113, %v112
    %v197 = vpack.c.bf16 %v115, %v114
    %v198 = vpack.c.bf16 %v117, %v116
    %v199 = vpack.c.bf16 %v119, %v118
    %v200 = vpack.c.bf16 %v121, %v120
    %v201 = vpack.c.bf16 %v123, %v122
    %v202 = vpack.c.bf16 %v125, %v124
    %v203 = vpack.c.bf16 %v127, %v126
    %v204 = vpack.c.bf16 %v129, %v128
    %v205 = vpack.c.bf16 %v131, %v130
    %v206 = vpack.c.bf16 %v133, %v132
    %v207 = vpack.c.bf16 %v135, %v134
    %v208 = vpack.c.bf16 %v137, %v136
    %v209 = vpack.c.bf16 %v139, %v138
    %v210 = vpack.c.bf16 %v141, %v140
    %v211 = vpack.c.bf16 %v143, %v142
    %v212 = vpack.c.bf16 %v145, %v144
    %v213 = vpack.c.bf16 %v147, %v146
    %v214 = vpack.c.bf16 %v149, %v148
    %v215 = vpack.c.bf16 %v151, %v150
    %v216 = vpack.c.bf16 %v153, %v152
    %v217 = vpack.c.bf16 %v154, %v154
    %v218 = vld [vmem:[%s1] sm:$0xf]
    %v219 = vld [vmem:[%s1 + $0x4] sm:$0xf]
    %v220 = vld [vmem:[%s1 + $0x8] sm:$0xf]
    %v221 = vld [vmem:[%s1 + $0xc] sm:$0xf]
    %v222 = vld [vmem:[%s2] sm:$0x1]
    %v224 = vperm.slane %v222, 0
    %v230 = vunpack.c.l.b16 %v218
    %v231 = vunpack.c.l.b16 %v219
    %v232 = vunpack.c.l.b16 %v220
    %v233 = vunpack.c.l.b16 %v221
    %v234 = vpack.c.b16 %v231, %v230
    %v235 = vpack.c.b16 %v233, %v232
    %vm238 = vcmask 261120
    %v240 = vsel %vm238, %v155, 0
    %v243 = vsel %vm238, %v156, 0
    %v246 = vsel %vm238, %v157, 0
    %v249 = vsel %vm238, %v158, 0
    %v252 = vsel %vm238, %v159, 0
    %v255 = vsel %vm238, %v160, 0
    %v258 = vsel %vm238, %v161, 0
    %v261 = vsel %vm238, %v162, 0
    %v264 = vsel %vm238, %v163, 0
    %v267 = vsel %vm238, %v164, 0
    %v270 = vsel %vm238, %v165, 0
    %v273 = vsel %vm238, %v166, 0
    %v276 = vsel %vm238, %v167, 0
    %v279 = vsel %vm238, %v168, 0
    %v282 = vsel %vm238, %v169, 0
    %v285 = vsel %vm238, %v170, 0
    %v288 = vsel %vm238, %v171, 0
    %v291 = vsel %vm238, %v172, 0
    %v294 = vsel %vm238, %v173, 0
    %v297 = vsel %vm238, %v174, 0
    %v300 = vsel %vm238, %v175, 0
    %v303 = vsel %vm238, %v176, 0
    %v306 = vsel %vm238, %v177, 0
    %v309 = vsel %vm238, %v178, 0
    %v312 = vsel %vm238, %v179, 0
    %v315 = vsel %vm238, %v180, 0
    %v318 = vsel %vm238, %v181, 0
    %v321 = vsel %vm238, %v182, 0
    %v324 = vsel %vm238, %v183, 0
    %v327 = vsel %vm238, %v184, 0
    %v330 = vsel %vm238, %v185, 0
    %v333 = vsel %vm238, %v186, 0
    %v336 = vsel %vm238, %v187, 0
    %v339 = vsel %vm238, %v188, 0
    %v342 = vsel %vm238, %v189, 0
    %v345 = vsel %vm238, %v190, 0
    %v348 = vsel %vm238, %v191, 0
    %v351 = vsel %vm238, %v192, 0
    %v354 = vsel %vm238, %v193, 0
    %v357 = vsel %vm238, %v194, 0
    %v360 = vsel %vm238, %v195, 0
    %v363 = vsel %vm238, %v196, 0
    %v366 = vsel %vm238, %v197, 0
    %v369 = vsel %vm238, %v198, 0
    %v372 = vsel %vm238, %v199, 0
    %v375 = vsel %vm238, %v200, 0
    %v378 = vsel %vm238, %v201, 0
    %v381 = vsel %vm238, %v202, 0
    %v384 = vsel %vm238, %v203, 0
    %v387 = vsel %vm238, %v204, 0
    %v390 = vsel %vm238, %v205, 0
    %v393 = vsel %vm238, %v206, 0
    %v396 = vsel %vm238, %v207, 0
    %v399 = vsel %vm238, %v208, 0
    %v402 = vsel %vm238, %v209, 0
    %v405 = vsel %vm238, %v210, 0
    %v408 = vsel %vm238, %v211, 0
    %v411 = vsel %vm238, %v212, 0
    %v414 = vsel %vm238, %v213, 0
    %v417 = vsel %vm238, %v214, 0
    %v420 = vsel %vm238, %v215, 0
    %v423 = vsel %vm238, %v216, 0
    %v426 = vsel %vm238, %v217, 0
    %428 = vmatpush.bf16.msra.mxu0 0
    %429 = vmatpush.bf16.msra.mxu0 0
    %430 = vmatpush.bf16.msra.mxu0 0
    %431 = vmatpush.bf16.msra.mxu0 0
    %432 = vmatpush.bf16.msra.mxu0 0
    %433 = vmatpush.bf16.msra.mxu0 0
    %434 = vmatpush.bf16.msra.mxu0 %v235
    %435 = vmatpush.bf16.msra.mxu0 %v234
    %436 = vmatmul.bf16.gmra.mxu0 %v240
    %v437 = vpop.f32.mrf.mxu0
    %v438 = vadd.f32 %v224, %v437
    %v439 = vpop.f32.mrf.mxu0
    %v440 = vadd.f32 %v224, %v439
    %441 = vmatmul.bf16.gmra.mxu0 %v243
    %v442 = vpop.f32.mrf.mxu0
    %v443 = vadd.f32 %v224, %v442
    %v444 = vpop.f32.mrf.mxu0
    %v445 = vadd.f32 %v224, %v444
    %446 = vmatmul.bf16.gmra.mxu0 %v246
    %v447 = vpop.f32.mrf.mxu0
    %v448 = vadd.f32 %v224, %v447
    %v449 = vpop.f32.mrf.mxu0
    %v450 = vadd.f32 %v224, %v449
    %451 = vmatmul.bf16.gmra.mxu0 %v249
    %v452 = vpop.f32.mrf.mxu0
    %v453 = vadd.f32 %v224, %v452
    %v454 = vpop.f32.mrf.mxu0
    %v455 = vadd.f32 %v224, %v454
    %456 = vmatmul.bf16.gmra.mxu0 %v252
    %v457 = vpop.f32.mrf.mxu0
    %v458 = vadd.f32 %v224, %v457
    %v459 = vpop.f32.mrf.mxu0
    %v460 = vadd.f32 %v224, %v459
    %461 = vmatmul.bf16.gmra.mxu0 %v255
    %v462 = vpop.f32.mrf.mxu0
    %v463 = vadd.f32 %v224, %v462
    %v464 = vpop.f32.mrf.mxu0
    %v465 = vadd.f32 %v224, %v464
    %466 = vmatmul.bf16.gmra.mxu0 %v258
    %v467 = vpop.f32.mrf.mxu0
    %v468 = vadd.f32 %v224, %v467
    %v469 = vpop.f32.mrf.mxu0
    %v470 = vadd.f32 %v224, %v469
    %471 = vmatmul.bf16.gmra.mxu0 %v261
    %v472 = vpop.f32.mrf.mxu0
    %v473 = vadd.f32 %v224, %v472
    %v474 = vpop.f32.mrf.mxu0
    %v475 = vadd.f32 %v224, %v474
    %476 = vmatmul.bf16.gmra.mxu0 %v264
    %v477 = vpop.f32.mrf.mxu0
    %v478 = vadd.f32 %v224, %v477
    %v479 = vpop.f32.mrf.mxu0
    %v480 = vadd.f32 %v224, %v479
    %481 = vmatmul.bf16.gmra.mxu0 %v267
    %v482 = vpop.f32.mrf.mxu0
    %v483 = vadd.f32 %v224, %v482
    %v484 = vpop.f32.mrf.mxu0
    %v485 = vadd.f32 %v224, %v484
    %486 = vmatmul.bf16.gmra.mxu0 %v270
    %v487 = vpop.f32.mrf.mxu0
    %v488 = vadd.f32 %v224, %v487
    %v489 = vpop.f32.mrf.mxu0
    %v490 = vadd.f32 %v224, %v489
    %491 = vmatmul.bf16.gmra.mxu0 %v273
    %v492 = vpop.f32.mrf.mxu0
    %v493 = vadd.f32 %v224, %v492
    %v494 = vpop.f32.mrf.mxu0
    %v495 = vadd.f32 %v224, %v494
    %496 = vmatmul.bf16.gmra.mxu0 %v276
    %v497 = vpop.f32.mrf.mxu0
    %v498 = vadd.f32 %v224, %v497
    %v499 = vpop.f32.mrf.mxu0
    %v500 = vadd.f32 %v224, %v499
    %501 = vmatmul.bf16.gmra.mxu0 %v279
    %v502 = vpop.f32.mrf.mxu0
    %v503 = vadd.f32 %v224, %v502
    %v504 = vpop.f32.mrf.mxu0
    %v505 = vadd.f32 %v224, %v504
    %506 = vmatmul.bf16.gmra.mxu0 %v282
    %v507 = vpop.f32.mrf.mxu0
    %v508 = vadd.f32 %v224, %v507
    %v509 = vpop.f32.mrf.mxu0
    %v510 = vadd.f32 %v224, %v509
    %511 = vmatmul.bf16.gmra.mxu0 %v285
    %v512 = vpop.f32.mrf.mxu0
    %v513 = vadd.f32 %v224, %v512
    %v514 = vpop.f32.mrf.mxu0
    %v515 = vadd.f32 %v224, %v514
    %516 = vmatmul.bf16.gmra.mxu0 %v288
    %v517 = vpop.f32.mrf.mxu0
    %v518 = vadd.f32 %v224, %v517
    %v519 = vpop.f32.mrf.mxu0
    %v520 = vadd.f32 %v224, %v519
    %521 = vmatmul.bf16.gmra.mxu0 %v291
    %v522 = vpop.f32.mrf.mxu0
    %v523 = vadd.f32 %v224, %v522
    %v524 = vpop.f32.mrf.mxu0
    %v525 = vadd.f32 %v224, %v524
    %526 = vmatmul.bf16.gmra.mxu0 %v294
    %v527 = vpop.f32.mrf.mxu0
    %v528 = vadd.f32 %v224, %v527
    %v529 = vpop.f32.mrf.mxu0
    %v530 = vadd.f32 %v224, %v529
    %531 = vmatmul.bf16.gmra.mxu0 %v297
    %v532 = vpop.f32.mrf.mxu0
    %v533 = vadd.f32 %v224, %v532
    %v534 = vpop.f32.mrf.mxu0
    %v535 = vadd.f32 %v224, %v534
    %536 = vmatmul.bf16.gmra.mxu0 %v300
    %v537 = vpop.f32.mrf.mxu0
    %v538 = vadd.f32 %v224, %v537
    %v539 = vpop.f32.mrf.mxu0
    %v540 = vadd.f32 %v224, %v539
    %541 = vmatmul.bf16.gmra.mxu0 %v303
    %v542 = vpop.f32.mrf.mxu0
    %v543 = vadd.f32 %v224, %v542
    %v544 = vpop.f32.mrf.mxu0
    %v545 = vadd.f32 %v224, %v544
    %546 = vmatmul.bf16.gmra.mxu0 %v306
    %v547 = vpop.f32.mrf.mxu0
    %v548 = vadd.f32 %v224, %v547
    %v549 = vpop.f32.mrf.mxu0
    %v550 = vadd.f32 %v224, %v549
    %551 = vmatmul.bf16.gmra.mxu0 %v309
    %v552 = vpop.f32.mrf.mxu0
    %v553 = vadd.f32 %v224, %v552
    %v554 = vpop.f32.mrf.mxu0
    %v555 = vadd.f32 %v224, %v554
    %556 = vmatmul.bf16.gmra.mxu0 %v312
    %v557 = vpop.f32.mrf.mxu0
    %v558 = vadd.f32 %v224, %v557
    %v559 = vpop.f32.mrf.mxu0
    %v560 = vadd.f32 %v224, %v559
    %561 = vmatmul.bf16.gmra.mxu0 %v315
    %v562 = vpop.f32.mrf.mxu0
    %v563 = vadd.f32 %v224, %v562
    %v564 = vpop.f32.mrf.mxu0
    %v565 = vadd.f32 %v224, %v564
    %566 = vmatmul.bf16.gmra.mxu0 %v318
    %v567 = vpop.f32.mrf.mxu0
    %v568 = vadd.f32 %v224, %v567
    %v569 = vpop.f32.mrf.mxu0
    %v570 = vadd.f32 %v224, %v569
    %571 = vmatmul.bf16.gmra.mxu0 %v321
    %v572 = vpop.f32.mrf.mxu0
    %v573 = vadd.f32 %v224, %v572
    %v574 = vpop.f32.mrf.mxu0
    %v575 = vadd.f32 %v224, %v574
    %576 = vmatmul.bf16.gmra.mxu0 %v324
    %v577 = vpop.f32.mrf.mxu0
    %v578 = vadd.f32 %v224, %v577
    %v579 = vpop.f32.mrf.mxu0
    %v580 = vadd.f32 %v224, %v579
    %581 = vmatmul.bf16.gmra.mxu0 %v327
    %v582 = vpop.f32.mrf.mxu0
    %v583 = vadd.f32 %v224, %v582
    %v584 = vpop.f32.mrf.mxu0
    %v585 = vadd.f32 %v224, %v584
    %586 = vmatmul.bf16.gmra.mxu0 %v330
    %v587 = vpop.f32.mrf.mxu0
    %v588 = vadd.f32 %v224, %v587
    %v589 = vpop.f32.mrf.mxu0
    %v590 = vadd.f32 %v224, %v589
    %591 = vmatmul.bf16.gmra.mxu0 %v333
    %v592 = vpop.f32.mrf.mxu0
    %v593 = vadd.f32 %v224, %v592
    %v594 = vpop.f32.mrf.mxu0
    %v595 = vadd.f32 %v224, %v594
    %596 = vmatmul.bf16.gmra.mxu0 %v336
    %v597 = vpop.f32.mrf.mxu0
    %v598 = vadd.f32 %v224, %v597
    %v599 = vpop.f32.mrf.mxu0
    %v600 = vadd.f32 %v224, %v599
    %601 = vmatmul.bf16.gmra.mxu0 %v339
    %v602 = vpop.f32.mrf.mxu0
    %v603 = vadd.f32 %v224, %v602
    %v604 = vpop.f32.mrf.mxu0
    %v605 = vadd.f32 %v224, %v604
    %606 = vmatmul.bf16.gmra.mxu0 %v342
    %v607 = vpop.f32.mrf.mxu0
    %v608 = vadd.f32 %v224, %v607
    %v609 = vpop.f32.mrf.mxu0
    %v610 = vadd.f32 %v224, %v609
    %611 = vmatmul.bf16.gmra.mxu0 %v345
    %v612 = vpop.f32.mrf.mxu0
    %v613 = vadd.f32 %v224, %v612
    %v614 = vpop.f32.mrf.mxu0
    %v615 = vadd.f32 %v224, %v614
    %616 = vmatmul.bf16.gmra.mxu0 %v348
    %v617 = vpop.f32.mrf.mxu0
    %v618 = vadd.f32 %v224, %v617
    %v619 = vpop.f32.mrf.mxu0
    %v620 = vadd.f32 %v224, %v619
    %621 = vmatmul.bf16.gmra.mxu0 %v351
    %v622 = vpop.f32.mrf.mxu0
    %v623 = vadd.f32 %v224, %v622
    %v624 = vpop.f32.mrf.mxu0
    %v625 = vadd.f32 %v224, %v624
    %626 = vmatmul.bf16.gmra.mxu0 %v354
    %v627 = vpop.f32.mrf.mxu0
    %v628 = vadd.f32 %v224, %v627
    %v629 = vpop.f32.mrf.mxu0
    %v630 = vadd.f32 %v224, %v629
    %631 = vmatmul.bf16.gmra.mxu0 %v357
    %v632 = vpop.f32.mrf.mxu0
    %v633 = vadd.f32 %v224, %v632
    %v634 = vpop.f32.mrf.mxu0
    %v635 = vadd.f32 %v224, %v634
    %636 = vmatmul.bf16.gmra.mxu0 %v360
    %v637 = vpop.f32.mrf.mxu0
    %v638 = vadd.f32 %v224, %v637
    %v639 = vpop.f32.mrf.mxu0
    %v640 = vadd.f32 %v224, %v639
    %641 = vmatmul.bf16.gmra.mxu0 %v363
    %v642 = vpop.f32.mrf.mxu0
    %v643 = vadd.f32 %v224, %v642
    %v644 = vpop.f32.mrf.mxu0
    %v645 = vadd.f32 %v224, %v644
    %646 = vmatmul.bf16.gmra.mxu0 %v366
    %v647 = vpop.f32.mrf.mxu0
    %v648 = vadd.f32 %v224, %v647
    %v649 = vpop.f32.mrf.mxu0
    %v650 = vadd.f32 %v224, %v649
    %651 = vmatmul.bf16.gmra.mxu0 %v369
    %v652 = vpop.f32.mrf.mxu0
    %v653 = vadd.f32 %v224, %v652
    %v654 = vpop.f32.mrf.mxu0
    %v655 = vadd.f32 %v224, %v654
    %656 = vmatmul.bf16.gmra.mxu0 %v372
    %v657 = vpop.f32.mrf.mxu0
    %v658 = vadd.f32 %v224, %v657
    %v659 = vpop.f32.mrf.mxu0
    %v660 = vadd.f32 %v224, %v659
    %661 = vmatmul.bf16.gmra.mxu0 %v375
    %v662 = vpop.f32.mrf.mxu0
    %v663 = vadd.f32 %v224, %v662
    %v664 = vpop.f32.mrf.mxu0
    %v665 = vadd.f32 %v224, %v664
    %666 = vmatmul.bf16.gmra.mxu0 %v378
    %v667 = vpop.f32.mrf.mxu0
    %v668 = vadd.f32 %v224, %v667
    %v669 = vpop.f32.mrf.mxu0
    %v670 = vadd.f32 %v224, %v669
    %671 = vmatmul.bf16.gmra.mxu0 %v381
    %v672 = vpop.f32.mrf.mxu0
    %v673 = vadd.f32 %v224, %v672
    %v674 = vpop.f32.mrf.mxu0
    %v675 = vadd.f32 %v224, %v674
    %676 = vmatmul.bf16.gmra.mxu0 %v384
    %v677 = vpop.f32.mrf.mxu0
    %v678 = vadd.f32 %v224, %v677
    %v679 = vpop.f32.mrf.mxu0
    %v680 = vadd.f32 %v224, %v679
    %681 = vmatmul.bf16.gmra.mxu0 %v387
    %v682 = vpop.f32.mrf.mxu0
    %v683 = vadd.f32 %v224, %v682
    %v684 = vpop.f32.mrf.mxu0
    %v685 = vadd.f32 %v224, %v684
    %686 = vmatmul.bf16.gmra.mxu0 %v390
    %v687 = vpop.f32.mrf.mxu0
    %v688 = vadd.f32 %v224, %v687
    %v689 = vpop.f32.mrf.mxu0
    %v690 = vadd.f32 %v224, %v689
    %691 = vmatmul.bf16.gmra.mxu0 %v393
    %v692 = vpop.f32.mrf.mxu0
    %v693 = vadd.f32 %v224, %v692
    %v694 = vpop.f32.mrf.mxu0
    %v695 = vadd.f32 %v224, %v694
    %696 = vmatmul.bf16.gmra.mxu0 %v396
    %v697 = vpop.f32.mrf.mxu0
    %v698 = vadd.f32 %v224, %v697
    %v699 = vpop.f32.mrf.mxu0
    %v700 = vadd.f32 %v224, %v699
    %701 = vmatmul.bf16.gmra.mxu0 %v399
    %v702 = vpop.f32.mrf.mxu0
    %v703 = vadd.f32 %v224, %v702
    %v704 = vpop.f32.mrf.mxu0
    %v705 = vadd.f32 %v224, %v704
    %706 = vmatmul.bf16.gmra.mxu0 %v402
    %v707 = vpop.f32.mrf.mxu0
    %v708 = vadd.f32 %v224, %v707
    %v709 = vpop.f32.mrf.mxu0
    %v710 = vadd.f32 %v224, %v709
    %711 = vmatmul.bf16.gmra.mxu0 %v405
    %v712 = vpop.f32.mrf.mxu0
    %v713 = vadd.f32 %v224, %v712
    %v714 = vpop.f32.mrf.mxu0
    %v715 = vadd.f32 %v224, %v714
    %716 = vmatmul.bf16.gmra.mxu0 %v408
    %v717 = vpop.f32.mrf.mxu0
    %v718 = vadd.f32 %v224, %v717
    %v719 = vpop.f32.mrf.mxu0
    %v720 = vadd.f32 %v224, %v719
    %721 = vmatmul.bf16.gmra.mxu0 %v411
    %v722 = vpop.f32.mrf.mxu0
    %v723 = vadd.f32 %v224, %v722
    %v724 = vpop.f32.mrf.mxu0
    %v725 = vadd.f32 %v224, %v724
    %726 = vmatmul.bf16.gmra.mxu0 %v414
    %v727 = vpop.f32.mrf.mxu0
    %v728 = vadd.f32 %v224, %v727
    %v729 = vpop.f32.mrf.mxu0
    %v730 = vadd.f32 %v224, %v729
    %731 = vmatmul.bf16.gmra.mxu0 %v417
    %v732 = vpop.f32.mrf.mxu0
    %v733 = vadd.f32 %v224, %v732
    %v734 = vpop.f32.mrf.mxu0
    %v735 = vadd.f32 %v224, %v734
    %736 = vmatmul.bf16.gmra.mxu0 %v420
    %v737 = vpop.f32.mrf.mxu0
    %v738 = vadd.f32 %v224, %v737
    %v739 = vpop.f32.mrf.mxu0
    %v740 = vadd.f32 %v224, %v739
    %741 = vmatmul.bf16.gmra.mxu0 %v423
    %v742 = vpop.f32.mrf.mxu0
    %v743 = vadd.f32 %v224, %v742
    %v744 = vpop.f32.mrf.mxu0
    %v745 = vadd.f32 %v224, %v744
    %746 = vmatmul.bf16.gmra.mxu0 %v426
    %v747 = vpop.f32.mrf.mxu0
    %v748 = vadd.f32 %v224, %v747
    %v749 = vpop.f32.mrf.mxu0
    %750 = vdwg.mxu0
    %v751 = vmax.f32 %v438, 0.0
    %v752 = vmax.f32 %v440, 0.0
    %v753 = vmax.f32 %v443, 0.0
    %v754 = vmax.f32 %v445, 0.0
    %v755 = vmax.f32 %v448, 0.0
    %v756 = vmax.f32 %v450, 0.0
    %v757 = vmax.f32 %v453, 0.0
    %v758 = vmax.f32 %v455, 0.0
    %v759 = vmax.f32 %v458, 0.0
    %v760 = vmax.f32 %v460, 0.0
    %v761 = vmax.f32 %v463, 0.0
    %v762 = vmax.f32 %v465, 0.0
    %v763 = vmax.f32 %v468, 0.0
    %v764 = vmax.f32 %v470, 0.0
    %v765 = vmax.f32 %v473, 0.0
    %v766 = vmax.f32 %v475, 0.0
    %v767 = vmax.f32 %v478, 0.0
    %v768 = vmax.f32 %v480, 0.0
    %v769 = vmax.f32 %v483, 0.0
    %v770 = vmax.f32 %v485, 0.0
    %v771 = vmax.f32 %v488, 0.0
    %v772 = vmax.f32 %v490, 0.0
    %v773 = vmax.f32 %v493, 0.0
    %v774 = vmax.f32 %v495, 0.0
    %v775 = vmax.f32 %v498, 0.0
    %v776 = vmax.f32 %v500, 0.0
    %v777 = vmax.f32 %v503, 0.0
    %v778 = vmax.f32 %v505, 0.0
    %v779 = vmax.f32 %v508, 0.0
    %v780 = vmax.f32 %v510, 0.0
    %v781 = vmax.f32 %v513, 0.0
    %v782 = vmax.f32 %v515, 0.0
    %v783 = vmax.f32 %v518, 0.0
    %v784 = vmax.f32 %v520, 0.0
    %v785 = vmax.f32 %v523, 0.0
    %v786 = vmax.f32 %v525, 0.0
    %v787 = vmax.f32 %v528, 0.0
    %v788 = vmax.f32 %v530, 0.0
    %v789 = vmax.f32 %v533, 0.0
    %v790 = vmax.f32 %v535, 0.0
    %v791 = vmax.f32 %v538, 0.0
    %v792 = vmax.f32 %v540, 0.0
    %v793 = vmax.f32 %v543, 0.0
    %v794 = vmax.f32 %v545, 0.0
    %v795 = vmax.f32 %v548, 0.0
    %v796 = vmax.f32 %v550, 0.0
    %v797 = vmax.f32 %v553, 0.0
    %v798 = vmax.f32 %v555, 0.0
    %v799 = vmax.f32 %v558, 0.0
    %v800 = vmax.f32 %v560, 0.0
    %v801 = vmax.f32 %v563, 0.0
    %v802 = vmax.f32 %v565, 0.0
    %v803 = vmax.f32 %v568, 0.0
    %v804 = vmax.f32 %v570, 0.0
    %v805 = vmax.f32 %v573, 0.0
    %v806 = vmax.f32 %v575, 0.0
    %v807 = vmax.f32 %v578, 0.0
    %v808 = vmax.f32 %v580, 0.0
    %v809 = vmax.f32 %v583, 0.0
    %v810 = vmax.f32 %v585, 0.0
    %v811 = vmax.f32 %v588, 0.0
    %v812 = vmax.f32 %v590, 0.0
    %v813 = vmax.f32 %v593, 0.0
    %v814 = vmax.f32 %v595, 0.0
    %v815 = vmax.f32 %v598, 0.0
    %v816 = vmax.f32 %v600, 0.0
    %v817 = vmax.f32 %v603, 0.0
    %v818 = vmax.f32 %v605, 0.0
    %v819 = vmax.f32 %v608, 0.0
    %v820 = vmax.f32 %v610, 0.0
    %v821 = vmax.f32 %v613, 0.0
    %v822 = vmax.f32 %v615, 0.0
    %v823 = vmax.f32 %v618, 0.0
    %v824 = vmax.f32 %v620, 0.0
    %v825 = vmax.f32 %v623, 0.0
    %v826 = vmax.f32 %v625, 0.0
    %v827 = vmax.f32 %v628, 0.0
    %v828 = vmax.f32 %v630, 0.0
    %v829 = vmax.f32 %v633, 0.0
    %v830 = vmax.f32 %v635, 0.0
    %v831 = vmax.f32 %v638, 0.0
    %v832 = vmax.f32 %v640, 0.0
    %v833 = vmax.f32 %v643, 0.0
    %v834 = vmax.f32 %v645, 0.0
    %v835 = vmax.f32 %v648, 0.0
    %v836 = vmax.f32 %v650, 0.0
    %v837 = vmax.f32 %v653, 0.0
    %v838 = vmax.f32 %v655, 0.0
    %v839 = vmax.f32 %v658, 0.0
    %v840 = vmax.f32 %v660, 0.0
    %v841 = vmax.f32 %v663, 0.0
    %v842 = vmax.f32 %v665, 0.0
    %v843 = vmax.f32 %v668, 0.0
    %v844 = vmax.f32 %v670, 0.0
    %v845 = vmax.f32 %v673, 0.0
    %v846 = vmax.f32 %v675, 0.0
    %v847 = vmax.f32 %v678, 0.0
    %v848 = vmax.f32 %v680, 0.0
    %v849 = vmax.f32 %v683, 0.0
    %v850 = vmax.f32 %v685, 0.0
    %v851 = vmax.f32 %v688, 0.0
    %v852 = vmax.f32 %v690, 0.0
    %v853 = vmax.f32 %v693, 0.0
    %v854 = vmax.f32 %v695, 0.0
    %v855 = vmax.f32 %v698, 0.0
    %v856 = vmax.f32 %v700, 0.0
    %v857 = vmax.f32 %v703, 0.0
    %v858 = vmax.f32 %v705, 0.0
    %v859 = vmax.f32 %v708, 0.0
    %v860 = vmax.f32 %v710, 0.0
    %v861 = vmax.f32 %v713, 0.0
    %v862 = vmax.f32 %v715, 0.0
    %v863 = vmax.f32 %v718, 0.0
    %v864 = vmax.f32 %v720, 0.0
    %v865 = vmax.f32 %v723, 0.0
    %v866 = vmax.f32 %v725, 0.0
    %v867 = vmax.f32 %v728, 0.0
    %v868 = vmax.f32 %v730, 0.0
    %v869 = vmax.f32 %v733, 0.0
    %v870 = vmax.f32 %v735, 0.0
    %v871 = vmax.f32 %v738, 0.0
    %v872 = vmax.f32 %v740, 0.0
    %v873 = vmax.f32 %v743, 0.0
    %v874 = vmax.f32 %v745, 0.0
    %v875 = vmax.f32 %v748, 0.0
    %v876 = vpack.c.bf16 %v752, %v751
    %v877 = vpack.c.bf16 %v754, %v753
    %v878 = vpack.c.bf16 %v756, %v755
    %v879 = vpack.c.bf16 %v758, %v757
    %v880 = vpack.c.bf16 %v760, %v759
    %v881 = vpack.c.bf16 %v762, %v761
    %v882 = vpack.c.bf16 %v764, %v763
    %v883 = vpack.c.bf16 %v766, %v765
    %v884 = vpack.c.bf16 %v768, %v767
    %v885 = vpack.c.bf16 %v770, %v769
    %v886 = vpack.c.bf16 %v772, %v771
    %v887 = vpack.c.bf16 %v774, %v773
    %v888 = vpack.c.bf16 %v776, %v775
    %v889 = vpack.c.bf16 %v778, %v777
    %v890 = vpack.c.bf16 %v780, %v779
    %v891 = vpack.c.bf16 %v782, %v781
    %v892 = vpack.c.bf16 %v784, %v783
    %v893 = vpack.c.bf16 %v786, %v785
    %v894 = vpack.c.bf16 %v788, %v787
    %v895 = vpack.c.bf16 %v790, %v789
    %v896 = vpack.c.bf16 %v792, %v791
    %v897 = vpack.c.bf16 %v794, %v793
    %v898 = vpack.c.bf16 %v796, %v795
    %v899 = vpack.c.bf16 %v798, %v797
    %v900 = vpack.c.bf16 %v800, %v799
    %v901 = vpack.c.bf16 %v802, %v801
    %v902 = vpack.c.bf16 %v804, %v803
    %v903 = vpack.c.bf16 %v806, %v805
    %v904 = vpack.c.bf16 %v808, %v807
    %v905 = vpack.c.bf16 %v810, %v809
    %v906 = vpack.c.bf16 %v812, %v811
    %v907 = vpack.c.bf16 %v814, %v813
    %v908 = vpack.c.bf16 %v816, %v815
    %v909 = vpack.c.bf16 %v818, %v817
    %v910 = vpack.c.bf16 %v820, %v819
    %v911 = vpack.c.bf16 %v822, %v821
    %v912 = vpack.c.bf16 %v824, %v823
    %v913 = vpack.c.bf16 %v826, %v825
    %v914 = vpack.c.bf16 %v828, %v827
    %v915 = vpack.c.bf16 %v830, %v829
    %v916 = vpack.c.bf16 %v832, %v831
    %v917 = vpack.c.bf16 %v834, %v833
    %v918 = vpack.c.bf16 %v836, %v835
    %v919 = vpack.c.bf16 %v838, %v837
    %v920 = vpack.c.bf16 %v840, %v839
    %v921 = vpack.c.bf16 %v842, %v841
    %v922 = vpack.c.bf16 %v844, %v843
    %v923 = vpack.c.bf16 %v846, %v845
    %v924 = vpack.c.bf16 %v848, %v847
    %v925 = vpack.c.bf16 %v850, %v849
    %v926 = vpack.c.bf16 %v852, %v851
    %v927 = vpack.c.bf16 %v854, %v853
    %v928 = vpack.c.bf16 %v856, %v855
    %v929 = vpack.c.bf16 %v858, %v857
    %v930 = vpack.c.bf16 %v860, %v859
    %v931 = vpack.c.bf16 %v862, %v861
    %v932 = vpack.c.bf16 %v864, %v863
    %v933 = vpack.c.bf16 %v866, %v865
    %v934 = vpack.c.bf16 %v868, %v867
    %v935 = vpack.c.bf16 %v870, %v869
    %v936 = vpack.c.bf16 %v872, %v871
    %v937 = vpack.c.bf16 %v874, %v873
    %v938 = vpack.c.bf16 %v875, %v875
    %v939 = vld [vmem:[%s3] sm:$0xf]
    %v940 = vld [vmem:[%s3 + $0x4] sm:$0xf]
    %v941 = vld [vmem:[%s3 + $0x8] sm:$0xf]
    %v942 = vld [vmem:[%s3 + $0xc] sm:$0xf]
    %v943 = vld [vmem:[%s3 + $0x10] sm:$0xf]
    %v944 = vld [vmem:[%s3 + $0x14] sm:$0xf]
    %v945 = vld [vmem:[%s3 + $0x18] sm:$0xf]
    %v946 = vld [vmem:[%s3 + $0x1c] sm:$0xf]
    %v947 = vld [vmem:[%s3 + $0x20] sm:$0xf]
    %v948 = vld [vmem:[%s3 + $0x24] sm:$0xf]
    %v949 = vld [vmem:[%s3 + $0x28] sm:$0xf]
    %v950 = vld [vmem:[%s3 + $0x2c] sm:$0xf]
    %v951 = vld [vmem:[%s3 + $0x30] sm:$0xf]
    %v952 = vld [vmem:[%s3 + $0x34] sm:$0xf]
    %v953 = vld [vmem:[%s3 + $0x38] sm:$0xf]
    %v954 = vld [vmem:[%s3 + $0x3c] sm:$0xf]
    %v955 = vld [vmem:[%s4] sm:$0x1]
    %v957 = vperm.slane %v955, 0
    %v975 = vunpack.c.l.b16 %v939
    %v976 = vunpack.c.l.b16 %v940
    %v977 = vunpack.c.l.b16 %v941
    %v978 = vunpack.c.l.b16 %v942
    %v979 = vunpack.c.l.b16 %v943
    %v980 = vunpack.c.l.b16 %v944
    %v981 = vunpack.c.l.b16 %v945
    %v982 = vunpack.c.l.b16 %v946
    %v983 = vunpack.c.l.b16 %v947
    %v984 = vunpack.c.l.b16 %v948
    %v985 = vunpack.c.l.b16 %v949
    %v986 = vunpack.c.l.b16 %v950
    %v987 = vunpack.c.l.b16 %v951
    %v988 = vunpack.c.l.b16 %v952
    %v989 = vunpack.c.l.b16 %v953
    %v990 = vunpack.c.l.b16 %v954
    %v991 = vpack.c.b16 %v976, %v975
    %v992 = vpack.c.b16 %v978, %v977
    %v993 = vpack.c.b16 %v980, %v979
    %v994 = vpack.c.b16 %v982, %v981
    %v995 = vpack.c.b16 %v984, %v983
    %v996 = vpack.c.b16 %v986, %v985
    %v997 = vpack.c.b16 %v988, %v987
    %v998 = vpack.c.b16 %v990, %v989
    %1007 = vmatpush.bf16.msra.mxu0 %v998
    %1008 = vmatpush.bf16.msra.mxu0 %v997
    %1009 = vmatpush.bf16.msra.mxu0 %v996
    %1010 = vmatpush.bf16.msra.mxu0 %v995
    %1011 = vmatpush.bf16.msra.mxu0 %v994
    %1012 = vmatpush.bf16.msra.mxu0 %v993
    %1013 = vmatpush.bf16.msra.mxu0 %v992
    %1014 = vmatpush.bf16.msra.mxu0 %v991
    %1015 = vmatmul.bf16.gmra.mxu0 %v876
    %v1016 = vpop.f32.mrf.mxu0
    %v1017 = vadd.f32 %v957, %v1016
    %v1018 = vpop.f32.mrf.mxu0
    %v1019 = vadd.f32 %v957, %v1018
    %1020 = vmatmul.bf16.gmra.mxu0 %v877
    %v1021 = vpop.f32.mrf.mxu0
    %v1022 = vadd.f32 %v957, %v1021
    %v1023 = vpop.f32.mrf.mxu0
    %v1024 = vadd.f32 %v957, %v1023
    %1025 = vmatmul.bf16.gmra.mxu0 %v878
    %v1026 = vpop.f32.mrf.mxu0
    %v1027 = vadd.f32 %v957, %v1026
    %v1028 = vpop.f32.mrf.mxu0
    %v1029 = vadd.f32 %v957, %v1028
    %1030 = vmatmul.bf16.gmra.mxu0 %v879
    %v1031 = vpop.f32.mrf.mxu0
    %v1032 = vadd.f32 %v957, %v1031
    %v1033 = vpop.f32.mrf.mxu0
    %v1034 = vadd.f32 %v957, %v1033
    %1035 = vmatmul.bf16.gmra.mxu0 %v880
    %v1036 = vpop.f32.mrf.mxu0
    %v1037 = vadd.f32 %v957, %v1036
    %v1038 = vpop.f32.mrf.mxu0
    %v1039 = vadd.f32 %v957, %v1038
    %1040 = vmatmul.bf16.gmra.mxu0 %v881
    %v1041 = vpop.f32.mrf.mxu0
    %v1042 = vadd.f32 %v957, %v1041
    %v1043 = vpop.f32.mrf.mxu0
    %v1044 = vadd.f32 %v957, %v1043
    %1045 = vmatmul.bf16.gmra.mxu0 %v882
    %v1046 = vpop.f32.mrf.mxu0
    %v1047 = vadd.f32 %v957, %v1046
    %v1048 = vpop.f32.mrf.mxu0
    %v1049 = vadd.f32 %v957, %v1048
    %1050 = vmatmul.bf16.gmra.mxu0 %v883
    %v1051 = vpop.f32.mrf.mxu0
    %v1052 = vadd.f32 %v957, %v1051
    %v1053 = vpop.f32.mrf.mxu0
    %v1054 = vadd.f32 %v957, %v1053
    %1055 = vmatmul.bf16.gmra.mxu0 %v884
    %v1056 = vpop.f32.mrf.mxu0
    %v1057 = vadd.f32 %v957, %v1056
    %v1058 = vpop.f32.mrf.mxu0
    %v1059 = vadd.f32 %v957, %v1058
    %1060 = vmatmul.bf16.gmra.mxu0 %v885
    %v1061 = vpop.f32.mrf.mxu0
    %v1062 = vadd.f32 %v957, %v1061
    %v1063 = vpop.f32.mrf.mxu0
    %v1064 = vadd.f32 %v957, %v1063
    %1065 = vmatmul.bf16.gmra.mxu0 %v886
    %v1066 = vpop.f32.mrf.mxu0
    %v1067 = vadd.f32 %v957, %v1066
    %v1068 = vpop.f32.mrf.mxu0
    %v1069 = vadd.f32 %v957, %v1068
    %1070 = vmatmul.bf16.gmra.mxu0 %v887
    %v1071 = vpop.f32.mrf.mxu0
    %v1072 = vadd.f32 %v957, %v1071
    %v1073 = vpop.f32.mrf.mxu0
    %v1074 = vadd.f32 %v957, %v1073
    %1075 = vmatmul.bf16.gmra.mxu0 %v888
    %v1076 = vpop.f32.mrf.mxu0
    %v1077 = vadd.f32 %v957, %v1076
    %v1078 = vpop.f32.mrf.mxu0
    %v1079 = vadd.f32 %v957, %v1078
    %1080 = vmatmul.bf16.gmra.mxu0 %v889
    %v1081 = vpop.f32.mrf.mxu0
    %v1082 = vadd.f32 %v957, %v1081
    %v1083 = vpop.f32.mrf.mxu0
    %v1084 = vadd.f32 %v957, %v1083
    %1085 = vmatmul.bf16.gmra.mxu0 %v890
    %v1086 = vpop.f32.mrf.mxu0
    %v1087 = vadd.f32 %v957, %v1086
    %v1088 = vpop.f32.mrf.mxu0
    %v1089 = vadd.f32 %v957, %v1088
    %1090 = vmatmul.bf16.gmra.mxu0 %v891
    %v1091 = vpop.f32.mrf.mxu0
    %v1092 = vadd.f32 %v957, %v1091
    %v1093 = vpop.f32.mrf.mxu0
    %v1094 = vadd.f32 %v957, %v1093
    %1095 = vmatmul.bf16.gmra.mxu0 %v892
    %v1096 = vpop.f32.mrf.mxu0
    %v1097 = vadd.f32 %v957, %v1096
    %v1098 = vpop.f32.mrf.mxu0
    %v1099 = vadd.f32 %v957, %v1098
    %1100 = vmatmul.bf16.gmra.mxu0 %v893
    %v1101 = vpop.f32.mrf.mxu0
    %v1102 = vadd.f32 %v957, %v1101
    %v1103 = vpop.f32.mrf.mxu0
    %v1104 = vadd.f32 %v957, %v1103
    %1105 = vmatmul.bf16.gmra.mxu0 %v894
    %v1106 = vpop.f32.mrf.mxu0
    %v1107 = vadd.f32 %v957, %v1106
    %v1108 = vpop.f32.mrf.mxu0
    %v1109 = vadd.f32 %v957, %v1108
    %1110 = vmatmul.bf16.gmra.mxu0 %v895
    %v1111 = vpop.f32.mrf.mxu0
    %v1112 = vadd.f32 %v957, %v1111
    %v1113 = vpop.f32.mrf.mxu0
    %v1114 = vadd.f32 %v957, %v1113
    %1115 = vmatmul.bf16.gmra.mxu0 %v896
    %v1116 = vpop.f32.mrf.mxu0
    %v1117 = vadd.f32 %v957, %v1116
    %v1118 = vpop.f32.mrf.mxu0
    %v1119 = vadd.f32 %v957, %v1118
    %1120 = vmatmul.bf16.gmra.mxu0 %v897
    %v1121 = vpop.f32.mrf.mxu0
    %v1122 = vadd.f32 %v957, %v1121
    %v1123 = vpop.f32.mrf.mxu0
    %v1124 = vadd.f32 %v957, %v1123
    %1125 = vmatmul.bf16.gmra.mxu0 %v898
    %v1126 = vpop.f32.mrf.mxu0
    %v1127 = vadd.f32 %v957, %v1126
    %v1128 = vpop.f32.mrf.mxu0
    %v1129 = vadd.f32 %v957, %v1128
    %1130 = vmatmul.bf16.gmra.mxu0 %v899
    %v1131 = vpop.f32.mrf.mxu0
    %v1132 = vadd.f32 %v957, %v1131
    %v1133 = vpop.f32.mrf.mxu0
    %v1134 = vadd.f32 %v957, %v1133
    %1135 = vmatmul.bf16.gmra.mxu0 %v900
    %v1136 = vpop.f32.mrf.mxu0
    %v1137 = vadd.f32 %v957, %v1136
    %v1138 = vpop.f32.mrf.mxu0
    %v1139 = vadd.f32 %v957, %v1138
    %1140 = vmatmul.bf16.gmra.mxu0 %v901
    %v1141 = vpop.f32.mrf.mxu0
    %v1142 = vadd.f32 %v957, %v1141
    %v1143 = vpop.f32.mrf.mxu0
    %v1144 = vadd.f32 %v957, %v1143
    %1145 = vmatmul.bf16.gmra.mxu0 %v902
    %v1146 = vpop.f32.mrf.mxu0
    %v1147 = vadd.f32 %v957, %v1146
    %v1148 = vpop.f32.mrf.mxu0
    %v1149 = vadd.f32 %v957, %v1148
    %1150 = vmatmul.bf16.gmra.mxu0 %v903
    %v1151 = vpop.f32.mrf.mxu0
    %v1152 = vadd.f32 %v957, %v1151
    %v1153 = vpop.f32.mrf.mxu0
    %v1154 = vadd.f32 %v957, %v1153
    %1155 = vmatmul.bf16.gmra.mxu0 %v904
    %v1156 = vpop.f32.mrf.mxu0
    %v1157 = vadd.f32 %v957, %v1156
    %v1158 = vpop.f32.mrf.mxu0
    %v1159 = vadd.f32 %v957, %v1158
    %1160 = vmatmul.bf16.gmra.mxu0 %v905
    %v1161 = vpop.f32.mrf.mxu0
    %v1162 = vadd.f32 %v957, %v1161
    %v1163 = vpop.f32.mrf.mxu0
    %v1164 = vadd.f32 %v957, %v1163
    %1165 = vmatmul.bf16.gmra.mxu0 %v906
    %v1166 = vpop.f32.mrf.mxu0
    %v1167 = vadd.f32 %v957, %v1166
    %v1168 = vpop.f32.mrf.mxu0
    %v1169 = vadd.f32 %v957, %v1168
    %1170 = vmatmul.bf16.gmra.mxu0 %v907
    %v1171 = vpop.f32.mrf.mxu0
    %v1172 = vadd.f32 %v957, %v1171
    %v1173 = vpop.f32.mrf.mxu0
    %v1174 = vadd.f32 %v957, %v1173
    %1175 = vmatmul.bf16.gmra.mxu0 %v908
    %v1176 = vpop.f32.mrf.mxu0
    %v1177 = vadd.f32 %v957, %v1176
    %v1178 = vpop.f32.mrf.mxu0
    %v1179 = vadd.f32 %v957, %v1178
    %1180 = vmatmul.bf16.gmra.mxu0 %v909
    %v1181 = vpop.f32.mrf.mxu0
    %v1182 = vadd.f32 %v957, %v1181
    %v1183 = vpop.f32.mrf.mxu0
    %v1184 = vadd.f32 %v957, %v1183
    %1185 = vmatmul.bf16.gmra.mxu0 %v910
    %v1186 = vpop.f32.mrf.mxu0
    %v1187 = vadd.f32 %v957, %v1186
    %v1188 = vpop.f32.mrf.mxu0
    %v1189 = vadd.f32 %v957, %v1188
    %1190 = vmatmul.bf16.gmra.mxu0 %v911
    %v1191 = vpop.f32.mrf.mxu0
    %v1192 = vadd.f32 %v957, %v1191
    %v1193 = vpop.f32.mrf.mxu0
    %v1194 = vadd.f32 %v957, %v1193
    %1195 = vmatmul.bf16.gmra.mxu0 %v912
    %v1196 = vpop.f32.mrf.mxu0
    %v1197 = vadd.f32 %v957, %v1196
    %v1198 = vpop.f32.mrf.mxu0
    %v1199 = vadd.f32 %v957, %v1198
    %1200 = vmatmul.bf16.gmra.mxu0 %v913
    %v1201 = vpop.f32.mrf.mxu0
    %v1202 = vadd.f32 %v957, %v1201
    %v1203 = vpop.f32.mrf.mxu0
    %v1204 = vadd.f32 %v957, %v1203
    %1205 = vmatmul.bf16.gmra.mxu0 %v914
    %v1206 = vpop.f32.mrf.mxu0
    %v1207 = vadd.f32 %v957, %v1206
    %v1208 = vpop.f32.mrf.mxu0
    %v1209 = vadd.f32 %v957, %v1208
    %1210 = vmatmul.bf16.gmra.mxu0 %v915
    %v1211 = vpop.f32.mrf.mxu0
    %v1212 = vadd.f32 %v957, %v1211
    %v1213 = vpop.f32.mrf.mxu0
    %v1214 = vadd.f32 %v957, %v1213
    %1215 = vmatmul.bf16.gmra.mxu0 %v916
    %v1216 = vpop.f32.mrf.mxu0
    %v1217 = vadd.f32 %v957, %v1216
    %v1218 = vpop.f32.mrf.mxu0
    %v1219 = vadd.f32 %v957, %v1218
    %1220 = vmatmul.bf16.gmra.mxu0 %v917
    %v1221 = vpop.f32.mrf.mxu0
    %v1222 = vadd.f32 %v957, %v1221
    %v1223 = vpop.f32.mrf.mxu0
    %v1224 = vadd.f32 %v957, %v1223
    %1225 = vmatmul.bf16.gmra.mxu0 %v918
    %v1226 = vpop.f32.mrf.mxu0
    %v1227 = vadd.f32 %v957, %v1226
    %v1228 = vpop.f32.mrf.mxu0
    %v1229 = vadd.f32 %v957, %v1228
    %1230 = vmatmul.bf16.gmra.mxu0 %v919
    %v1231 = vpop.f32.mrf.mxu0
    %v1232 = vadd.f32 %v957, %v1231
    %v1233 = vpop.f32.mrf.mxu0
    %v1234 = vadd.f32 %v957, %v1233
    %1235 = vmatmul.bf16.gmra.mxu0 %v920
    %v1236 = vpop.f32.mrf.mxu0
    %v1237 = vadd.f32 %v957, %v1236
    %v1238 = vpop.f32.mrf.mxu0
    %v1239 = vadd.f32 %v957, %v1238
    %1240 = vmatmul.bf16.gmra.mxu0 %v921
    %v1241 = vpop.f32.mrf.mxu0
    %v1242 = vadd.f32 %v957, %v1241
    %v1243 = vpop.f32.mrf.mxu0
    %v1244 = vadd.f32 %v957, %v1243
    %1245 = vmatmul.bf16.gmra.mxu0 %v922
    %v1246 = vpop.f32.mrf.mxu0
    %v1247 = vadd.f32 %v957, %v1246
    %v1248 = vpop.f32.mrf.mxu0
    %v1249 = vadd.f32 %v957, %v1248
    %1250 = vmatmul.bf16.gmra.mxu0 %v923
    %v1251 = vpop.f32.mrf.mxu0
    %v1252 = vadd.f32 %v957, %v1251
    %v1253 = vpop.f32.mrf.mxu0
    %v1254 = vadd.f32 %v957, %v1253
    %1255 = vmatmul.bf16.gmra.mxu0 %v924
    %v1256 = vpop.f32.mrf.mxu0
    %v1257 = vadd.f32 %v957, %v1256
    %v1258 = vpop.f32.mrf.mxu0
    %v1259 = vadd.f32 %v957, %v1258
    %1260 = vmatmul.bf16.gmra.mxu0 %v925
    %v1261 = vpop.f32.mrf.mxu0
    %v1262 = vadd.f32 %v957, %v1261
    %v1263 = vpop.f32.mrf.mxu0
    %v1264 = vadd.f32 %v957, %v1263
    %1265 = vmatmul.bf16.gmra.mxu0 %v926
    %v1266 = vpop.f32.mrf.mxu0
    %v1267 = vadd.f32 %v957, %v1266
    %v1268 = vpop.f32.mrf.mxu0
    %v1269 = vadd.f32 %v957, %v1268
    %1270 = vmatmul.bf16.gmra.mxu0 %v927
    %v1271 = vpop.f32.mrf.mxu0
    %v1272 = vadd.f32 %v957, %v1271
    %v1273 = vpop.f32.mrf.mxu0
    %v1274 = vadd.f32 %v957, %v1273
    %1275 = vmatmul.bf16.gmra.mxu0 %v928
    %v1276 = vpop.f32.mrf.mxu0
    %v1277 = vadd.f32 %v957, %v1276
    %v1278 = vpop.f32.mrf.mxu0
    %v1279 = vadd.f32 %v957, %v1278
    %1280 = vmatmul.bf16.gmra.mxu0 %v929
    %v1281 = vpop.f32.mrf.mxu0
    %v1282 = vadd.f32 %v957, %v1281
    %v1283 = vpop.f32.mrf.mxu0
    %v1284 = vadd.f32 %v957, %v1283
    %1285 = vmatmul.bf16.gmra.mxu0 %v930
    %v1286 = vpop.f32.mrf.mxu0
    %v1287 = vadd.f32 %v957, %v1286
    %v1288 = vpop.f32.mrf.mxu0
    %v1289 = vadd.f32 %v957, %v1288
    %1290 = vmatmul.bf16.gmra.mxu0 %v931
    %v1291 = vpop.f32.mrf.mxu0
    %v1292 = vadd.f32 %v957, %v1291
    %v1293 = vpop.f32.mrf.mxu0
    %v1294 = vadd.f32 %v957, %v1293
    %1295 = vmatmul.bf16.gmra.mxu0 %v932
    %v1296 = vpop.f32.mrf.mxu0
    %v1297 = vadd.f32 %v957, %v1296
    %v1298 = vpop.f32.mrf.mxu0
    %v1299 = vadd.f32 %v957, %v1298
    %1300 = vmatmul.bf16.gmra.mxu0 %v933
    %v1301 = vpop.f32.mrf.mxu0
    %v1302 = vadd.f32 %v957, %v1301
    %v1303 = vpop.f32.mrf.mxu0
    %v1304 = vadd.f32 %v957, %v1303
    %1305 = vmatmul.bf16.gmra.mxu0 %v934
    %v1306 = vpop.f32.mrf.mxu0
    %v1307 = vadd.f32 %v957, %v1306
    %v1308 = vpop.f32.mrf.mxu0
    %v1309 = vadd.f32 %v957, %v1308
    %1310 = vmatmul.bf16.gmra.mxu0 %v935
    %v1311 = vpop.f32.mrf.mxu0
    %v1312 = vadd.f32 %v957, %v1311
    %v1313 = vpop.f32.mrf.mxu0
    %v1314 = vadd.f32 %v957, %v1313
    %1315 = vmatmul.bf16.gmra.mxu0 %v936
    %v1316 = vpop.f32.mrf.mxu0
    %v1317 = vadd.f32 %v957, %v1316
    %v1318 = vpop.f32.mrf.mxu0
    %v1319 = vadd.f32 %v957, %v1318
    %1320 = vmatmul.bf16.gmra.mxu0 %v937
    %v1321 = vpop.f32.mrf.mxu0
    %v1322 = vadd.f32 %v957, %v1321
    %v1323 = vpop.f32.mrf.mxu0
    %v1324 = vadd.f32 %v957, %v1323
    %1325 = vmatmul.bf16.gmra.mxu0 %v938
    %v1326 = vpop.f32.mrf.mxu0
    %v1327 = vadd.f32 %v957, %v1326
    %v1328 = vpop.f32.mrf.mxu0
    %1329 = vdwg.mxu0
    %v1330 = vmax.f32 %v1017, 0.0
    %v1331 = vmax.f32 %v1019, 0.0
    %v1332 = vmax.f32 %v1022, 0.0
    %v1333 = vmax.f32 %v1024, 0.0
    %v1334 = vmax.f32 %v1027, 0.0
    %v1335 = vmax.f32 %v1029, 0.0
    %v1336 = vmax.f32 %v1032, 0.0
    %v1337 = vmax.f32 %v1034, 0.0
    %v1338 = vmax.f32 %v1037, 0.0
    %v1339 = vmax.f32 %v1039, 0.0
    %v1340 = vmax.f32 %v1042, 0.0
    %v1341 = vmax.f32 %v1044, 0.0
    %v1342 = vmax.f32 %v1047, 0.0
    %v1343 = vmax.f32 %v1049, 0.0
    %v1344 = vmax.f32 %v1052, 0.0
    %v1345 = vmax.f32 %v1054, 0.0
    %v1346 = vmax.f32 %v1057, 0.0
    %v1347 = vmax.f32 %v1059, 0.0
    %v1348 = vmax.f32 %v1062, 0.0
    %v1349 = vmax.f32 %v1064, 0.0
    %v1350 = vmax.f32 %v1067, 0.0
    %v1351 = vmax.f32 %v1069, 0.0
    %v1352 = vmax.f32 %v1072, 0.0
    %v1353 = vmax.f32 %v1074, 0.0
    %v1354 = vmax.f32 %v1077, 0.0
    %v1355 = vmax.f32 %v1079, 0.0
    %v1356 = vmax.f32 %v1082, 0.0
    %v1357 = vmax.f32 %v1084, 0.0
    %v1358 = vmax.f32 %v1087, 0.0
    %v1359 = vmax.f32 %v1089, 0.0
    %v1360 = vmax.f32 %v1092, 0.0
    %v1361 = vmax.f32 %v1094, 0.0
    %v1362 = vmax.f32 %v1097, 0.0
    %v1363 = vmax.f32 %v1099, 0.0
    %v1364 = vmax.f32 %v1102, 0.0
    %v1365 = vmax.f32 %v1104, 0.0
    %v1366 = vmax.f32 %v1107, 0.0
    %v1367 = vmax.f32 %v1109, 0.0
    %v1368 = vmax.f32 %v1112, 0.0
    %v1369 = vmax.f32 %v1114, 0.0
    %v1370 = vmax.f32 %v1117, 0.0
    %v1371 = vmax.f32 %v1119, 0.0
    %v1372 = vmax.f32 %v1122, 0.0
    %v1373 = vmax.f32 %v1124, 0.0
    %v1374 = vmax.f32 %v1127, 0.0
    %v1375 = vmax.f32 %v1129, 0.0
    %v1376 = vmax.f32 %v1132, 0.0
    %v1377 = vmax.f32 %v1134, 0.0
    %v1378 = vmax.f32 %v1137, 0.0
    %v1379 = vmax.f32 %v1139, 0.0
    %v1380 = vmax.f32 %v1142, 0.0
    %v1381 = vmax.f32 %v1144, 0.0
    %v1382 = vmax.f32 %v1147, 0.0
    %v1383 = vmax.f32 %v1149, 0.0
    %v1384 = vmax.f32 %v1152, 0.0
    %v1385 = vmax.f32 %v1154, 0.0
    %v1386 = vmax.f32 %v1157, 0.0
    %v1387 = vmax.f32 %v1159, 0.0
    %v1388 = vmax.f32 %v1162, 0.0
    %v1389 = vmax.f32 %v1164, 0.0
    %v1390 = vmax.f32 %v1167, 0.0
    %v1391 = vmax.f32 %v1169, 0.0
    %v1392 = vmax.f32 %v1172, 0.0
    %v1393 = vmax.f32 %v1174, 0.0
    %v1394 = vmax.f32 %v1177, 0.0
    %v1395 = vmax.f32 %v1179, 0.0
    %v1396 = vmax.f32 %v1182, 0.0
    %v1397 = vmax.f32 %v1184, 0.0
    %v1398 = vmax.f32 %v1187, 0.0
    %v1399 = vmax.f32 %v1189, 0.0
    %v1400 = vmax.f32 %v1192, 0.0
    %v1401 = vmax.f32 %v1194, 0.0
    %v1402 = vmax.f32 %v1197, 0.0
    %v1403 = vmax.f32 %v1199, 0.0
    %v1404 = vmax.f32 %v1202, 0.0
    %v1405 = vmax.f32 %v1204, 0.0
    %v1406 = vmax.f32 %v1207, 0.0
    %v1407 = vmax.f32 %v1209, 0.0
    %v1408 = vmax.f32 %v1212, 0.0
    %v1409 = vmax.f32 %v1214, 0.0
    %v1410 = vmax.f32 %v1217, 0.0
    %v1411 = vmax.f32 %v1219, 0.0
    %v1412 = vmax.f32 %v1222, 0.0
    %v1413 = vmax.f32 %v1224, 0.0
    %v1414 = vmax.f32 %v1227, 0.0
    %v1415 = vmax.f32 %v1229, 0.0
    %v1416 = vmax.f32 %v1232, 0.0
    %v1417 = vmax.f32 %v1234, 0.0
    %v1418 = vmax.f32 %v1237, 0.0
    %v1419 = vmax.f32 %v1239, 0.0
    %v1420 = vmax.f32 %v1242, 0.0
    %v1421 = vmax.f32 %v1244, 0.0
    %v1422 = vmax.f32 %v1247, 0.0
    %v1423 = vmax.f32 %v1249, 0.0
    %v1424 = vmax.f32 %v1252, 0.0
    %v1425 = vmax.f32 %v1254, 0.0
    %v1426 = vmax.f32 %v1257, 0.0
    %v1427 = vmax.f32 %v1259, 0.0
    %v1428 = vmax.f32 %v1262, 0.0
    %v1429 = vmax.f32 %v1264, 0.0
    %v1430 = vmax.f32 %v1267, 0.0
    %v1431 = vmax.f32 %v1269, 0.0
    %v1432 = vmax.f32 %v1272, 0.0
    %v1433 = vmax.f32 %v1274, 0.0
    %v1434 = vmax.f32 %v1277, 0.0
    %v1435 = vmax.f32 %v1279, 0.0
    %v1436 = vmax.f32 %v1282, 0.0
    %v1437 = vmax.f32 %v1284, 0.0
    %v1438 = vmax.f32 %v1287, 0.0
    %v1439 = vmax.f32 %v1289, 0.0
    %v1440 = vmax.f32 %v1292, 0.0
    %v1441 = vmax.f32 %v1294, 0.0
    %v1442 = vmax.f32 %v1297, 0.0
    %v1443 = vmax.f32 %v1299, 0.0
    %v1444 = vmax.f32 %v1302, 0.0
    %v1445 = vmax.f32 %v1304, 0.0
    %v1446 = vmax.f32 %v1307, 0.0
    %v1447 = vmax.f32 %v1309, 0.0
    %v1448 = vmax.f32 %v1312, 0.0
    %v1449 = vmax.f32 %v1314, 0.0
    %v1450 = vmax.f32 %v1317, 0.0
    %v1451 = vmax.f32 %v1319, 0.0
    %v1452 = vmax.f32 %v1322, 0.0
    %v1453 = vmax.f32 %v1324, 0.0
    %v1454 = vmax.f32 %v1327, 0.0
    %v1455 = vld [vmem:[%s5] sm:$0x1]
    %v1457 = vperm.slane %v1455, 0
    %v1459 = vmul.f32 %v1330, %v1457
    %v1460 = vmul.f32 %v1331, %v1457
    %v1461 = vmul.f32 %v1332, %v1457
    %v1462 = vmul.f32 %v1333, %v1457
    %v1463 = vmul.f32 %v1334, %v1457
    %v1464 = vmul.f32 %v1335, %v1457
    %v1465 = vmul.f32 %v1336, %v1457
    %v1466 = vmul.f32 %v1337, %v1457
    %v1467 = vmul.f32 %v1338, %v1457
    %v1468 = vmul.f32 %v1339, %v1457
    %v1469 = vmul.f32 %v1340, %v1457
    %v1470 = vmul.f32 %v1341, %v1457
    %v1471 = vmul.f32 %v1342, %v1457
    %v1472 = vmul.f32 %v1343, %v1457
    %v1473 = vmul.f32 %v1344, %v1457
    %v1474 = vmul.f32 %v1345, %v1457
    %v1475 = vmul.f32 %v1346, %v1457
    %v1476 = vmul.f32 %v1347, %v1457
    %v1477 = vmul.f32 %v1348, %v1457
    %v1478 = vmul.f32 %v1349, %v1457
    %v1479 = vmul.f32 %v1350, %v1457
    %v1480 = vmul.f32 %v1351, %v1457
    %v1481 = vmul.f32 %v1352, %v1457
    %v1482 = vmul.f32 %v1353, %v1457
    %v1483 = vmul.f32 %v1354, %v1457
    %v1484 = vmul.f32 %v1355, %v1457
    %v1485 = vmul.f32 %v1356, %v1457
    %v1486 = vmul.f32 %v1357, %v1457
    %v1487 = vmul.f32 %v1358, %v1457
    %v1488 = vmul.f32 %v1359, %v1457
    %v1489 = vmul.f32 %v1360, %v1457
    %v1490 = vmul.f32 %v1361, %v1457
    %v1491 = vmul.f32 %v1362, %v1457
    %v1492 = vmul.f32 %v1363, %v1457
    %v1493 = vmul.f32 %v1364, %v1457
    %v1494 = vmul.f32 %v1365, %v1457
    %v1495 = vmul.f32 %v1366, %v1457
    %v1496 = vmul.f32 %v1367, %v1457
    %v1497 = vmul.f32 %v1368, %v1457
    %v1498 = vmul.f32 %v1369, %v1457
    %v1499 = vmul.f32 %v1370, %v1457
    %v1500 = vmul.f32 %v1371, %v1457
    %v1501 = vmul.f32 %v1372, %v1457
    %v1502 = vmul.f32 %v1373, %v1457
    %v1503 = vmul.f32 %v1374, %v1457
    %v1504 = vmul.f32 %v1375, %v1457
    %v1505 = vmul.f32 %v1376, %v1457
    %v1506 = vmul.f32 %v1377, %v1457
    %v1507 = vmul.f32 %v1378, %v1457
    %v1508 = vmul.f32 %v1379, %v1457
    %v1509 = vmul.f32 %v1380, %v1457
    %v1510 = vmul.f32 %v1381, %v1457
    %v1511 = vmul.f32 %v1382, %v1457
    %v1512 = vmul.f32 %v1383, %v1457
    %v1513 = vmul.f32 %v1384, %v1457
    %v1514 = vmul.f32 %v1385, %v1457
    %v1515 = vmul.f32 %v1386, %v1457
    %v1516 = vmul.f32 %v1387, %v1457
    %v1517 = vmul.f32 %v1388, %v1457
    %v1518 = vmul.f32 %v1389, %v1457
    %v1519 = vmul.f32 %v1390, %v1457
    %v1520 = vmul.f32 %v1391, %v1457
    %v1521 = vmul.f32 %v1392, %v1457
    %v1522 = vmul.f32 %v1393, %v1457
    %v1523 = vmul.f32 %v1394, %v1457
    %v1524 = vmul.f32 %v1395, %v1457
    %v1525 = vmul.f32 %v1396, %v1457
    %v1526 = vmul.f32 %v1397, %v1457
    %v1527 = vmul.f32 %v1398, %v1457
    %v1528 = vmul.f32 %v1399, %v1457
    %v1529 = vmul.f32 %v1400, %v1457
    %v1530 = vmul.f32 %v1401, %v1457
    %v1531 = vmul.f32 %v1402, %v1457
    %v1532 = vmul.f32 %v1403, %v1457
    %v1533 = vmul.f32 %v1404, %v1457
    %v1534 = vmul.f32 %v1405, %v1457
    %v1535 = vmul.f32 %v1406, %v1457
    %v1536 = vmul.f32 %v1407, %v1457
    %v1537 = vmul.f32 %v1408, %v1457
    %v1538 = vmul.f32 %v1409, %v1457
    %v1539 = vmul.f32 %v1410, %v1457
    %v1540 = vmul.f32 %v1411, %v1457
    %v1541 = vmul.f32 %v1412, %v1457
    %v1542 = vmul.f32 %v1413, %v1457
    %v1543 = vmul.f32 %v1414, %v1457
    %v1544 = vmul.f32 %v1415, %v1457
    %v1545 = vmul.f32 %v1416, %v1457
    %v1546 = vmul.f32 %v1417, %v1457
    %v1547 = vmul.f32 %v1418, %v1457
    %v1548 = vmul.f32 %v1419, %v1457
    %v1549 = vmul.f32 %v1420, %v1457
    %v1550 = vmul.f32 %v1421, %v1457
    %v1551 = vmul.f32 %v1422, %v1457
    %v1552 = vmul.f32 %v1423, %v1457
    %v1553 = vmul.f32 %v1424, %v1457
    %v1554 = vmul.f32 %v1425, %v1457
    %v1555 = vmul.f32 %v1426, %v1457
    %v1556 = vmul.f32 %v1427, %v1457
    %v1557 = vmul.f32 %v1428, %v1457
    %v1558 = vmul.f32 %v1429, %v1457
    %v1559 = vmul.f32 %v1430, %v1457
    %v1560 = vmul.f32 %v1431, %v1457
    %v1561 = vmul.f32 %v1432, %v1457
    %v1562 = vmul.f32 %v1433, %v1457
    %v1563 = vmul.f32 %v1434, %v1457
    %v1564 = vmul.f32 %v1435, %v1457
    %v1565 = vmul.f32 %v1436, %v1457
    %v1566 = vmul.f32 %v1437, %v1457
    %v1567 = vmul.f32 %v1438, %v1457
    %v1568 = vmul.f32 %v1439, %v1457
    %v1569 = vmul.f32 %v1440, %v1457
    %v1570 = vmul.f32 %v1441, %v1457
    %v1571 = vmul.f32 %v1442, %v1457
    %v1572 = vmul.f32 %v1443, %v1457
    %v1573 = vmul.f32 %v1444, %v1457
    %v1574 = vmul.f32 %v1445, %v1457
    %v1575 = vmul.f32 %v1446, %v1457
    %v1576 = vmul.f32 %v1447, %v1457
    %v1577 = vmul.f32 %v1448, %v1457
    %v1578 = vmul.f32 %v1449, %v1457
    %v1579 = vmul.f32 %v1450, %v1457
    %v1580 = vmul.f32 %v1451, %v1457
    %v1581 = vmul.f32 %v1452, %v1457
    %v1582 = vmul.f32 %v1453, %v1457
    %v1583 = vmul.f32 %v1454, %v1457
    %1584 = vadd.xlane.f32.xlu0 %v1459
    %v1585 = vpop.xlane.xlu0 %1584
    %1586 = vadd.xlane.f32.xlu0 %v1460
    %v1587 = vpop.xlane.xlu0 %1586
    %1588 = vadd.xlane.f32.xlu0 %v1461
    %v1589 = vpop.xlane.xlu0 %1588
    %1590 = vadd.xlane.f32.xlu0 %v1462
    %v1591 = vpop.xlane.xlu0 %1590
    %1592 = vadd.xlane.f32.xlu0 %v1463
    %v1593 = vpop.xlane.xlu0 %1592
    %1594 = vadd.xlane.f32.xlu0 %v1464
    %v1595 = vpop.xlane.xlu0 %1594
    %1596 = vadd.xlane.f32.xlu0 %v1465
    %v1597 = vpop.xlane.xlu0 %1596
    %1598 = vadd.xlane.f32.xlu0 %v1466
    %v1599 = vpop.xlane.xlu0 %1598
    %1600 = vadd.xlane.f32.xlu0 %v1467
    %v1601 = vpop.xlane.xlu0 %1600
    %1602 = vadd.xlane.f32.xlu0 %v1468
    %v1603 = vpop.xlane.xlu0 %1602
    %1604 = vadd.xlane.f32.xlu0 %v1469
    %v1605 = vpop.xlane.xlu0 %1604
    %1606 = vadd.xlane.f32.xlu0 %v1470
    %v1607 = vpop.xlane.xlu0 %1606
    %1608 = vadd.xlane.f32.xlu0 %v1471
    %v1609 = vpop.xlane.xlu0 %1608
    %1610 = vadd.xlane.f32.xlu0 %v1472
    %v1611 = vpop.xlane.xlu0 %1610
    %1612 = vadd.xlane.f32.xlu0 %v1473
    %v1613 = vpop.xlane.xlu0 %1612
    %1614 = vadd.xlane.f32.xlu0 %v1474
    %v1615 = vpop.xlane.xlu0 %1614
    %1616 = vadd.xlane.f32.xlu0 %v1475
    %v1617 = vpop.xlane.xlu0 %1616
    %1618 = vadd.xlane.f32.xlu0 %v1476
    %v1619 = vpop.xlane.xlu0 %1618
    %1620 = vadd.xlane.f32.xlu0 %v1477
    %v1621 = vpop.xlane.xlu0 %1620
    %1622 = vadd.xlane.f32.xlu0 %v1478
    %v1623 = vpop.xlane.xlu0 %1622
    %1624 = vadd.xlane.f32.xlu0 %v1479
    %v1625 = vpop.xlane.xlu0 %1624
    %1626 = vadd.xlane.f32.xlu0 %v1480
    %v1627 = vpop.xlane.xlu0 %1626
    %1628 = vadd.xlane.f32.xlu0 %v1481
    %v1629 = vpop.xlane.xlu0 %1628
    %1630 = vadd.xlane.f32.xlu0 %v1482
    %v1631 = vpop.xlane.xlu0 %1630
    %1632 = vadd.xlane.f32.xlu0 %v1483
    %v1633 = vpop.xlane.xlu0 %1632
    %1634 = vadd.xlane.f32.xlu0 %v1484
    %v1635 = vpop.xlane.xlu0 %1634
    %1636 = vadd.xlane.f32.xlu0 %v1485
    %v1637 = vpop.xlane.xlu0 %1636
    %1638 = vadd.xlane.f32.xlu0 %v1486
    %v1639 = vpop.xlane.xlu0 %1638
    %1640 = vadd.xlane.f32.xlu0 %v1487
    %v1641 = vpop.xlane.xlu0 %1640
    %1642 = vadd.xlane.f32.xlu0 %v1488
    %v1643 = vpop.xlane.xlu0 %1642
    %1644 = vadd.xlane.f32.xlu0 %v1489
    %v1645 = vpop.xlane.xlu0 %1644
    %1646 = vadd.xlane.f32.xlu0 %v1490
    %v1647 = vpop.xlane.xlu0 %1646
    %1648 = vadd.xlane.f32.xlu0 %v1491
    %v1649 = vpop.xlane.xlu0 %1648
    %1650 = vadd.xlane.f32.xlu0 %v1492
    %v1651 = vpop.xlane.xlu0 %1650
    %1652 = vadd.xlane.f32.xlu0 %v1493
    %v1653 = vpop.xlane.xlu0 %1652
    %1654 = vadd.xlane.f32.xlu0 %v1494
    %v1655 = vpop.xlane.xlu0 %1654
    %1656 = vadd.xlane.f32.xlu0 %v1495
    %v1657 = vpop.xlane.xlu0 %1656
    %1658 = vadd.xlane.f32.xlu0 %v1496
    %v1659 = vpop.xlane.xlu0 %1658
    %1660 = vadd.xlane.f32.xlu0 %v1497
    %v1661 = vpop.xlane.xlu0 %1660
    %1662 = vadd.xlane.f32.xlu0 %v1498
    %v1663 = vpop.xlane.xlu0 %1662
    %1664 = vadd.xlane.f32.xlu0 %v1499
    %v1665 = vpop.xlane.xlu0 %1664
    %1666 = vadd.xlane.f32.xlu0 %v1500
    %v1667 = vpop.xlane.xlu0 %1666
    %1668 = vadd.xlane.f32.xlu0 %v1501
    %v1669 = vpop.xlane.xlu0 %1668
    %1670 = vadd.xlane.f32.xlu0 %v1502
    %v1671 = vpop.xlane.xlu0 %1670
    %1672 = vadd.xlane.f32.xlu0 %v1503
    %v1673 = vpop.xlane.xlu0 %1672
    %1674 = vadd.xlane.f32.xlu0 %v1504
    %v1675 = vpop.xlane.xlu0 %1674
    %1676 = vadd.xlane.f32.xlu0 %v1505
    %v1677 = vpop.xlane.xlu0 %1676
    %1678 = vadd.xlane.f32.xlu0 %v1506
    %v1679 = vpop.xlane.xlu0 %1678
    %1680 = vadd.xlane.f32.xlu0 %v1507
    %v1681 = vpop.xlane.xlu0 %1680
    %1682 = vadd.xlane.f32.xlu0 %v1508
    %v1683 = vpop.xlane.xlu0 %1682
    %1684 = vadd.xlane.f32.xlu0 %v1509
    %v1685 = vpop.xlane.xlu0 %1684
    %1686 = vadd.xlane.f32.xlu0 %v1510
    %v1687 = vpop.xlane.xlu0 %1686
    %1688 = vadd.xlane.f32.xlu0 %v1511
    %v1689 = vpop.xlane.xlu0 %1688
    %1690 = vadd.xlane.f32.xlu0 %v1512
    %v1691 = vpop.xlane.xlu0 %1690
    %1692 = vadd.xlane.f32.xlu0 %v1513
    %v1693 = vpop.xlane.xlu0 %1692
    %1694 = vadd.xlane.f32.xlu0 %v1514
    %v1695 = vpop.xlane.xlu0 %1694
    %1696 = vadd.xlane.f32.xlu0 %v1515
    %v1697 = vpop.xlane.xlu0 %1696
    %1698 = vadd.xlane.f32.xlu0 %v1516
    %v1699 = vpop.xlane.xlu0 %1698
    %1700 = vadd.xlane.f32.xlu0 %v1517
    %v1701 = vpop.xlane.xlu0 %1700
    %1702 = vadd.xlane.f32.xlu0 %v1518
    %v1703 = vpop.xlane.xlu0 %1702
    %1704 = vadd.xlane.f32.xlu0 %v1519
    %v1705 = vpop.xlane.xlu0 %1704
    %1706 = vadd.xlane.f32.xlu0 %v1520
    %v1707 = vpop.xlane.xlu0 %1706
    %1708 = vadd.xlane.f32.xlu0 %v1521
    %v1709 = vpop.xlane.xlu0 %1708
    %1710 = vadd.xlane.f32.xlu0 %v1522
    %v1711 = vpop.xlane.xlu0 %1710
    %1712 = vadd.xlane.f32.xlu0 %v1523
    %v1713 = vpop.xlane.xlu0 %1712
    %1714 = vadd.xlane.f32.xlu0 %v1524
    %v1715 = vpop.xlane.xlu0 %1714
    %1716 = vadd.xlane.f32.xlu0 %v1525
    %v1717 = vpop.xlane.xlu0 %1716
    %1718 = vadd.xlane.f32.xlu0 %v1526
    %v1719 = vpop.xlane.xlu0 %1718
    %1720 = vadd.xlane.f32.xlu0 %v1527
    %v1721 = vpop.xlane.xlu0 %1720
    %1722 = vadd.xlane.f32.xlu0 %v1528
    %v1723 = vpop.xlane.xlu0 %1722
    %1724 = vadd.xlane.f32.xlu0 %v1529
    %v1725 = vpop.xlane.xlu0 %1724
    %1726 = vadd.xlane.f32.xlu0 %v1530
    %v1727 = vpop.xlane.xlu0 %1726
    %1728 = vadd.xlane.f32.xlu0 %v1531
    %v1729 = vpop.xlane.xlu0 %1728
    %1730 = vadd.xlane.f32.xlu0 %v1532
    %v1731 = vpop.xlane.xlu0 %1730
    %1732 = vadd.xlane.f32.xlu0 %v1533
    %v1733 = vpop.xlane.xlu0 %1732
    %1734 = vadd.xlane.f32.xlu0 %v1534
    %v1735 = vpop.xlane.xlu0 %1734
    %1736 = vadd.xlane.f32.xlu0 %v1535
    %v1737 = vpop.xlane.xlu0 %1736
    %1738 = vadd.xlane.f32.xlu0 %v1536
    %v1739 = vpop.xlane.xlu0 %1738
    %1740 = vadd.xlane.f32.xlu0 %v1537
    %v1741 = vpop.xlane.xlu0 %1740
    %1742 = vadd.xlane.f32.xlu0 %v1538
    %v1743 = vpop.xlane.xlu0 %1742
    %1744 = vadd.xlane.f32.xlu0 %v1539
    %v1745 = vpop.xlane.xlu0 %1744
    %1746 = vadd.xlane.f32.xlu0 %v1540
    %v1747 = vpop.xlane.xlu0 %1746
    %1748 = vadd.xlane.f32.xlu0 %v1541
    %v1749 = vpop.xlane.xlu0 %1748
    %1750 = vadd.xlane.f32.xlu0 %v1542
    %v1751 = vpop.xlane.xlu0 %1750
    %1752 = vadd.xlane.f32.xlu0 %v1543
    %v1753 = vpop.xlane.xlu0 %1752
    %1754 = vadd.xlane.f32.xlu0 %v1544
    %v1755 = vpop.xlane.xlu0 %1754
    %1756 = vadd.xlane.f32.xlu0 %v1545
    %v1757 = vpop.xlane.xlu0 %1756
    %1758 = vadd.xlane.f32.xlu0 %v1546
    %v1759 = vpop.xlane.xlu0 %1758
    %1760 = vadd.xlane.f32.xlu0 %v1547
    %v1761 = vpop.xlane.xlu0 %1760
    %1762 = vadd.xlane.f32.xlu0 %v1548
    %v1763 = vpop.xlane.xlu0 %1762
    %1764 = vadd.xlane.f32.xlu0 %v1549
    %v1765 = vpop.xlane.xlu0 %1764
    %1766 = vadd.xlane.f32.xlu0 %v1550
    %v1767 = vpop.xlane.xlu0 %1766
    %1768 = vadd.xlane.f32.xlu0 %v1551
    %v1769 = vpop.xlane.xlu0 %1768
    %1770 = vadd.xlane.f32.xlu0 %v1552
    %v1771 = vpop.xlane.xlu0 %1770
    %1772 = vadd.xlane.f32.xlu0 %v1553
    %v1773 = vpop.xlane.xlu0 %1772
    %1774 = vadd.xlane.f32.xlu0 %v1554
    %v1775 = vpop.xlane.xlu0 %1774
    %1776 = vadd.xlane.f32.xlu0 %v1555
    %v1777 = vpop.xlane.xlu0 %1776
    %1778 = vadd.xlane.f32.xlu0 %v1556
    %v1779 = vpop.xlane.xlu0 %1778
    %1780 = vadd.xlane.f32.xlu0 %v1557
    %v1781 = vpop.xlane.xlu0 %1780
    %1782 = vadd.xlane.f32.xlu0 %v1558
    %v1783 = vpop.xlane.xlu0 %1782
    %1784 = vadd.xlane.f32.xlu0 %v1559
    %v1785 = vpop.xlane.xlu0 %1784
    %1786 = vadd.xlane.f32.xlu0 %v1560
    %v1787 = vpop.xlane.xlu0 %1786
    %1788 = vadd.xlane.f32.xlu0 %v1561
    %v1789 = vpop.xlane.xlu0 %1788
    %1790 = vadd.xlane.f32.xlu0 %v1562
    %v1791 = vpop.xlane.xlu0 %1790
    %1792 = vadd.xlane.f32.xlu0 %v1563
    %v1793 = vpop.xlane.xlu0 %1792
    %1794 = vadd.xlane.f32.xlu0 %v1564
    %v1795 = vpop.xlane.xlu0 %1794
    %1796 = vadd.xlane.f32.xlu0 %v1565
    %v1797 = vpop.xlane.xlu0 %1796
    %1798 = vadd.xlane.f32.xlu0 %v1566
    %v1799 = vpop.xlane.xlu0 %1798
    %1800 = vadd.xlane.f32.xlu0 %v1567
    %v1801 = vpop.xlane.xlu0 %1800
    %1802 = vadd.xlane.f32.xlu0 %v1568
    %v1803 = vpop.xlane.xlu0 %1802
    %1804 = vadd.xlane.f32.xlu0 %v1569
    %v1805 = vpop.xlane.xlu0 %1804
    %1806 = vadd.xlane.f32.xlu0 %v1570
    %v1807 = vpop.xlane.xlu0 %1806
    %1808 = vadd.xlane.f32.xlu0 %v1571
    %v1809 = vpop.xlane.xlu0 %1808
    %1810 = vadd.xlane.f32.xlu0 %v1572
    %v1811 = vpop.xlane.xlu0 %1810
    %1812 = vadd.xlane.f32.xlu0 %v1573
    %v1813 = vpop.xlane.xlu0 %1812
    %1814 = vadd.xlane.f32.xlu0 %v1574
    %v1815 = vpop.xlane.xlu0 %1814
    %1816 = vadd.xlane.f32.xlu0 %v1575
    %v1817 = vpop.xlane.xlu0 %1816
    %1818 = vadd.xlane.f32.xlu0 %v1576
    %v1819 = vpop.xlane.xlu0 %1818
    %1820 = vadd.xlane.f32.xlu0 %v1577
    %v1821 = vpop.xlane.xlu0 %1820
    %1822 = vadd.xlane.f32.xlu0 %v1578
    %v1823 = vpop.xlane.xlu0 %1822
    %1824 = vadd.xlane.f32.xlu0 %v1579
    %v1825 = vpop.xlane.xlu0 %1824
    %1826 = vadd.xlane.f32.xlu0 %v1580
    %v1827 = vpop.xlane.xlu0 %1826
    %1828 = vadd.xlane.f32.xlu0 %v1581
    %v1829 = vpop.xlane.xlu0 %1828
    %1830 = vadd.xlane.f32.xlu0 %v1582
    %v1831 = vpop.xlane.xlu0 %1830
    %1832 = vadd.xlane.f32.xlu0 %v1583
    %v1833 = vpop.xlane.xlu0 %1832
    %v1834 = vld [vmem:[#allocation2] sm:$0x1]
    %v1836 = vperm.slane %v1834, 0
    %v1838 = vadd.f32 %v1585, %v1836
    %v1839 = vadd.f32 %v1587, %v1836
    %v1840 = vadd.f32 %v1589, %v1836
    %v1841 = vadd.f32 %v1591, %v1836
    %v1842 = vadd.f32 %v1593, %v1836
    %v1843 = vadd.f32 %v1595, %v1836
    %v1844 = vadd.f32 %v1597, %v1836
    %v1845 = vadd.f32 %v1599, %v1836
    %v1846 = vadd.f32 %v1601, %v1836
    %v1847 = vadd.f32 %v1603, %v1836
    %v1848 = vadd.f32 %v1605, %v1836
    %v1849 = vadd.f32 %v1607, %v1836
    %v1850 = vadd.f32 %v1609, %v1836
    %v1851 = vadd.f32 %v1611, %v1836
    %v1852 = vadd.f32 %v1613, %v1836
    %v1853 = vadd.f32 %v1615, %v1836
    %v1854 = vadd.f32 %v1617, %v1836
    %v1855 = vadd.f32 %v1619, %v1836
    %v1856 = vadd.f32 %v1621, %v1836
    %v1857 = vadd.f32 %v1623, %v1836
    %v1858 = vadd.f32 %v1625, %v1836
    %v1859 = vadd.f32 %v1627, %v1836
    %v1860 = vadd.f32 %v1629, %v1836
    %v1861 = vadd.f32 %v1631, %v1836
    %v1862 = vadd.f32 %v1633, %v1836
    %v1863 = vadd.f32 %v1635, %v1836
    %v1864 = vadd.f32 %v1637, %v1836
    %v1865 = vadd.f32 %v1639, %v1836
    %v1866 = vadd.f32 %v1641, %v1836
    %v1867 = vadd.f32 %v1643, %v1836
    %v1868 = vadd.f32 %v1645, %v1836
    %v1869 = vadd.f32 %v1647, %v1836
    %v1870 = vadd.f32 %v1649, %v1836
    %v1871 = vadd.f32 %v1651, %v1836
    %v1872 = vadd.f32 %v1653, %v1836
    %v1873 = vadd.f32 %v1655, %v1836
    %v1874 = vadd.f32 %v1657, %v1836
    %v1875 = vadd.f32 %v1659, %v1836
    %v1876 = vadd.f32 %v1661, %v1836
    %v1877 = vadd.f32 %v1663, %v1836
    %v1878 = vadd.f32 %v1665, %v1836
    %v1879 = vadd.f32 %v1667, %v1836
    %v1880 = vadd.f32 %v1669, %v1836
    %v1881 = vadd.f32 %v1671, %v1836
    %v1882 = vadd.f32 %v1673, %v1836
    %v1883 = vadd.f32 %v1675, %v1836
    %v1884 = vadd.f32 %v1677, %v1836
    %v1885 = vadd.f32 %v1679, %v1836
    %v1886 = vadd.f32 %v1681, %v1836
    %v1887 = vadd.f32 %v1683, %v1836
    %v1888 = vadd.f32 %v1685, %v1836
    %v1889 = vadd.f32 %v1687, %v1836
    %v1890 = vadd.f32 %v1689, %v1836
    %v1891 = vadd.f32 %v1691, %v1836
    %v1892 = vadd.f32 %v1693, %v1836
    %v1893 = vadd.f32 %v1695, %v1836
    %v1894 = vadd.f32 %v1697, %v1836
    %v1895 = vadd.f32 %v1699, %v1836
    %v1896 = vadd.f32 %v1701, %v1836
    %v1897 = vadd.f32 %v1703, %v1836
    %v1898 = vadd.f32 %v1705, %v1836
    %v1899 = vadd.f32 %v1707, %v1836
    %v1900 = vadd.f32 %v1709, %v1836
    %v1901 = vadd.f32 %v1711, %v1836
    %v1902 = vadd.f32 %v1713, %v1836
    %v1903 = vadd.f32 %v1715, %v1836
    %v1904 = vadd.f32 %v1717, %v1836
    %v1905 = vadd.f32 %v1719, %v1836
    %v1906 = vadd.f32 %v1721, %v1836
    %v1907 = vadd.f32 %v1723, %v1836
    %v1908 = vadd.f32 %v1725, %v1836
    %v1909 = vadd.f32 %v1727, %v1836
    %v1910 = vadd.f32 %v1729, %v1836
    %v1911 = vadd.f32 %v1731, %v1836
    %v1912 = vadd.f32 %v1733, %v1836
    %v1913 = vadd.f32 %v1735, %v1836
    %v1914 = vadd.f32 %v1737, %v1836
    %v1915 = vadd.f32 %v1739, %v1836
    %v1916 = vadd.f32 %v1741, %v1836
    %v1917 = vadd.f32 %v1743, %v1836
    %v1918 = vadd.f32 %v1745, %v1836
    %v1919 = vadd.f32 %v1747, %v1836
    %v1920 = vadd.f32 %v1749, %v1836
    %v1921 = vadd.f32 %v1751, %v1836
    %v1922 = vadd.f32 %v1753, %v1836
    %v1923 = vadd.f32 %v1755, %v1836
    %v1924 = vadd.f32 %v1757, %v1836
    %v1925 = vadd.f32 %v1759, %v1836
    %v1926 = vadd.f32 %v1761, %v1836
    %v1927 = vadd.f32 %v1763, %v1836
    %v1928 = vadd.f32 %v1765, %v1836
    %v1929 = vadd.f32 %v1767, %v1836
    %v1930 = vadd.f32 %v1769, %v1836
    %v1931 = vadd.f32 %v1771, %v1836
    %v1932 = vadd.f32 %v1773, %v1836
    %v1933 = vadd.f32 %v1775, %v1836
    %v1934 = vadd.f32 %v1777, %v1836
    %v1935 = vadd.f32 %v1779, %v1836
    %v1936 = vadd.f32 %v1781, %v1836
    %v1937 = vadd.f32 %v1783, %v1836
    %v1938 = vadd.f32 %v1785, %v1836
    %v1939 = vadd.f32 %v1787, %v1836
    %v1940 = vadd.f32 %v1789, %v1836
    %v1941 = vadd.f32 %v1791, %v1836
    %v1942 = vadd.f32 %v1793, %v1836
    %v1943 = vadd.f32 %v1795, %v1836
    %v1944 = vadd.f32 %v1797, %v1836
    %v1945 = vadd.f32 %v1799, %v1836
    %v1946 = vadd.f32 %v1801, %v1836
    %v1947 = vadd.f32 %v1803, %v1836
    %v1948 = vadd.f32 %v1805, %v1836
    %v1949 = vadd.f32 %v1807, %v1836
    %v1950 = vadd.f32 %v1809, %v1836
    %v1951 = vadd.f32 %v1811, %v1836
    %v1952 = vadd.f32 %v1813, %v1836
    %v1953 = vadd.f32 %v1815, %v1836
    %v1954 = vadd.f32 %v1817, %v1836
    %v1955 = vadd.f32 %v1819, %v1836
    %v1956 = vadd.f32 %v1821, %v1836
    %v1957 = vadd.f32 %v1823, %v1836
    %v1958 = vadd.f32 %v1825, %v1836
    %v1959 = vadd.f32 %v1827, %v1836
    %v1960 = vadd.f32 %v1829, %v1836
    %v1961 = vadd.f32 %v1831, %v1836
    %v1962 = vadd.f32 %v1833, %v1836
    %v2088 = vrot.slane %v1838, 1
    %v2089 = vrot.slane %v1838, 2
    %v2090 = vrot.slane %v1838, 3
    %v2091 = vrot.slane %v1838, 4
    %v2092 = vrot.slane %v1838, 5
    %v2093 = vrot.slane %v1838, 6
    %v2094 = vrot.slane %v1838, 7
    %v2095 = vrot.slane %v1839, 1
    %v2096 = vrot.slane %v1839, 2
    %v2097 = vrot.slane %v1839, 3
    %v2098 = vrot.slane %v1839, 4
    %v2099 = vrot.slane %v1839, 5
    %v2100 = vrot.slane %v1839, 6
    %v2101 = vrot.slane %v1839, 7
    %v2102 = vrot.slane %v1840, 1
    %v2103 = vrot.slane %v1840, 2
    %v2104 = vrot.slane %v1840, 3
    %v2105 = vrot.slane %v1840, 4
    %v2106 = vrot.slane %v1840, 5
    %v2107 = vrot.slane %v1840, 6
    %v2108 = vrot.slane %v1840, 7
    %v2109 = vrot.slane %v1841, 1
    %v2110 = vrot.slane %v1841, 2
    %v2111 = vrot.slane %v1841, 3
    %v2112 = vrot.slane %v1841, 4
    %v2113 = vrot.slane %v1841, 5
    %v2114 = vrot.slane %v1841, 6
    %v2115 = vrot.slane %v1841, 7
    %v2116 = vrot.slane %v1842, 1
    %v2117 = vrot.slane %v1842, 2
    %v2118 = vrot.slane %v1842, 3
    %v2119 = vrot.slane %v1842, 4
    %v2120 = vrot.slane %v1842, 5
    %v2121 = vrot.slane %v1842, 6
    %v2122 = vrot.slane %v1842, 7
    %v2123 = vrot.slane %v1843, 1
    %v2124 = vrot.slane %v1843, 2
    %v2125 = vrot.slane %v1843, 3
    %v2126 = vrot.slane %v1843, 4
    %v2127 = vrot.slane %v1843, 5
    %v2128 = vrot.slane %v1843, 6
    %v2129 = vrot.slane %v1843, 7
    %v2130 = vrot.slane %v1844, 1
    %v2131 = vrot.slane %v1844, 2
    %v2132 = vrot.slane %v1844, 3
    %v2133 = vrot.slane %v1844, 4
    %v2134 = vrot.slane %v1844, 5
    %v2135 = vrot.slane %v1844, 6
    %v2136 = vrot.slane %v1844, 7
    %v2137 = vrot.slane %v1845, 1
    %v2138 = vrot.slane %v1845, 2
    %v2139 = vrot.slane %v1845, 3
    %v2140 = vrot.slane %v1845, 4
    %v2141 = vrot.slane %v1845, 5
    %v2142 = vrot.slane %v1845, 6
    %v2143 = vrot.slane %v1845, 7
    %v2144 = vrot.slane %v1846, 1
    %v2145 = vrot.slane %v1846, 2
    %v2146 = vrot.slane %v1846, 3
    %v2147 = vrot.slane %v1846, 4
    %v2148 = vrot.slane %v1846, 5
    %v2149 = vrot.slane %v1846, 6
    %v2150 = vrot.slane %v1846, 7
    %v2151 = vrot.slane %v1847, 1
    %v2152 = vrot.slane %v1847, 2
    %v2153 = vrot.slane %v1847, 3
    %v2154 = vrot.slane %v1847, 4
    %v2155 = vrot.slane %v1847, 5
    %v2156 = vrot.slane %v1847, 6
    %v2157 = vrot.slane %v1847, 7
    %v2158 = vrot.slane %v1848, 1
    %v2159 = vrot.slane %v1848, 2
    %v2160 = vrot.slane %v1848, 3
    %v2161 = vrot.slane %v1848, 4
    %v2162 = vrot.slane %v1848, 5
    %v2163 = vrot.slane %v1848, 6
    %v2164 = vrot.slane %v1848, 7
    %v2165 = vrot.slane %v1849, 1
    %v2166 = vrot.slane %v1849, 2
    %v2167 = vrot.slane %v1849, 3
    %v2168 = vrot.slane %v1849, 4
    %v2169 = vrot.slane %v1849, 5
    %v2170 = vrot.slane %v1849, 6
    %v2171 = vrot.slane %v1849, 7
    %v2172 = vrot.slane %v1850, 1
    %v2173 = vrot.slane %v1850, 2
    %v2174 = vrot.slane %v1850, 3
    %v2175 = vrot.slane %v1850, 4
    %v2176 = vrot.slane %v1850, 5
    %v2177 = vrot.slane %v1850, 6
    %v2178 = vrot.slane %v1850, 7
    %v2179 = vrot.slane %v1851, 1
    %v2180 = vrot.slane %v1851, 2
    %v2181 = vrot.slane %v1851, 3
    %v2182 = vrot.slane %v1851, 4
    %v2183 = vrot.slane %v1851, 5
    %v2184 = vrot.slane %v1851, 6
    %v2185 = vrot.slane %v1851, 7
    %v2186 = vrot.slane %v1852, 1
    %v2187 = vrot.slane %v1852, 2
    %v2188 = vrot.slane %v1852, 3
    %v2189 = vrot.slane %v1852, 4
    %v2190 = vrot.slane %v1852, 5
    %v2191 = vrot.slane %v1852, 6
    %v2192 = vrot.slane %v1852, 7
    %v2193 = vrot.slane %v1853, 1
    %v2194 = vrot.slane %v1853, 2
    %v2195 = vrot.slane %v1853, 3
    %v2196 = vrot.slane %v1853, 4
    %v2197 = vrot.slane %v1853, 5
    %v2198 = vrot.slane %v1853, 6
    %v2199 = vrot.slane %v1853, 7
    %v2200 = vrot.slane %v1854, 1
    %v2201 = vrot.slane %v1854, 2
    %v2202 = vrot.slane %v1854, 3
    %v2203 = vrot.slane %v1854, 4
    %v2204 = vrot.slane %v1854, 5
    %v2205 = vrot.slane %v1854, 6
    %v2206 = vrot.slane %v1854, 7
    %v2207 = vrot.slane %v1855, 1
    %v2208 = vrot.slane %v1855, 2
    %v2209 = vrot.slane %v1855, 3
    %v2210 = vrot.slane %v1855, 4
    %v2211 = vrot.slane %v1855, 5
    %v2212 = vrot.slane %v1855, 6
    %v2213 = vrot.slane %v1855, 7
    %v2214 = vrot.slane %v1856, 1
    %v2215 = vrot.slane %v1856, 2
    %v2216 = vrot.slane %v1856, 3
    %v2217 = vrot.slane %v1856, 4
    %v2218 = vrot.slane %v1856, 5
    %v2219 = vrot.slane %v1856, 6
    %v2220 = vrot.slane %v1856, 7
    %v2221 = vrot.slane %v1857, 1
    %v2222 = vrot.slane %v1857, 2
    %v2223 = vrot.slane %v1857, 3
    %v2224 = vrot.slane %v1857, 4
    %v2225 = vrot.slane %v1857, 5
    %v2226 = vrot.slane %v1857, 6
    %v2227 = vrot.slane %v1857, 7
    %v2228 = vrot.slane %v1858, 1
    %v2229 = vrot.slane %v1858, 2
    %v2230 = vrot.slane %v1858, 3
    %v2231 = vrot.slane %v1858, 4
    %v2232 = vrot.slane %v1858, 5
    %v2233 = vrot.slane %v1858, 6
    %v2234 = vrot.slane %v1858, 7
    %v2235 = vrot.slane %v1859, 1
    %v2236 = vrot.slane %v1859, 2
    %v2237 = vrot.slane %v1859, 3
    %v2238 = vrot.slane %v1859, 4
    %v2239 = vrot.slane %v1859, 5
    %v2240 = vrot.slane %v1859, 6
    %v2241 = vrot.slane %v1859, 7
    %v2242 = vrot.slane %v1860, 1
    %v2243 = vrot.slane %v1860, 2
    %v2244 = vrot.slane %v1860, 3
    %v2245 = vrot.slane %v1860, 4
    %v2246 = vrot.slane %v1860, 5
    %v2247 = vrot.slane %v1860, 6
    %v2248 = vrot.slane %v1860, 7
    %v2249 = vrot.slane %v1861, 1
    %v2250 = vrot.slane %v1861, 2
    %v2251 = vrot.slane %v1861, 3
    %v2252 = vrot.slane %v1861, 4
    %v2253 = vrot.slane %v1861, 5
    %v2254 = vrot.slane %v1861, 6
    %v2255 = vrot.slane %v1861, 7
    %v2256 = vrot.slane %v1862, 1
    %v2257 = vrot.slane %v1862, 2
    %v2258 = vrot.slane %v1862, 3
    %v2259 = vrot.slane %v1862, 4
    %v2260 = vrot.slane %v1862, 5
    %v2261 = vrot.slane %v1862, 6
    %v2262 = vrot.slane %v1862, 7
    %v2263 = vrot.slane %v1863, 1
    %v2264 = vrot.slane %v1863, 2
    %v2265 = vrot.slane %v1863, 3
    %v2266 = vrot.slane %v1863, 4
    %v2267 = vrot.slane %v1863, 5
    %v2268 = vrot.slane %v1863, 6
    %v2269 = vrot.slane %v1863, 7
    %v2270 = vrot.slane %v1864, 1
    %v2271 = vrot.slane %v1864, 2
    %v2272 = vrot.slane %v1864, 3
    %v2273 = vrot.slane %v1864, 4
    %v2274 = vrot.slane %v1864, 5
    %v2275 = vrot.slane %v1864, 6
    %v2276 = vrot.slane %v1864, 7
    %v2277 = vrot.slane %v1865, 1
    %v2278 = vrot.slane %v1865, 2
    %v2279 = vrot.slane %v1865, 3
    %v2280 = vrot.slane %v1865, 4
    %v2281 = vrot.slane %v1865, 5
    %v2282 = vrot.slane %v1865, 6
    %v2283 = vrot.slane %v1865, 7
    %v2284 = vrot.slane %v1866, 1
    %v2285 = vrot.slane %v1866, 2
    %v2286 = vrot.slane %v1866, 3
    %v2287 = vrot.slane %v1866, 4
    %v2288 = vrot.slane %v1866, 5
    %v2289 = vrot.slane %v1866, 6
    %v2290 = vrot.slane %v1866, 7
    %v2291 = vrot.slane %v1867, 1
    %v2292 = vrot.slane %v1867, 2
    %v2293 = vrot.slane %v1867, 3
    %v2294 = vrot.slane %v1867, 4
    %v2295 = vrot.slane %v1867, 5
    %v2296 = vrot.slane %v1867, 6
    %v2297 = vrot.slane %v1867, 7
    %v2298 = vrot.slane %v1868, 1
    %v2299 = vrot.slane %v1868, 2
    %v2300 = vrot.slane %v1868, 3
    %v2301 = vrot.slane %v1868, 4
    %v2302 = vrot.slane %v1868, 5
    %v2303 = vrot.slane %v1868, 6
    %v2304 = vrot.slane %v1868, 7
    %v2305 = vrot.slane %v1869, 1
    %v2306 = vrot.slane %v1869, 2
    %v2307 = vrot.slane %v1869, 3
    %v2308 = vrot.slane %v1869, 4
    %v2309 = vrot.slane %v1869, 5
    %v2310 = vrot.slane %v1869, 6
    %v2311 = vrot.slane %v1869, 7
    %v2312 = vrot.slane %v1870, 1
    %v2313 = vrot.slane %v1870, 2
    %v2314 = vrot.slane %v1870, 3
    %v2315 = vrot.slane %v1870, 4
    %v2316 = vrot.slane %v1870, 5
    %v2317 = vrot.slane %v1870, 6
    %v2318 = vrot.slane %v1870, 7
    %v2319 = vrot.slane %v1871, 1
    %v2320 = vrot.slane %v1871, 2
    %v2321 = vrot.slane %v1871, 3
    %v2322 = vrot.slane %v1871, 4
    %v2323 = vrot.slane %v1871, 5
    %v2324 = vrot.slane %v1871, 6
    %v2325 = vrot.slane %v1871, 7
    %v2326 = vrot.slane %v1872, 1
    %v2327 = vrot.slane %v1872, 2
    %v2328 = vrot.slane %v1872, 3
    %v2329 = vrot.slane %v1872, 4
    %v2330 = vrot.slane %v1872, 5
    %v2331 = vrot.slane %v1872, 6
    %v2332 = vrot.slane %v1872, 7
    %v2333 = vrot.slane %v1873, 1
    %v2334 = vrot.slane %v1873, 2
    %v2335 = vrot.slane %v1873, 3
    %v2336 = vrot.slane %v1873, 4
    %v2337 = vrot.slane %v1873, 5
    %v2338 = vrot.slane %v1873, 6
    %v2339 = vrot.slane %v1873, 7
    %v2340 = vrot.slane %v1874, 1
    %v2341 = vrot.slane %v1874, 2
    %v2342 = vrot.slane %v1874, 3
    %v2343 = vrot.slane %v1874, 4
    %v2344 = vrot.slane %v1874, 5
    %v2345 = vrot.slane %v1874, 6
    %v2346 = vrot.slane %v1874, 7
    %v2347 = vrot.slane %v1875, 1
    %v2348 = vrot.slane %v1875, 2
    %v2349 = vrot.slane %v1875, 3
    %v2350 = vrot.slane %v1875, 4
    %v2351 = vrot.slane %v1875, 5
    %v2352 = vrot.slane %v1875, 6
    %v2353 = vrot.slane %v1875, 7
    %v2354 = vrot.slane %v1876, 1
    %v2355 = vrot.slane %v1876, 2
    %v2356 = vrot.slane %v1876, 3
    %v2357 = vrot.slane %v1876, 4
    %v2358 = vrot.slane %v1876, 5
    %v2359 = vrot.slane %v1876, 6
    %v2360 = vrot.slane %v1876, 7
    %v2361 = vrot.slane %v1877, 1
    %v2362 = vrot.slane %v1877, 2
    %v2363 = vrot.slane %v1877, 3
    %v2364 = vrot.slane %v1877, 4
    %v2365 = vrot.slane %v1877, 5
    %v2366 = vrot.slane %v1877, 6
    %v2367 = vrot.slane %v1877, 7
    %v2368 = vrot.slane %v1878, 1
    %v2369 = vrot.slane %v1878, 2
    %v2370 = vrot.slane %v1878, 3
    %v2371 = vrot.slane %v1878, 4
    %v2372 = vrot.slane %v1878, 5
    %v2373 = vrot.slane %v1878, 6
    %v2374 = vrot.slane %v1878, 7
    %v2375 = vrot.slane %v1879, 1
    %v2376 = vrot.slane %v1879, 2
    %v2377 = vrot.slane %v1879, 3
    %v2378 = vrot.slane %v1879, 4
    %v2379 = vrot.slane %v1879, 5
    %v2380 = vrot.slane %v1879, 6
    %v2381 = vrot.slane %v1879, 7
    %v2382 = vrot.slane %v1880, 1
    %v2383 = vrot.slane %v1880, 2
    %v2384 = vrot.slane %v1880, 3
    %v2385 = vrot.slane %v1880, 4
    %v2386 = vrot.slane %v1880, 5
    %v2387 = vrot.slane %v1880, 6
    %v2388 = vrot.slane %v1880, 7
    %v2389 = vrot.slane %v1881, 1
    %v2390 = vrot.slane %v1881, 2
    %v2391 = vrot.slane %v1881, 3
    %v2392 = vrot.slane %v1881, 4
    %v2393 = vrot.slane %v1881, 5
    %v2394 = vrot.slane %v1881, 6
    %v2395 = vrot.slane %v1881, 7
    %v2396 = vrot.slane %v1882, 1
    %v2397 = vrot.slane %v1882, 2
    %v2398 = vrot.slane %v1882, 3
    %v2399 = vrot.slane %v1882, 4
    %v2400 = vrot.slane %v1882, 5
    %v2401 = vrot.slane %v1882, 6
    %v2402 = vrot.slane %v1882, 7
    %v2403 = vrot.slane %v1883, 1
    %v2404 = vrot.slane %v1883, 2
    %v2405 = vrot.slane %v1883, 3
    %v2406 = vrot.slane %v1883, 4
    %v2407 = vrot.slane %v1883, 5
    %v2408 = vrot.slane %v1883, 6
    %v2409 = vrot.slane %v1883, 7
    %v2410 = vrot.slane %v1884, 1
    %v2411 = vrot.slane %v1884, 2
    %v2412 = vrot.slane %v1884, 3
    %v2413 = vrot.slane %v1884, 4
    %v2414 = vrot.slane %v1884, 5
    %v2415 = vrot.slane %v1884, 6
    %v2416 = vrot.slane %v1884, 7
    %v2417 = vrot.slane %v1885, 1
    %v2418 = vrot.slane %v1885, 2
    %v2419 = vrot.slane %v1885, 3
    %v2420 = vrot.slane %v1885, 4
    %v2421 = vrot.slane %v1885, 5
    %v2422 = vrot.slane %v1885, 6
    %v2423 = vrot.slane %v1885, 7
    %v2424 = vrot.slane %v1886, 1
    %v2425 = vrot.slane %v1886, 2
    %v2426 = vrot.slane %v1886, 3
    %v2427 = vrot.slane %v1886, 4
    %v2428 = vrot.slane %v1886, 5
    %v2429 = vrot.slane %v1886, 6
    %v2430 = vrot.slane %v1886, 7
    %v2431 = vrot.slane %v1887, 1
    %v2432 = vrot.slane %v1887, 2
    %v2433 = vrot.slane %v1887, 3
    %v2434 = vrot.slane %v1887, 4
    %v2435 = vrot.slane %v1887, 5
    %v2436 = vrot.slane %v1887, 6
    %v2437 = vrot.slane %v1887, 7
    %v2438 = vrot.slane %v1888, 1
    %v2439 = vrot.slane %v1888, 2
    %v2440 = vrot.slane %v1888, 3
    %v2441 = vrot.slane %v1888, 4
    %v2442 = vrot.slane %v1888, 5
    %v2443 = vrot.slane %v1888, 6
    %v2444 = vrot.slane %v1888, 7
    %v2445 = vrot.slane %v1889, 1
    %v2446 = vrot.slane %v1889, 2
    %v2447 = vrot.slane %v1889, 3
    %v2448 = vrot.slane %v1889, 4
    %v2449 = vrot.slane %v1889, 5
    %v2450 = vrot.slane %v1889, 6
    %v2451 = vrot.slane %v1889, 7
    %v2452 = vrot.slane %v1890, 1
    %v2453 = vrot.slane %v1890, 2
    %v2454 = vrot.slane %v1890, 3
    %v2455 = vrot.slane %v1890, 4
    %v2456 = vrot.slane %v1890, 5
    %v2457 = vrot.slane %v1890, 6
    %v2458 = vrot.slane %v1890, 7
    %v2459 = vrot.slane %v1891, 1
    %v2460 = vrot.slane %v1891, 2
    %v2461 = vrot.slane %v1891, 3
    %v2462 = vrot.slane %v1891, 4
    %v2463 = vrot.slane %v1891, 5
    %v2464 = vrot.slane %v1891, 6
    %v2465 = vrot.slane %v1891, 7
    %v2466 = vrot.slane %v1892, 1
    %v2467 = vrot.slane %v1892, 2
    %v2468 = vrot.slane %v1892, 3
    %v2469 = vrot.slane %v1892, 4
    %v2470 = vrot.slane %v1892, 5
    %v2471 = vrot.slane %v1892, 6
    %v2472 = vrot.slane %v1892, 7
    %v2473 = vrot.slane %v1893, 1
    %v2474 = vrot.slane %v1893, 2
    %v2475 = vrot.slane %v1893, 3
    %v2476 = vrot.slane %v1893, 4
    %v2477 = vrot.slane %v1893, 5
    %v2478 = vrot.slane %v1893, 6
    %v2479 = vrot.slane %v1893, 7
    %v2480 = vrot.slane %v1894, 1
    %v2481 = vrot.slane %v1894, 2
    %v2482 = vrot.slane %v1894, 3
    %v2483 = vrot.slane %v1894, 4
    %v2484 = vrot.slane %v1894, 5
    %v2485 = vrot.slane %v1894, 6
    %v2486 = vrot.slane %v1894, 7
    %v2487 = vrot.slane %v1895, 1
    %v2488 = vrot.slane %v1895, 2
    %v2489 = vrot.slane %v1895, 3
    %v2490 = vrot.slane %v1895, 4
    %v2491 = vrot.slane %v1895, 5
    %v2492 = vrot.slane %v1895, 6
    %v2493 = vrot.slane %v1895, 7
    %v2494 = vrot.slane %v1896, 1
    %v2495 = vrot.slane %v1896, 2
    %v2496 = vrot.slane %v1896, 3
    %v2497 = vrot.slane %v1896, 4
    %v2498 = vrot.slane %v1896, 5
    %v2499 = vrot.slane %v1896, 6
    %v2500 = vrot.slane %v1896, 7
    %v2501 = vrot.slane %v1897, 1
    %v2502 = vrot.slane %v1897, 2
    %v2503 = vrot.slane %v1897, 3
    %v2504 = vrot.slane %v1897, 4
    %v2505 = vrot.slane %v1897, 5
    %v2506 = vrot.slane %v1897, 6
    %v2507 = vrot.slane %v1897, 7
    %v2508 = vrot.slane %v1898, 1
    %v2509 = vrot.slane %v1898, 2
    %v2510 = vrot.slane %v1898, 3
    %v2511 = vrot.slane %v1898, 4
    %v2512 = vrot.slane %v1898, 5
    %v2513 = vrot.slane %v1898, 6
    %v2514 = vrot.slane %v1898, 7
    %v2515 = vrot.slane %v1899, 1
    %v2516 = vrot.slane %v1899, 2
    %v2517 = vrot.slane %v1899, 3
    %v2518 = vrot.slane %v1899, 4
    %v2519 = vrot.slane %v1899, 5
    %v2520 = vrot.slane %v1899, 6
    %v2521 = vrot.slane %v1899, 7
    %v2522 = vrot.slane %v1900, 1
    %v2523 = vrot.slane %v1900, 2
    %v2524 = vrot.slane %v1900, 3
    %v2525 = vrot.slane %v1900, 4
    %v2526 = vrot.slane %v1900, 5
    %v2527 = vrot.slane %v1900, 6
    %v2528 = vrot.slane %v1900, 7
    %v2529 = vrot.slane %v1901, 1
    %v2530 = vrot.slane %v1901, 2
    %v2531 = vrot.slane %v1901, 3
    %v2532 = vrot.slane %v1901, 4
    %v2533 = vrot.slane %v1901, 5
    %v2534 = vrot.slane %v1901, 6
    %v2535 = vrot.slane %v1901, 7
    %v2536 = vrot.slane %v1902, 1
    %v2537 = vrot.slane %v1902, 2
    %v2538 = vrot.slane %v1902, 3
    %v2539 = vrot.slane %v1902, 4
    %v2540 = vrot.slane %v1902, 5
    %v2541 = vrot.slane %v1902, 6
    %v2542 = vrot.slane %v1902, 7
    %v2543 = vrot.slane %v1903, 1
    %v2544 = vrot.slane %v1903, 2
    %v2545 = vrot.slane %v1903, 3
    %v2546 = vrot.slane %v1903, 4
    %v2547 = vrot.slane %v1903, 5
    %v2548 = vrot.slane %v1903, 6
    %v2549 = vrot.slane %v1903, 7
    %v2550 = vrot.slane %v1904, 1
    %v2551 = vrot.slane %v1904, 2
    %v2552 = vrot.slane %v1904, 3
    %v2553 = vrot.slane %v1904, 4
    %v2554 = vrot.slane %v1904, 5
    %v2555 = vrot.slane %v1904, 6
    %v2556 = vrot.slane %v1904, 7
    %v2557 = vrot.slane %v1905, 1
    %v2558 = vrot.slane %v1905, 2
    %v2559 = vrot.slane %v1905, 3
    %v2560 = vrot.slane %v1905, 4
    %v2561 = vrot.slane %v1905, 5
    %v2562 = vrot.slane %v1905, 6
    %v2563 = vrot.slane %v1905, 7
    %v2564 = vrot.slane %v1906, 1
    %v2565 = vrot.slane %v1906, 2
    %v2566 = vrot.slane %v1906, 3
    %v2567 = vrot.slane %v1906, 4
    %v2568 = vrot.slane %v1906, 5
    %v2569 = vrot.slane %v1906, 6
    %v2570 = vrot.slane %v1906, 7
    %v2571 = vrot.slane %v1907, 1
    %v2572 = vrot.slane %v1907, 2
    %v2573 = vrot.slane %v1907, 3
    %v2574 = vrot.slane %v1907, 4
    %v2575 = vrot.slane %v1907, 5
    %v2576 = vrot.slane %v1907, 6
    %v2577 = vrot.slane %v1907, 7
    %v2578 = vrot.slane %v1908, 1
    %v2579 = vrot.slane %v1908, 2
    %v2580 = vrot.slane %v1908, 3
    %v2581 = vrot.slane %v1908, 4
    %v2582 = vrot.slane %v1908, 5
    %v2583 = vrot.slane %v1908, 6
    %v2584 = vrot.slane %v1908, 7
    %v2585 = vrot.slane %v1909, 1
    %v2586 = vrot.slane %v1909, 2
    %v2587 = vrot.slane %v1909, 3
    %v2588 = vrot.slane %v1909, 4
    %v2589 = vrot.slane %v1909, 5
    %v2590 = vrot.slane %v1909, 6
    %v2591 = vrot.slane %v1909, 7
    %v2592 = vrot.slane %v1910, 1
    %v2593 = vrot.slane %v1910, 2
    %v2594 = vrot.slane %v1910, 3
    %v2595 = vrot.slane %v1910, 4
    %v2596 = vrot.slane %v1910, 5
    %v2597 = vrot.slane %v1910, 6
    %v2598 = vrot.slane %v1910, 7
    %v2599 = vrot.slane %v1911, 1
    %v2600 = vrot.slane %v1911, 2
    %v2601 = vrot.slane %v1911, 3
    %v2602 = vrot.slane %v1911, 4
    %v2603 = vrot.slane %v1911, 5
    %v2604 = vrot.slane %v1911, 6
    %v2605 = vrot.slane %v1911, 7
    %v2606 = vrot.slane %v1912, 1
    %v2607 = vrot.slane %v1912, 2
    %v2608 = vrot.slane %v1912, 3
    %v2609 = vrot.slane %v1912, 4
    %v2610 = vrot.slane %v1912, 5
    %v2611 = vrot.slane %v1912, 6
    %v2612 = vrot.slane %v1912, 7
    %v2613 = vrot.slane %v1913, 1
    %v2614 = vrot.slane %v1913, 2
    %v2615 = vrot.slane %v1913, 3
    %v2616 = vrot.slane %v1913, 4
    %v2617 = vrot.slane %v1913, 5
    %v2618 = vrot.slane %v1913, 6
    %v2619 = vrot.slane %v1913, 7
    %v2620 = vrot.slane %v1914, 1
    %v2621 = vrot.slane %v1914, 2
    %v2622 = vrot.slane %v1914, 3
    %v2623 = vrot.slane %v1914, 4
    %v2624 = vrot.slane %v1914, 5
    %v2625 = vrot.slane %v1914, 6
    %v2626 = vrot.slane %v1914, 7
    %v2627 = vrot.slane %v1915, 1
    %v2628 = vrot.slane %v1915, 2
    %v2629 = vrot.slane %v1915, 3
    %v2630 = vrot.slane %v1915, 4
    %v2631 = vrot.slane %v1915, 5
    %v2632 = vrot.slane %v1915, 6
    %v2633 = vrot.slane %v1915, 7
    %v2634 = vrot.slane %v1916, 1
    %v2635 = vrot.slane %v1916, 2
    %v2636 = vrot.slane %v1916, 3
    %v2637 = vrot.slane %v1916, 4
    %v2638 = vrot.slane %v1916, 5
    %v2639 = vrot.slane %v1916, 6
    %v2640 = vrot.slane %v1916, 7
    %v2641 = vrot.slane %v1917, 1
    %v2642 = vrot.slane %v1917, 2
    %v2643 = vrot.slane %v1917, 3
    %v2644 = vrot.slane %v1917, 4
    %v2645 = vrot.slane %v1917, 5
    %v2646 = vrot.slane %v1917, 6
    %v2647 = vrot.slane %v1917, 7
    %v2648 = vrot.slane %v1918, 1
    %v2649 = vrot.slane %v1918, 2
    %v2650 = vrot.slane %v1918, 3
    %v2651 = vrot.slane %v1918, 4
    %v2652 = vrot.slane %v1918, 5
    %v2653 = vrot.slane %v1918, 6
    %v2654 = vrot.slane %v1918, 7
    %v2655 = vrot.slane %v1919, 1
    %v2656 = vrot.slane %v1919, 2
    %v2657 = vrot.slane %v1919, 3
    %v2658 = vrot.slane %v1919, 4
    %v2659 = vrot.slane %v1919, 5
    %v2660 = vrot.slane %v1919, 6
    %v2661 = vrot.slane %v1919, 7
    %v2662 = vrot.slane %v1920, 1
    %v2663 = vrot.slane %v1920, 2
    %v2664 = vrot.slane %v1920, 3
    %v2665 = vrot.slane %v1920, 4
    %v2666 = vrot.slane %v1920, 5
    %v2667 = vrot.slane %v1920, 6
    %v2668 = vrot.slane %v1920, 7
    %v2669 = vrot.slane %v1921, 1
    %v2670 = vrot.slane %v1921, 2
    %v2671 = vrot.slane %v1921, 3
    %v2672 = vrot.slane %v1921, 4
    %v2673 = vrot.slane %v1921, 5
    %v2674 = vrot.slane %v1921, 6
    %v2675 = vrot.slane %v1921, 7
    %v2676 = vrot.slane %v1922, 1
    %v2677 = vrot.slane %v1922, 2
    %v2678 = vrot.slane %v1922, 3
    %v2679 = vrot.slane %v1922, 4
    %v2680 = vrot.slane %v1922, 5
    %v2681 = vrot.slane %v1922, 6
    %v2682 = vrot.slane %v1922, 7
    %v2683 = vrot.slane %v1923, 1
    %v2684 = vrot.slane %v1923, 2
    %v2685 = vrot.slane %v1923, 3
    %v2686 = vrot.slane %v1923, 4
    %v2687 = vrot.slane %v1923, 5
    %v2688 = vrot.slane %v1923, 6
    %v2689 = vrot.slane %v1923, 7
    %v2690 = vrot.slane %v1924, 1
    %v2691 = vrot.slane %v1924, 2
    %v2692 = vrot.slane %v1924, 3
    %v2693 = vrot.slane %v1924, 4
    %v2694 = vrot.slane %v1924, 5
    %v2695 = vrot.slane %v1924, 6
    %v2696 = vrot.slane %v1924, 7
    %v2697 = vrot.slane %v1925, 1
    %v2698 = vrot.slane %v1925, 2
    %v2699 = vrot.slane %v1925, 3
    %v2700 = vrot.slane %v1925, 4
    %v2701 = vrot.slane %v1925, 5
    %v2702 = vrot.slane %v1925, 6
    %v2703 = vrot.slane %v1925, 7
    %v2704 = vrot.slane %v1926, 1
    %v2705 = vrot.slane %v1926, 2
    %v2706 = vrot.slane %v1926, 3
    %v2707 = vrot.slane %v1926, 4
    %v2708 = vrot.slane %v1926, 5
    %v2709 = vrot.slane %v1926, 6
    %v2710 = vrot.slane %v1926, 7
    %v2711 = vrot.slane %v1927, 1
    %v2712 = vrot.slane %v1927, 2
    %v2713 = vrot.slane %v1927, 3
    %v2714 = vrot.slane %v1927, 4
    %v2715 = vrot.slane %v1927, 5
    %v2716 = vrot.slane %v1927, 6
    %v2717 = vrot.slane %v1927, 7
    %v2718 = vrot.slane %v1928, 1
    %v2719 = vrot.slane %v1928, 2
    %v2720 = vrot.slane %v1928, 3
    %v2721 = vrot.slane %v1928, 4
    %v2722 = vrot.slane %v1928, 5
    %v2723 = vrot.slane %v1928, 6
    %v2724 = vrot.slane %v1928, 7
    %v2725 = vrot.slane %v1929, 1
    %v2726 = vrot.slane %v1929, 2
    %v2727 = vrot.slane %v1929, 3
    %v2728 = vrot.slane %v1929, 4
    %v2729 = vrot.slane %v1929, 5
    %v2730 = vrot.slane %v1929, 6
    %v2731 = vrot.slane %v1929, 7
    %v2732 = vrot.slane %v1930, 1
    %v2733 = vrot.slane %v1930, 2
    %v2734 = vrot.slane %v1930, 3
    %v2735 = vrot.slane %v1930, 4
    %v2736 = vrot.slane %v1930, 5
    %v2737 = vrot.slane %v1930, 6
    %v2738 = vrot.slane %v1930, 7
    %v2739 = vrot.slane %v1931, 1
    %v2740 = vrot.slane %v1931, 2
    %v2741 = vrot.slane %v1931, 3
    %v2742 = vrot.slane %v1931, 4
    %v2743 = vrot.slane %v1931, 5
    %v2744 = vrot.slane %v1931, 6
    %v2745 = vrot.slane %v1931, 7
    %v2746 = vrot.slane %v1932, 1
    %v2747 = vrot.slane %v1932, 2
    %v2748 = vrot.slane %v1932, 3
    %v2749 = vrot.slane %v1932, 4
    %v2750 = vrot.slane %v1932, 5
    %v2751 = vrot.slane %v1932, 6
    %v2752 = vrot.slane %v1932, 7
    %v2753 = vrot.slane %v1933, 1
    %v2754 = vrot.slane %v1933, 2
    %v2755 = vrot.slane %v1933, 3
    %v2756 = vrot.slane %v1933, 4
    %v2757 = vrot.slane %v1933, 5
    %v2758 = vrot.slane %v1933, 6
    %v2759 = vrot.slane %v1933, 7
    %v2760 = vrot.slane %v1934, 1
    %v2761 = vrot.slane %v1934, 2
    %v2762 = vrot.slane %v1934, 3
    %v2763 = vrot.slane %v1934, 4
    %v2764 = vrot.slane %v1934, 5
    %v2765 = vrot.slane %v1934, 6
    %v2766 = vrot.slane %v1934, 7
    %v2767 = vrot.slane %v1935, 1
    %v2768 = vrot.slane %v1935, 2
    %v2769 = vrot.slane %v1935, 3
    %v2770 = vrot.slane %v1935, 4
    %v2771 = vrot.slane %v1935, 5
    %v2772 = vrot.slane %v1935, 6
    %v2773 = vrot.slane %v1935, 7
    %v2774 = vrot.slane %v1936, 1
    %v2775 = vrot.slane %v1936, 2
    %v2776 = vrot.slane %v1936, 3
    %v2777 = vrot.slane %v1936, 4
    %v2778 = vrot.slane %v1936, 5
    %v2779 = vrot.slane %v1936, 6
    %v2780 = vrot.slane %v1936, 7
    %v2781 = vrot.slane %v1937, 1
    %v2782 = vrot.slane %v1937, 2
    %v2783 = vrot.slane %v1937, 3
    %v2784 = vrot.slane %v1937, 4
    %v2785 = vrot.slane %v1937, 5
    %v2786 = vrot.slane %v1937, 6
    %v2787 = vrot.slane %v1937, 7
    %v2788 = vrot.slane %v1938, 1
    %v2789 = vrot.slane %v1938, 2
    %v2790 = vrot.slane %v1938, 3
    %v2791 = vrot.slane %v1938, 4
    %v2792 = vrot.slane %v1938, 5
    %v2793 = vrot.slane %v1938, 6
    %v2794 = vrot.slane %v1938, 7
    %v2795 = vrot.slane %v1939, 1
    %v2796 = vrot.slane %v1939, 2
    %v2797 = vrot.slane %v1939, 3
    %v2798 = vrot.slane %v1939, 4
    %v2799 = vrot.slane %v1939, 5
    %v2800 = vrot.slane %v1939, 6
    %v2801 = vrot.slane %v1939, 7
    %v2802 = vrot.slane %v1940, 1
    %v2803 = vrot.slane %v1940, 2
    %v2804 = vrot.slane %v1940, 3
    %v2805 = vrot.slane %v1940, 4
    %v2806 = vrot.slane %v1940, 5
    %v2807 = vrot.slane %v1940, 6
    %v2808 = vrot.slane %v1940, 7
    %v2809 = vrot.slane %v1941, 1
    %v2810 = vrot.slane %v1941, 2
    %v2811 = vrot.slane %v1941, 3
    %v2812 = vrot.slane %v1941, 4
    %v2813 = vrot.slane %v1941, 5
    %v2814 = vrot.slane %v1941, 6
    %v2815 = vrot.slane %v1941, 7
    %v2816 = vrot.slane %v1942, 1
    %v2817 = vrot.slane %v1942, 2
    %v2818 = vrot.slane %v1942, 3
    %v2819 = vrot.slane %v1942, 4
    %v2820 = vrot.slane %v1942, 5
    %v2821 = vrot.slane %v1942, 6
    %v2822 = vrot.slane %v1942, 7
    %v2823 = vrot.slane %v1943, 1
    %v2824 = vrot.slane %v1943, 2
    %v2825 = vrot.slane %v1943, 3
    %v2826 = vrot.slane %v1943, 4
    %v2827 = vrot.slane %v1943, 5
    %v2828 = vrot.slane %v1943, 6
    %v2829 = vrot.slane %v1943, 7
    %v2830 = vrot.slane %v1944, 1
    %v2831 = vrot.slane %v1944, 2
    %v2832 = vrot.slane %v1944, 3
    %v2833 = vrot.slane %v1944, 4
    %v2834 = vrot.slane %v1944, 5
    %v2835 = vrot.slane %v1944, 6
    %v2836 = vrot.slane %v1944, 7
    %v2837 = vrot.slane %v1945, 1
    %v2838 = vrot.slane %v1945, 2
    %v2839 = vrot.slane %v1945, 3
    %v2840 = vrot.slane %v1945, 4
    %v2841 = vrot.slane %v1945, 5
    %v2842 = vrot.slane %v1945, 6
    %v2843 = vrot.slane %v1945, 7
    %v2844 = vrot.slane %v1946, 1
    %v2845 = vrot.slane %v1946, 2
    %v2846 = vrot.slane %v1946, 3
    %v2847 = vrot.slane %v1946, 4
    %v2848 = vrot.slane %v1946, 5
    %v2849 = vrot.slane %v1946, 6
    %v2850 = vrot.slane %v1946, 7
    %v2851 = vrot.slane %v1947, 1
    %v2852 = vrot.slane %v1947, 2
    %v2853 = vrot.slane %v1947, 3
    %v2854 = vrot.slane %v1947, 4
    %v2855 = vrot.slane %v1947, 5
    %v2856 = vrot.slane %v1947, 6
    %v2857 = vrot.slane %v1947, 7
    %v2858 = vrot.slane %v1948, 1
    %v2859 = vrot.slane %v1948, 2
    %v2860 = vrot.slane %v1948, 3
    %v2861 = vrot.slane %v1948, 4
    %v2862 = vrot.slane %v1948, 5
    %v2863 = vrot.slane %v1948, 6
    %v2864 = vrot.slane %v1948, 7
    %v2865 = vrot.slane %v1949, 1
    %v2866 = vrot.slane %v1949, 2
    %v2867 = vrot.slane %v1949, 3
    %v2868 = vrot.slane %v1949, 4
    %v2869 = vrot.slane %v1949, 5
    %v2870 = vrot.slane %v1949, 6
    %v2871 = vrot.slane %v1949, 7
    %v2872 = vrot.slane %v1950, 1
    %v2873 = vrot.slane %v1950, 2
    %v2874 = vrot.slane %v1950, 3
    %v2875 = vrot.slane %v1950, 4
    %v2876 = vrot.slane %v1950, 5
    %v2877 = vrot.slane %v1950, 6
    %v2878 = vrot.slane %v1950, 7
    %v2879 = vrot.slane %v1951, 1
    %v2880 = vrot.slane %v1951, 2
    %v2881 = vrot.slane %v1951, 3
    %v2882 = vrot.slane %v1951, 4
    %v2883 = vrot.slane %v1951, 5
    %v2884 = vrot.slane %v1951, 6
    %v2885 = vrot.slane %v1951, 7
    %v2886 = vrot.slane %v1952, 1
    %v2887 = vrot.slane %v1952, 2
    %v2888 = vrot.slane %v1952, 3
    %v2889 = vrot.slane %v1952, 4
    %v2890 = vrot.slane %v1952, 5
    %v2891 = vrot.slane %v1952, 6
    %v2892 = vrot.slane %v1952, 7
    %v2893 = vrot.slane %v1953, 1
    %v2894 = vrot.slane %v1953, 2
    %v2895 = vrot.slane %v1953, 3
    %v2896 = vrot.slane %v1953, 4
    %v2897 = vrot.slane %v1953, 5
    %v2898 = vrot.slane %v1953, 6
    %v2899 = vrot.slane %v1953, 7
    %v2900 = vrot.slane %v1954, 1
    %v2901 = vrot.slane %v1954, 2
    %v2902 = vrot.slane %v1954, 3
    %v2903 = vrot.slane %v1954, 4
    %v2904 = vrot.slane %v1954, 5
    %v2905 = vrot.slane %v1954, 6
    %v2906 = vrot.slane %v1954, 7
    %v2907 = vrot.slane %v1955, 1
    %v2908 = vrot.slane %v1955, 2
    %v2909 = vrot.slane %v1955, 3
    %v2910 = vrot.slane %v1955, 4
    %v2911 = vrot.slane %v1955, 5
    %v2912 = vrot.slane %v1955, 6
    %v2913 = vrot.slane %v1955, 7
    %v2914 = vrot.slane %v1956, 1
    %v2915 = vrot.slane %v1956, 2
    %v2916 = vrot.slane %v1956, 3
    %v2917 = vrot.slane %v1956, 4
    %v2918 = vrot.slane %v1956, 5
    %v2919 = vrot.slane %v1956, 6
    %v2920 = vrot.slane %v1956, 7
    %v2921 = vrot.slane %v1957, 1
    %v2922 = vrot.slane %v1957, 2
    %v2923 = vrot.slane %v1957, 3
    %v2924 = vrot.slane %v1957, 4
    %v2925 = vrot.slane %v1957, 5
    %v2926 = vrot.slane %v1957, 6
    %v2927 = vrot.slane %v1957, 7
    %v2928 = vrot.slane %v1958, 1
    %v2929 = vrot.slane %v1958, 2
    %v2930 = vrot.slane %v1958, 3
    %v2931 = vrot.slane %v1958, 4
    %v2932 = vrot.slane %v1958, 5
    %v2933 = vrot.slane %v1958, 6
    %v2934 = vrot.slane %v1958, 7
    %v2935 = vrot.slane %v1959, 1
    %v2936 = vrot.slane %v1959, 2
    %v2937 = vrot.slane %v1959, 3
    %v2938 = vrot.slane %v1959, 4
    %v2939 = vrot.slane %v1959, 5
    %v2940 = vrot.slane %v1959, 6
    %v2941 = vrot.slane %v1959, 7
    %v2942 = vrot.slane %v1960, 1
    %v2943 = vrot.slane %v1960, 2
    %v2944 = vrot.slane %v1960, 3
    %v2945 = vrot.slane %v1960, 4
    %v2946 = vrot.slane %v1960, 5
    %v2947 = vrot.slane %v1960, 6
    %v2948 = vrot.slane %v1960, 7
    %v2949 = vrot.slane %v1961, 1
    %v2950 = vrot.slane %v1961, 2
    %v2951 = vrot.slane %v1961, 3
    %v2952 = vrot.slane %v1961, 4
    %v2953 = vrot.slane %v1961, 5
    %v2954 = vrot.slane %v1961, 6
    %v2955 = vrot.slane %v1961, 7
    %v2956 = vrot.slane %v1962, 1
    %v2957 = vrot.slane %v1962, 2
    %v2958 = vrot.slane %v1962, 3
    %v2959 = vrot.slane %v1962, 4
    %v2960 = vrot.slane %v1962, 5
    %v2961 = vrot.slane %v1962, 6
    %v2962 = vrot.slane %v1962, 7
    %2963 = vst [vmem:[#allocation1] ss:$9 sm:$0xff] %v1838
    %s2964 = scalar_lea.vmem [#allocation1], 1
    %2965 = vst [vmem:[%s2964] ss:$9 sm:$0xff] %v2088
    %s2966 = scalar_lea.vmem [#allocation1], 2
    %2967 = vst [vmem:[%s2966] ss:$9 sm:$0xff] %v2089
    %s2968 = scalar_lea.vmem [#allocation1], 3
    %2969 = vst [vmem:[%s2968] ss:$9 sm:$0xff] %v2090
    %s2970 = scalar_lea.vmem [#allocation1], 4
    %2971 = vst [vmem:[%s2970] ss:$9 sm:$0xff] %v2091
    %s2972 = scalar_lea.vmem [#allocation1], 5
    %2973 = vst [vmem:[%s2972] ss:$9 sm:$0xff] %v2092
    %s2974 = scalar_lea.vmem [#allocation1], 6
    %2975 = vst [vmem:[%s2974] ss:$9 sm:$0xff] %v2093
    %s2976 = scalar_lea.vmem [#allocation1], 7
    %2977 = vst [vmem:[%s2976] ss:$9 sm:$0xff] %v2094
    %v2978 = vld [vmem:[#allocation1] sm:$0xff]
    %2979 = vst [vmem:[#allocation1] ss:$9 sm:$0xff] %v1839
    %2980 = vst [vmem:[%s2964] ss:$9 sm:$0xff] %v2095
    %2981 = vst [vmem:[%s2966] ss:$9 sm:$0xff] %v2096
    %2982 = vst [vmem:[%s2968] ss:$9 sm:$0xff] %v2097
    %2983 = vst [vmem:[%s2970] ss:$9 sm:$0xff] %v2098
    %2984 = vst [vmem:[%s2972] ss:$9 sm:$0xff] %v2099
    %2985 = vst [vmem:[%s2974] ss:$9 sm:$0xff] %v2100
    %2986 = vst [vmem:[%s2976] ss:$9 sm:$0xff] %v2101
    %v2987 = vld [vmem:[#allocation1] sm:$0xff]
    %2988 = vst [vmem:[#allocation1] ss:$9 sm:$0xff] %v1840
    %2989 = vst [vmem:[%s2964] ss:$9 sm:$0xff] %v2102
    %2990 = vst [vmem:[%s2966] ss:$9 sm:$0xff] %v2103
    %2991 = vst [vmem:[%s2968] ss:$9 sm:$0xff] %v2104
    %2992 = vst [vmem:[%s2970] ss:$9 sm:$0xff] %v2105
    %2993 = vst [vmem:[%s2972] ss:$9 sm:$0xff] %v2106
    %2994 = vst [vmem:[%s2974] ss:$9 sm:$0xff] %v2107
    %2995 = vst [vmem:[%s2976] ss:$9 sm:$0xff] %v2108
    %v2996 = vld [vmem:[#allocation1] sm:$0xff]
    %2997 = vst [vmem:[#allocation1] ss:$9 sm:$0xff] %v1841
    %2998 = vst [vmem:[%s2964] ss:$9 sm:$0xff] %v2109
    %2999 = vst [vmem:[%s2966] ss:$9 sm:$0xff] %v2110
    %3000 = vst [vmem:[%s2968] ss:$9 sm:$0xff] %v2111
    %3001 = vst [vmem:[%s2970] ss:$9 sm:$0xff] %v2112
    %3002 = vst [vmem:[%s2972] ss:$9 sm:$0xff] %v2113
    %3003 = vst [vmem:[%s2974] ss:$9 sm:$0xff] %v2114
    %3004 = vst [vmem:[%s2976] ss:$9 sm:$0xff] %v2115
    %v3005 = vld [vmem:[#allocation1] sm:$0xff]
    %3006 = vst [vmem:[#allocation1] ss:$9 sm:$0xff] %v1842
    %3007 = vst [vmem:[%s2964] ss:$9 sm:$0xff] %v2116
    %3008 = vst [vmem:[%s2966] ss:$9 sm:$0xff] %v2117
    %3009 = vst [vmem:[%s2968] ss:$9 sm:$0xff] %v2118
    %3010 = vst [vmem:[%s2970] ss:$9 sm:$0xff] %v2119
    %3011 = vst [vmem:[%s2972] ss:$9 sm:$0xff] %v2120
    %3012 = vst [vmem:[%s2974] ss:$9 sm:$0xff] %v2121
    %3013 = vst [vmem:[%s2976] ss:$9 sm:$0xff] %v2122
    %v3014 = vld [vmem:[#allocation1] sm:$0xff]
    %3015 = vst [vmem:[#allocation1] ss:$9 sm:$0xff] %v1843
    %3016 = vst [vmem:[%s2964] ss:$9 sm:$0xff] %v2123
    %3017 = vst [vmem:[%s2966] ss:$9 sm:$0xff] %v2124
    %3018 = vst [vmem:[%s2968] ss:$9 sm:$0xff] %v2125
    %3019 = vst [vmem:[%s2970] ss:$9 sm:$0xff] %v2126
    %3020 = vst [vmem:[%s2972] ss:$9 sm:$0xff] %v2127
    %3021 = vst [vmem:[%s2974] ss:$9 sm:$0xff] %v2128
    %3022 = vst [vmem:[%s2976] ss:$9 sm:$0xff] %v2129
    %v3023 = vld [vmem:[#allocation1] sm:$0xff]
    %3024 = vst [vmem:[#allocation1] ss:$9 sm:$0xff] %v1844
    %3025 = vst [vmem:[%s2964] ss:$9 sm:$0xff] %v2130
    %3026 = vst [vmem:[%s2966] ss:$9 sm:$0xff] %v2131
    %3027 = vst [vmem:[%s2968] ss:$9 sm:$0xff] %v2132
    %3028 = vst [vmem:[%s2970] ss:$9 sm:$0xff] %v2133
    %3029 = vst [vmem:[%s2972] ss:$9 sm:$0xff] %v2134
    %3030 = vst [vmem:[%s2974] ss:$9 sm:$0xff] %v2135
    %3031 = vst [vmem:[%s2976] ss:$9 sm:$0xff] %v2136
    %v3032 = vld [vmem:[#allocation1] sm:$0xff]
    %3033 = vst [vmem:[#allocation1] ss:$9 sm:$0xff] %v1845
    %3034 = vst [vmem:[%s2964] ss:$9 sm:$0xff] %v2137
    %3035 = vst [vmem:[%s2966] ss:$9 sm:$0xff] %v2138
    %3036 = vst [vmem:[%s2968] ss:$9 sm:$0xff] %v2139
    %3037 = vst [vmem:[%s2970] ss:$9 sm:$0xff] %v2140
    %3038 = vst [vmem:[%s2972] ss:$9 sm:$0xff] %v2141
    %3039 = vst [vmem:[%s2974] ss:$9 sm:$0xff] %v2142
    %3040 = vst [vmem:[%s2976] ss:$9 sm:$0xff] %v2143
    %v3041 = vld [vmem:[#allocation1] sm:$0xff]
    %3042 = vst [vmem:[#allocation1] ss:$9 sm:$0xff] %v1846
    %3043 = vst [vmem:[%s2964] ss:$9 sm:$0xff] %v2144
    %3044 = vst [vmem:[%s2966] ss:$9 sm:$0xff] %v2145
    %3045 = vst [vmem:[%s2968] ss:$9 sm:$0xff] %v2146
    %3046 = vst [vmem:[%s2970] ss:$9 sm:$0xff] %v2147
    %3047 = vst [vmem:[%s2972] ss:$9 sm:$0xff] %v2148
    %3048 = vst [vmem:[%s2974] ss:$9 sm:$0xff] %v2149
    %3049 = vst [vmem:[%s2976] ss:$9 sm:$0xff] %v2150
    %v3050 = vld [vmem:[#allocation1] sm:$0xff]
    %3051 = vst [vmem:[#allocation1] ss:$9 sm:$0xff] %v1847
    %3052 = vst [vmem:[%s2964] ss:$9 sm:$0xff] %v2151
    %3053 = vst [vmem:[%s2966] ss:$9 sm:$0xff] %v2152
    %3054 = vst [vmem:[%s2968] ss:$9 sm:$0xff] %v2153
    %3055 = vst [vmem:[%s2970] ss:$9 sm:$0xff] %v2154
    %3056 = vst [vmem:[%s2972] ss:$9 sm:$0xff] %v2155
    %3057 = vst [vmem:[%s2974] ss:$9 sm:$0xff] %v2156
    %3058 = vst [vmem:[%s2976] ss:$9 sm:$0xff] %v2157
    %v3059 = vld [vmem:[#allocation1] sm:$0xff]
    %3060 = vst [vmem:[#allocation1] ss:$9 sm:$0xff] %v1848
    %3061 = vst [vmem:[%s2964] ss:$9 sm:$0xff] %v2158
    %3062 = vst [vmem:[%s2966] ss:$9 sm:$0xff] %v2159
    %3063 = vst [vmem:[%s2968] ss:$9 sm:$0xff] %v2160
    %3064 = vst [vmem:[%s2970] ss:$9 sm:$0xff] %v2161
    %3065 = vst [vmem:[%s2972] ss:$9 sm:$0xff] %v2162
    %3066 = vst [vmem:[%s2974] ss:$9 sm:$0xff] %v2163
    %3067 = vst [vmem:[%s2976] ss:$9 sm:$0xff] %v2164
    %v3068 = vld [vmem:[#allocation1] sm:$0xff]
    %3069 = vst [vmem:[#allocation1] ss:$9 sm:$0xff] %v1849
    %3070 = vst [vmem:[%s2964] ss:$9 sm:$0xff] %v2165
    %3071 = vst [vmem:[%s2966] ss:$9 sm:$0xff] %v2166
    %3072 = vst [vmem:[%s2968] ss:$9 sm:$0xff] %v2167
    %3073 = vst [vmem:[%s2970] ss:$9 sm:$0xff] %v2168
    %3074 = vst [vmem:[%s2972] ss:$9 sm:$0xff] %v2169
    %3075 = vst [vmem:[%s2974] ss:$9 sm:$0xff] %v2170
    %3076 = vst [vmem:[%s2976] ss:$9 sm:$0xff] %v2171
    %v3077 = vld [vmem:[#allocation1] sm:$0xff]
    %3078 = vst [vmem:[#allocation1] ss:$9 sm:$0xff] %v1850
    %3079 = vst [vmem:[%s2964] ss:$9 sm:$0xff] %v2172
    %3080 = vst [vmem:[%s2966] ss:$9 sm:$0xff] %v2173
    %3081 = vst [vmem:[%s2968] ss:$9 sm:$0xff] %v2174
    %3082 = vst [vmem:[%s2970] ss:$9 sm:$0xff] %v2175
    %3083 = vst [vmem:[%s2972] ss:$9 sm:$0xff] %v2176
    %3084 = vst [vmem:[%s2974] ss:$9 sm:$0xff] %v2177
    %3085 = vst [vmem:[%s2976] ss:$9 sm:$0xff] %v2178
    %v3086 = vld [vmem:[#allocation1] sm:$0xff]
    %3087 = vst [vmem:[#allocation1] ss:$9 sm:$0xff] %v1851
    %3088 = vst [vmem:[%s2964] ss:$9 sm:$0xff] %v2179
    %3089 = vst [vmem:[%s2966] ss:$9 sm:$0xff] %v2180
    %3090 = vst [vmem:[%s2968] ss:$9 sm:$0xff] %v2181
    %3091 = vst [vmem:[%s2970] ss:$9 sm:$0xff] %v2182
    %3092 = vst [vmem:[%s2972] ss:$9 sm:$0xff] %v2183
    %3093 = vst [vmem:[%s2974] ss:$9 sm:$0xff] %v2184
    %3094 = vst [vmem:[%s2976] ss:$9 sm:$0xff] %v2185
    %v3095 = vld [vmem:[#allocation1] sm:$0xff]
    %3096 = vst [vmem:[#allocation1] ss:$9 sm:$0xff] %v1852
    %3097 = vst [vmem:[%s2964] ss:$9 sm:$0xff] %v2186
    %3098 = vst [vmem:[%s2966] ss:$9 sm:$0xff] %v2187
    %3099 = vst [vmem:[%s2968] ss:$9 sm:$0xff] %v2188
    %3100 = vst [vmem:[%s2970] ss:$9 sm:$0xff] %v2189
    %3101 = vst [vmem:[%s2972] ss:$9 sm:$0xff] %v2190
    %3102 = vst [vmem:[%s2974] ss:$9 sm:$0xff] %v2191
    %3103 = vst [vmem:[%s2976] ss:$9 sm:$0xff] %v2192
    %v3104 = vld [vmem:[#allocation1] sm:$0xff]
    %3105 = vst [vmem:[#allocation1] ss:$9 sm:$0xff] %v1853
    %3106 = vst [vmem:[%s2964] ss:$9 sm:$0xff] %v2193
    %3107 = vst [vmem:[%s2966] ss:$9 sm:$0xff] %v2194
    %3108 = vst [vmem:[%s2968] ss:$9 sm:$0xff] %v2195
    %3109 = vst [vmem:[%s2970] ss:$9 sm:$0xff] %v2196
    %3110 = vst [vmem:[%s2972] ss:$9 sm:$0xff] %v2197
    %3111 = vst [vmem:[%s2974] ss:$9 sm:$0xff] %v2198
    %3112 = vst [vmem:[%s2976] ss:$9 sm:$0xff] %v2199
    %v3113 = vld [vmem:[#allocation1] sm:$0xff]
    %3114 = vst [vmem:[#allocation1] ss:$9 sm:$0xff] %v1854
    %3115 = vst [vmem:[%s2964] ss:$9 sm:$0xff] %v2200
    %3116 = vst [vmem:[%s2966] ss:$9 sm:$0xff] %v2201
    %3117 = vst [vmem:[%s2968] ss:$9 sm:$0xff] %v2202
    %3118 = vst [vmem:[%s2970] ss:$9 sm:$0xff] %v2203
    %3119 = vst [vmem:[%s2972] ss:$9 sm:$0xff] %v2204
    %3120 = vst [vmem:[%s2974] ss:$9 sm:$0xff] %v2205
    %3121 = vst [vmem:[%s2976] ss:$9 sm:$0xff] %v2206
    %v3122 = vld [vmem:[#allocation1] sm:$0xff]
    %3123 = vst [vmem:[#allocation1] ss:$9 sm:$0xff] %v1855
    %3124 = vst [vmem:[%s2964] ss:$9 sm:$0xff] %v2207
    %3125 = vst [vmem:[%s2966] ss:$9 sm:$0xff] %v2208
    %3126 = vst [vmem:[%s2968] ss:$9 sm:$0xff] %v2209
    %3127 = vst [vmem:[%s2970] ss:$9 sm:$0xff] %v2210
    %3128 = vst [vmem:[%s2972] ss:$9 sm:$0xff] %v2211
    %3129 = vst [vmem:[%s2974] ss:$9 sm:$0xff] %v2212
    %3130 = vst [vmem:[%s2976] ss:$9 sm:$0xff] %v2213
    %v3131 = vld [vmem:[#allocation1] sm:$0xff]
    %3132 = vst [vmem:[#allocation1] ss:$9 sm:$0xff] %v1856
    %3133 = vst [vmem:[%s2964] ss:$9 sm:$0xff] %v2214
    %3134 = vst [vmem:[%s2966] ss:$9 sm:$0xff] %v2215
    %3135 = vst [vmem:[%s2968] ss:$9 sm:$0xff] %v2216
    %3136 = vst [vmem:[%s2970] ss:$9 sm:$0xff] %v2217
    %3137 = vst [vmem:[%s2972] ss:$9 sm:$0xff] %v2218
    %3138 = vst [vmem:[%s2974] ss:$9 sm:$0xff] %v2219
    %3139 = vst [vmem:[%s2976] ss:$9 sm:$0xff] %v2220
    %v3140 = vld [vmem:[#allocation1] sm:$0xff]
    %3141 = vst [vmem:[#allocation1] ss:$9 sm:$0xff] %v1857
    %3142 = vst [vmem:[%s2964] ss:$9 sm:$0xff] %v2221
    %3143 = vst [vmem:[%s2966] ss:$9 sm:$0xff] %v2222
    %3144 = vst [vmem:[%s2968] ss:$9 sm:$0xff] %v2223
    %3145 = vst [vmem:[%s2970] ss:$9 sm:$0xff] %v2224
    %3146 = vst [vmem:[%s2972] ss:$9 sm:$0xff] %v2225
    %3147 = vst [vmem:[%s2974] ss:$9 sm:$0xff] %v2226
    %3148 = vst [vmem:[%s2976] ss:$9 sm:$0xff] %v2227
    %v3149 = vld [vmem:[#allocation1] sm:$0xff]
    %3150 = vst [vmem:[#allocation1] ss:$9 sm:$0xff] %v1858
    %3151 = vst [vmem:[%s2964] ss:$9 sm:$0xff] %v2228
    %3152 = vst [vmem:[%s2966] ss:$9 sm:$0xff] %v2229
    %3153 = vst [vmem:[%s2968] ss:$9 sm:$0xff] %v2230
    %3154 = vst [vmem:[%s2970] ss:$9 sm:$0xff] %v2231
    %3155 = vst [vmem:[%s2972] ss:$9 sm:$0xff] %v2232
    %3156 = vst [vmem:[%s2974] ss:$9 sm:$0xff] %v2233
    %3157 = vst [vmem:[%s2976] ss:$9 sm:$0xff] %v2234
    %v3158 = vld [vmem:[#allocation1] sm:$0xff]
    %3159 = vst [vmem:[#allocation1] ss:$9 sm:$0xff] %v1859
    %3160 = vst [vmem:[%s2964] ss:$9 sm:$0xff] %v2235
    %3161 = vst [vmem:[%s2966] ss:$9 sm:$0xff] %v2236
    %3162 = vst [vmem:[%s2968] ss:$9 sm:$0xff] %v2237
    %3163 = vst [vmem:[%s2970] ss:$9 sm:$0xff] %v2238
    %3164 = vst [vmem:[%s2972] ss:$9 sm:$0xff] %v2239
    %3165 = vst [vmem:[%s2974] ss:$9 sm:$0xff] %v2240
    %3166 = vst [vmem:[%s2976] ss:$9 sm:$0xff] %v2241
    %v3167 = vld [vmem:[#allocation1] sm:$0xff]
    %3168 = vst [vmem:[#allocation1] ss:$9 sm:$0xff] %v1860
    %3169 = vst [vmem:[%s2964] ss:$9 sm:$0xff] %v2242
    %3170 = vst [vmem:[%s2966] ss:$9 sm:$0xff] %v2243
    %3171 = vst [vmem:[%s2968] ss:$9 sm:$0xff] %v2244
    %3172 = vst [vmem:[%s2970] ss:$9 sm:$0xff] %v2245
    %3173 = vst [vmem:[%s2972] ss:$9 sm:$0xff] %v2246
    %3174 = vst [vmem:[%s2974] ss:$9 sm:$0xff] %v2247
    %3175 = vst [vmem:[%s2976] ss:$9 sm:$0xff] %v2248
    %v3176 = vld [vmem:[#allocation1] sm:$0xff]
    %3177 = vst [vmem:[#allocation1] ss:$9 sm:$0xff] %v1861
    %3178 = vst [vmem:[%s2964] ss:$9 sm:$0xff] %v2249
    %3179 = vst [vmem:[%s2966] ss:$9 sm:$0xff] %v2250
    %3180 = vst [vmem:[%s2968] ss:$9 sm:$0xff] %v2251
    %3181 = vst [vmem:[%s2970] ss:$9 sm:$0xff] %v2252
    %3182 = vst [vmem:[%s2972] ss:$9 sm:$0xff] %v2253
    %3183 = vst [vmem:[%s2974] ss:$9 sm:$0xff] %v2254
    %3184 = vst [vmem:[%s2976] ss:$9 sm:$0xff] %v2255
    %v3185 = vld [vmem:[#allocation1] sm:$0xff]
    %3186 = vst [vmem:[#allocation1] ss:$9 sm:$0xff] %v1862
    %3187 = vst [vmem:[%s2964] ss:$9 sm:$0xff] %v2256
    %3188 = vst [vmem:[%s2966] ss:$9 sm:$0xff] %v2257
    %3189 = vst [vmem:[%s2968] ss:$9 sm:$0xff] %v2258
    %3190 = vst [vmem:[%s2970] ss:$9 sm:$0xff] %v2259
    %3191 = vst [vmem:[%s2972] ss:$9 sm:$0xff] %v2260
    %3192 = vst [vmem:[%s2974] ss:$9 sm:$0xff] %v2261
    %3193 = vst [vmem:[%s2976] ss:$9 sm:$0xff] %v2262
    %v3194 = vld [vmem:[#allocation1] sm:$0xff]
    %3195 = vst [vmem:[#allocation1] ss:$9 sm:$0xff] %v1863
    %3196 = vst [vmem:[%s2964] ss:$9 sm:$0xff] %v2263
    %3197 = vst [vmem:[%s2966] ss:$9 sm:$0xff] %v2264
    %3198 = vst [vmem:[%s2968] ss:$9 sm:$0xff] %v2265
    %3199 = vst [vmem:[%s2970] ss:$9 sm:$0xff] %v2266
    %3200 = vst [vmem:[%s2972] ss:$9 sm:$0xff] %v2267
    %3201 = vst [vmem:[%s2974] ss:$9 sm:$0xff] %v2268
    %3202 = vst [vmem:[%s2976] ss:$9 sm:$0xff] %v2269
    %v3203 = vld [vmem:[#allocation1] sm:$0xff]
    %3204 = vst [vmem:[#allocation1] ss:$9 sm:$0xff] %v1864
    %3205 = vst [vmem:[%s2964] ss:$9 sm:$0xff] %v2270
    %3206 = vst [vmem:[%s2966] ss:$9 sm:$0xff] %v2271
    %3207 = vst [vmem:[%s2968] ss:$9 sm:$0xff] %v2272
    %3208 = vst [vmem:[%s2970] ss:$9 sm:$0xff] %v2273
    %3209 = vst [vmem:[%s2972] ss:$9 sm:$0xff] %v2274
    %3210 = vst [vmem:[%s2974] ss:$9 sm:$0xff] %v2275
    %3211 = vst [vmem:[%s2976] ss:$9 sm:$0xff] %v2276
    %v3212 = vld [vmem:[#allocation1] sm:$0xff]
    %3213 = vst [vmem:[#allocation1] ss:$9 sm:$0xff] %v1865
    %3214 = vst [vmem:[%s2964] ss:$9 sm:$0xff] %v2277
    %3215 = vst [vmem:[%s2966] ss:$9 sm:$0xff] %v2278
    %3216 = vst [vmem:[%s2968] ss:$9 sm:$0xff] %v2279
    %3217 = vst [vmem:[%s2970] ss:$9 sm:$0xff] %v2280
    %3218 = vst [vmem:[%s2972] ss:$9 sm:$0xff] %v2281
    %3219 = vst [vmem:[%s2974] ss:$9 sm:$0xff] %v2282
    %3220 = vst [vmem:[%s2976] ss:$9 sm:$0xff] %v2283
    %v3221 = vld [vmem:[#allocation1] sm:$0xff]
    %3222 = vst [vmem:[#allocation1] ss:$9 sm:$0xff] %v1866
    %3223 = vst [vmem:[%s2964] ss:$9 sm:$0xff] %v2284
    %3224 = vst [vmem:[%s2966] ss:$9 sm:$0xff] %v2285
    %3225 = vst [vmem:[%s2968] ss:$9 sm:$0xff] %v2286
    %3226 = vst [vmem:[%s2970] ss:$9 sm:$0xff] %v2287
    %3227 = vst [vmem:[%s2972] ss:$9 sm:$0xff] %v2288
    %3228 = vst [vmem:[%s2974] ss:$9 sm:$0xff] %v2289
    %3229 = vst [vmem:[%s2976] ss:$9 sm:$0xff] %v2290
    %v3230 = vld [vmem:[#allocation1] sm:$0xff]
    %3231 = vst [vmem:[#allocation1] ss:$9 sm:$0xff] %v1867
    %3232 = vst [vmem:[%s2964] ss:$9 sm:$0xff] %v2291
    %3233 = vst [vmem:[%s2966] ss:$9 sm:$0xff] %v2292
    %3234 = vst [vmem:[%s2968] ss:$9 sm:$0xff] %v2293
    %3235 = vst [vmem:[%s2970] ss:$9 sm:$0xff] %v2294
    %3236 = vst [vmem:[%s2972] ss:$9 sm:$0xff] %v2295
    %3237 = vst [vmem:[%s2974] ss:$9 sm:$0xff] %v2296
    %3238 = vst [vmem:[%s2976] ss:$9 sm:$0xff] %v2297
    %v3239 = vld [vmem:[#allocation1] sm:$0xff]
    %3240 = vst [vmem:[#allocation1] ss:$9 sm:$0xff] %v1868
    %3241 = vst [vmem:[%s2964] ss:$9 sm:$0xff] %v2298
    %3242 = vst [vmem:[%s2966] ss:$9 sm:$0xff] %v2299
    %3243 = vst [vmem:[%s2968] ss:$9 sm:$0xff] %v2300
    %3244 = vst [vmem:[%s2970] ss:$9 sm:$0xff] %v2301
    %3245 = vst [vmem:[%s2972] ss:$9 sm:$0xff] %v2302
    %3246 = vst [vmem:[%s2974] ss:$9 sm:$0xff] %v2303
    %3247 = vst [vmem:[%s2976] ss:$9 sm:$0xff] %v2304
    %v3248 = vld [vmem:[#allocation1] sm:$0xff]
    %3249 = vst [vmem:[#allocation1] ss:$9 sm:$0xff] %v1869
    %3250 = vst [vmem:[%s2964] ss:$9 sm:$0xff] %v2305
    %3251 = vst [vmem:[%s2966] ss:$9 sm:$0xff] %v2306
    %3252 = vst [vmem:[%s2968] ss:$9 sm:$0xff] %v2307
    %3253 = vst [vmem:[%s2970] ss:$9 sm:$0xff] %v2308
    %3254 = vst [vmem:[%s2972] ss:$9 sm:$0xff] %v2309
    %3255 = vst [vmem:[%s2974] ss:$9 sm:$0xff] %v2310
    %3256 = vst [vmem:[%s2976] ss:$9 sm:$0xff] %v2311
    %v3257 = vld [vmem:[#allocation1] sm:$0xff]
    %3258 = vst [vmem:[#allocation1] ss:$9 sm:$0xff] %v1870
    %3259 = vst [vmem:[%s2964] ss:$9 sm:$0xff] %v2312
    %3260 = vst [vmem:[%s2966] ss:$9 sm:$0xff] %v2313
    %3261 = vst [vmem:[%s2968] ss:$9 sm:$0xff] %v2314
    %3262 = vst [vmem:[%s2970] ss:$9 sm:$0xff] %v2315
    %3263 = vst [vmem:[%s2972] ss:$9 sm:$0xff] %v2316
    %3264 = vst [vmem:[%s2974] ss:$9 sm:$0xff] %v2317
    %3265 = vst [vmem:[%s2976] ss:$9 sm:$0xff] %v2318
    %v3266 = vld [vmem:[#allocation1] sm:$0xff]
    %3267 = vst [vmem:[#allocation1] ss:$9 sm:$0xff] %v1871
    %3268 = vst [vmem:[%s2964] ss:$9 sm:$0xff] %v2319
    %3269 = vst [vmem:[%s2966] ss:$9 sm:$0xff] %v2320
    %3270 = vst [vmem:[%s2968] ss:$9 sm:$0xff] %v2321
    %3271 = vst [vmem:[%s2970] ss:$9 sm:$0xff] %v2322
    %3272 = vst [vmem:[%s2972] ss:$9 sm:$0xff] %v2323
    %3273 = vst [vmem:[%s2974] ss:$9 sm:$0xff] %v2324
    %3274 = vst [vmem:[%s2976] ss:$9 sm:$0xff] %v2325
    %v3275 = vld [vmem:[#allocation1] sm:$0xff]
    %3276 = vst [vmem:[#allocation1] ss:$9 sm:$0xff] %v1872
    %3277 = vst [vmem:[%s2964] ss:$9 sm:$0xff] %v2326
    %3278 = vst [vmem:[%s2966] ss:$9 sm:$0xff] %v2327
    %3279 = vst [vmem:[%s2968] ss:$9 sm:$0xff] %v2328
    %3280 = vst [vmem:[%s2970] ss:$9 sm:$0xff] %v2329
    %3281 = vst [vmem:[%s2972] ss:$9 sm:$0xff] %v2330
    %3282 = vst [vmem:[%s2974] ss:$9 sm:$0xff] %v2331
    %3283 = vst [vmem:[%s2976] ss:$9 sm:$0xff] %v2332
    %v3284 = vld [vmem:[#allocation1] sm:$0xff]
    %3285 = vst [vmem:[#allocation1] ss:$9 sm:$0xff] %v1873
    %3286 = vst [vmem:[%s2964] ss:$9 sm:$0xff] %v2333
    %3287 = vst [vmem:[%s2966] ss:$9 sm:$0xff] %v2334
    %3288 = vst [vmem:[%s2968] ss:$9 sm:$0xff] %v2335
    %3289 = vst [vmem:[%s2970] ss:$9 sm:$0xff] %v2336
    %3290 = vst [vmem:[%s2972] ss:$9 sm:$0xff] %v2337
    %3291 = vst [vmem:[%s2974] ss:$9 sm:$0xff] %v2338
    %3292 = vst [vmem:[%s2976] ss:$9 sm:$0xff] %v2339
    %v3293 = vld [vmem:[#allocation1] sm:$0xff]
    %3294 = vst [vmem:[#allocation1] ss:$9 sm:$0xff] %v1874
    %3295 = vst [vmem:[%s2964] ss:$9 sm:$0xff] %v2340
    %3296 = vst [vmem:[%s2966] ss:$9 sm:$0xff] %v2341
    %3297 = vst [vmem:[%s2968] ss:$9 sm:$0xff] %v2342
    %3298 = vst [vmem:[%s2970] ss:$9 sm:$0xff] %v2343
    %3299 = vst [vmem:[%s2972] ss:$9 sm:$0xff] %v2344
    %3300 = vst [vmem:[%s2974] ss:$9 sm:$0xff] %v2345
    %3301 = vst [vmem:[%s2976] ss:$9 sm:$0xff] %v2346
    %v3302 = vld [vmem:[#allocation1] sm:$0xff]
    %3303 = vst [vmem:[#allocation1] ss:$9 sm:$0xff] %v1875
    %3304 = vst [vmem:[%s2964] ss:$9 sm:$0xff] %v2347
    %3305 = vst [vmem:[%s2966] ss:$9 sm:$0xff] %v2348
    %3306 = vst [vmem:[%s2968] ss:$9 sm:$0xff] %v2349
    %3307 = vst [vmem:[%s2970] ss:$9 sm:$0xff] %v2350
    %3308 = vst [vmem:[%s2972] ss:$9 sm:$0xff] %v2351
    %3309 = vst [vmem:[%s2974] ss:$9 sm:$0xff] %v2352
    %3310 = vst [vmem:[%s2976] ss:$9 sm:$0xff] %v2353
    %v3311 = vld [vmem:[#allocation1] sm:$0xff]
    %3312 = vst [vmem:[#allocation1] ss:$9 sm:$0xff] %v1876
    %3313 = vst [vmem:[%s2964] ss:$9 sm:$0xff] %v2354
    %3314 = vst [vmem:[%s2966] ss:$9 sm:$0xff] %v2355
    %3315 = vst [vmem:[%s2968] ss:$9 sm:$0xff] %v2356
    %3316 = vst [vmem:[%s2970] ss:$9 sm:$0xff] %v2357
    %3317 = vst [vmem:[%s2972] ss:$9 sm:$0xff] %v2358
    %3318 = vst [vmem:[%s2974] ss:$9 sm:$0xff] %v2359
    %3319 = vst [vmem:[%s2976] ss:$9 sm:$0xff] %v2360
    %v3320 = vld [vmem:[#allocation1] sm:$0xff]
    %3321 = vst [vmem:[#allocation1] ss:$9 sm:$0xff] %v1877
    %3322 = vst [vmem:[%s2964] ss:$9 sm:$0xff] %v2361
    %3323 = vst [vmem:[%s2966] ss:$9 sm:$0xff] %v2362
    %3324 = vst [vmem:[%s2968] ss:$9 sm:$0xff] %v2363
    %3325 = vst [vmem:[%s2970] ss:$9 sm:$0xff] %v2364
    %3326 = vst [vmem:[%s2972] ss:$9 sm:$0xff] %v2365
    %3327 = vst [vmem:[%s2974] ss:$9 sm:$0xff] %v2366
    %3328 = vst [vmem:[%s2976] ss:$9 sm:$0xff] %v2367
    %v3329 = vld [vmem:[#allocation1] sm:$0xff]
    %3330 = vst [vmem:[#allocation1] ss:$9 sm:$0xff] %v1878
    %3331 = vst [vmem:[%s2964] ss:$9 sm:$0xff] %v2368
    %3332 = vst [vmem:[%s2966] ss:$9 sm:$0xff] %v2369
    %3333 = vst [vmem:[%s2968] ss:$9 sm:$0xff] %v2370
    %3334 = vst [vmem:[%s2970] ss:$9 sm:$0xff] %v2371
    %3335 = vst [vmem:[%s2972] ss:$9 sm:$0xff] %v2372
    %3336 = vst [vmem:[%s2974] ss:$9 sm:$0xff] %v2373
    %3337 = vst [vmem:[%s2976] ss:$9 sm:$0xff] %v2374
    %v3338 = vld [vmem:[#allocation1] sm:$0xff]
    %3339 = vst [vmem:[#allocation1] ss:$9 sm:$0xff] %v1879
    %3340 = vst [vmem:[%s2964] ss:$9 sm:$0xff] %v2375
    %3341 = vst [vmem:[%s2966] ss:$9 sm:$0xff] %v2376
    %3342 = vst [vmem:[%s2968] ss:$9 sm:$0xff] %v2377
    %3343 = vst [vmem:[%s2970] ss:$9 sm:$0xff] %v2378
    %3344 = vst [vmem:[%s2972] ss:$9 sm:$0xff] %v2379
    %3345 = vst [vmem:[%s2974] ss:$9 sm:$0xff] %v2380
    %3346 = vst [vmem:[%s2976] ss:$9 sm:$0xff] %v2381
    %v3347 = vld [vmem:[#allocation1] sm:$0xff]
    %3348 = vst [vmem:[#allocation1] ss:$9 sm:$0xff] %v1880
    %3349 = vst [vmem:[%s2964] ss:$9 sm:$0xff] %v2382
    %3350 = vst [vmem:[%s2966] ss:$9 sm:$0xff] %v2383
    %3351 = vst [vmem:[%s2968] ss:$9 sm:$0xff] %v2384
    %3352 = vst [vmem:[%s2970] ss:$9 sm:$0xff] %v2385
    %3353 = vst [vmem:[%s2972] ss:$9 sm:$0xff] %v2386
    %3354 = vst [vmem:[%s2974] ss:$9 sm:$0xff] %v2387
    %3355 = vst [vmem:[%s2976] ss:$9 sm:$0xff] %v2388
    %v3356 = vld [vmem:[#allocation1] sm:$0xff]
    %3357 = vst [vmem:[#allocation1] ss:$9 sm:$0xff] %v1881
    %3358 = vst [vmem:[%s2964] ss:$9 sm:$0xff] %v2389
    %3359 = vst [vmem:[%s2966] ss:$9 sm:$0xff] %v2390
    %3360 = vst [vmem:[%s2968] ss:$9 sm:$0xff] %v2391
    %3361 = vst [vmem:[%s2970] ss:$9 sm:$0xff] %v2392
    %3362 = vst [vmem:[%s2972] ss:$9 sm:$0xff] %v2393
    %3363 = vst [vmem:[%s2974] ss:$9 sm:$0xff] %v2394
    %3364 = vst [vmem:[%s2976] ss:$9 sm:$0xff] %v2395
    %v3365 = vld [vmem:[#allocation1] sm:$0xff]
    %3366 = vst [vmem:[#allocation1] ss:$9 sm:$0xff] %v1882
    %3367 = vst [vmem:[%s2964] ss:$9 sm:$0xff] %v2396
    %3368 = vst [vmem:[%s2966] ss:$9 sm:$0xff] %v2397
    %3369 = vst [vmem:[%s2968] ss:$9 sm:$0xff] %v2398
    %3370 = vst [vmem:[%s2970] ss:$9 sm:$0xff] %v2399
    %3371 = vst [vmem:[%s2972] ss:$9 sm:$0xff] %v2400
    %3372 = vst [vmem:[%s2974] ss:$9 sm:$0xff] %v2401
    %3373 = vst [vmem:[%s2976] ss:$9 sm:$0xff] %v2402
    %v3374 = vld [vmem:[#allocation1] sm:$0xff]
    %3375 = vst [vmem:[#allocation1] ss:$9 sm:$0xff] %v1883
    %3376 = vst [vmem:[%s2964] ss:$9 sm:$0xff] %v2403
    %3377 = vst [vmem:[%s2966] ss:$9 sm:$0xff] %v2404
    %3378 = vst [vmem:[%s2968] ss:$9 sm:$0xff] %v2405
    %3379 = vst [vmem:[%s2970] ss:$9 sm:$0xff] %v2406
    %3380 = vst [vmem:[%s2972] ss:$9 sm:$0xff] %v2407
    %3381 = vst [vmem:[%s2974] ss:$9 sm:$0xff] %v2408
    %3382 = vst [vmem:[%s2976] ss:$9 sm:$0xff] %v2409
    %v3383 = vld [vmem:[#allocation1] sm:$0xff]
    %3384 = vst [vmem:[#allocation1] ss:$9 sm:$0xff] %v1884
    %3385 = vst [vmem:[%s2964] ss:$9 sm:$0xff] %v2410
    %3386 = vst [vmem:[%s2966] ss:$9 sm:$0xff] %v2411
    %3387 = vst [vmem:[%s2968] ss:$9 sm:$0xff] %v2412
    %3388 = vst [vmem:[%s2970] ss:$9 sm:$0xff] %v2413
    %3389 = vst [vmem:[%s2972] ss:$9 sm:$0xff] %v2414
    %3390 = vst [vmem:[%s2974] ss:$9 sm:$0xff] %v2415
    %3391 = vst [vmem:[%s2976] ss:$9 sm:$0xff] %v2416
    %v3392 = vld [vmem:[#allocation1] sm:$0xff]
    %3393 = vst [vmem:[#allocation1] ss:$9 sm:$0xff] %v1885
    %3394 = vst [vmem:[%s2964] ss:$9 sm:$0xff] %v2417
    %3395 = vst [vmem:[%s2966] ss:$9 sm:$0xff] %v2418
    %3396 = vst [vmem:[%s2968] ss:$9 sm:$0xff] %v2419
    %3397 = vst [vmem:[%s2970] ss:$9 sm:$0xff] %v2420
    %3398 = vst [vmem:[%s2972] ss:$9 sm:$0xff] %v2421
    %3399 = vst [vmem:[%s2974] ss:$9 sm:$0xff] %v2422
    %3400 = vst [vmem:[%s2976] ss:$9 sm:$0xff] %v2423
    %v3401 = vld [vmem:[#allocation1] sm:$0xff]
    %3402 = vst [vmem:[#allocation1] ss:$9 sm:$0xff] %v1886
    %3403 = vst [vmem:[%s2964] ss:$9 sm:$0xff] %v2424
    %3404 = vst [vmem:[%s2966] ss:$9 sm:$0xff] %v2425
    %3405 = vst [vmem:[%s2968] ss:$9 sm:$0xff] %v2426
    %3406 = vst [vmem:[%s2970] ss:$9 sm:$0xff] %v2427
    %3407 = vst [vmem:[%s2972] ss:$9 sm:$0xff] %v2428
    %3408 = vst [vmem:[%s2974] ss:$9 sm:$0xff] %v2429
    %3409 = vst [vmem:[%s2976] ss:$9 sm:$0xff] %v2430
    %v3410 = vld [vmem:[#allocation1] sm:$0xff]
    %3411 = vst [vmem:[#allocation1] ss:$9 sm:$0xff] %v1887
    %3412 = vst [vmem:[%s2964] ss:$9 sm:$0xff] %v2431
    %3413 = vst [vmem:[%s2966] ss:$9 sm:$0xff] %v2432
    %3414 = vst [vmem:[%s2968] ss:$9 sm:$0xff] %v2433
    %3415 = vst [vmem:[%s2970] ss:$9 sm:$0xff] %v2434
    %3416 = vst [vmem:[%s2972] ss:$9 sm:$0xff] %v2435
    %3417 = vst [vmem:[%s2974] ss:$9 sm:$0xff] %v2436
    %3418 = vst [vmem:[%s2976] ss:$9 sm:$0xff] %v2437
    %v3419 = vld [vmem:[#allocation1] sm:$0xff]
    %3420 = vst [vmem:[#allocation1] ss:$9 sm:$0xff] %v1888
    %3421 = vst [vmem:[%s2964] ss:$9 sm:$0xff] %v2438
    %3422 = vst [vmem:[%s2966] ss:$9 sm:$0xff] %v2439
    %3423 = vst [vmem:[%s2968] ss:$9 sm:$0xff] %v2440
    %3424 = vst [vmem:[%s2970] ss:$9 sm:$0xff] %v2441
    %3425 = vst [vmem:[%s2972] ss:$9 sm:$0xff] %v2442
    %3426 = vst [vmem:[%s2974] ss:$9 sm:$0xff] %v2443
    %3427 = vst [vmem:[%s2976] ss:$9 sm:$0xff] %v2444
    %v3428 = vld [vmem:[#allocation1] sm:$0xff]
    %3429 = vst [vmem:[#allocation1] ss:$9 sm:$0xff] %v1889
    %3430 = vst [vmem:[%s2964] ss:$9 sm:$0xff] %v2445
    %3431 = vst [vmem:[%s2966] ss:$9 sm:$0xff] %v2446
    %3432 = vst [vmem:[%s2968] ss:$9 sm:$0xff] %v2447
    %3433 = vst [vmem:[%s2970] ss:$9 sm:$0xff] %v2448
    %3434 = vst [vmem:[%s2972] ss:$9 sm:$0xff] %v2449
    %3435 = vst [vmem:[%s2974] ss:$9 sm:$0xff] %v2450
    %3436 = vst [vmem:[%s2976] ss:$9 sm:$0xff] %v2451
    %v3437 = vld [vmem:[#allocation1] sm:$0xff]
    %3438 = vst [vmem:[#allocation1] ss:$9 sm:$0xff] %v1890
    %3439 = vst [vmem:[%s2964] ss:$9 sm:$0xff] %v2452
    %3440 = vst [vmem:[%s2966] ss:$9 sm:$0xff] %v2453
    %3441 = vst [vmem:[%s2968] ss:$9 sm:$0xff] %v2454
    %3442 = vst [vmem:[%s2970] ss:$9 sm:$0xff] %v2455
    %3443 = vst [vmem:[%s2972] ss:$9 sm:$0xff] %v2456
    %3444 = vst [vmem:[%s2974] ss:$9 sm:$0xff] %v2457
    %3445 = vst [vmem:[%s2976] ss:$9 sm:$0xff] %v2458
    %v3446 = vld [vmem:[#allocation1] sm:$0xff]
    %3447 = vst [vmem:[#allocation1] ss:$9 sm:$0xff] %v1891
    %3448 = vst [vmem:[%s2964] ss:$9 sm:$0xff] %v2459
    %3449 = vst [vmem:[%s2966] ss:$9 sm:$0xff] %v2460
    %3450 = vst [vmem:[%s2968] ss:$9 sm:$0xff] %v2461
    %3451 = vst [vmem:[%s2970] ss:$9 sm:$0xff] %v2462
    %3452 = vst [vmem:[%s2972] ss:$9 sm:$0xff] %v2463
    %3453 = vst [vmem:[%s2974] ss:$9 sm:$0xff] %v2464
    %3454 = vst [vmem:[%s2976] ss:$9 sm:$0xff] %v2465
    %v3455 = vld [vmem:[#allocation1] sm:$0xff]
    %3456 = vst [vmem:[#allocation1] ss:$9 sm:$0xff] %v1892
    %3457 = vst [vmem:[%s2964] ss:$9 sm:$0xff] %v2466
    %3458 = vst [vmem:[%s2966] ss:$9 sm:$0xff] %v2467
    %3459 = vst [vmem:[%s2968] ss:$9 sm:$0xff] %v2468
    %3460 = vst [vmem:[%s2970] ss:$9 sm:$0xff] %v2469
    %3461 = vst [vmem:[%s2972] ss:$9 sm:$0xff] %v2470
    %3462 = vst [vmem:[%s2974] ss:$9 sm:$0xff] %v2471
    %3463 = vst [vmem:[%s2976] ss:$9 sm:$0xff] %v2472
    %v3464 = vld [vmem:[#allocation1] sm:$0xff]
    %3465 = vst [vmem:[#allocation1] ss:$9 sm:$0xff] %v1893
    %3466 = vst [vmem:[%s2964] ss:$9 sm:$0xff] %v2473
    %3467 = vst [vmem:[%s2966] ss:$9 sm:$0xff] %v2474
    %3468 = vst [vmem:[%s2968] ss:$9 sm:$0xff] %v2475
    %3469 = vst [vmem:[%s2970] ss:$9 sm:$0xff] %v2476
    %3470 = vst [vmem:[%s2972] ss:$9 sm:$0xff] %v2477
    %3471 = vst [vmem:[%s2974] ss:$9 sm:$0xff] %v2478
    %3472 = vst [vmem:[%s2976] ss:$9 sm:$0xff] %v2479
    %v3473 = vld [vmem:[#allocation1] sm:$0xff]
    %3474 = vst [vmem:[#allocation1] ss:$9 sm:$0xff] %v1894
    %3475 = vst [vmem:[%s2964] ss:$9 sm:$0xff] %v2480
    %3476 = vst [vmem:[%s2966] ss:$9 sm:$0xff] %v2481
    %3477 = vst [vmem:[%s2968] ss:$9 sm:$0xff] %v2482
    %3478 = vst [vmem:[%s2970] ss:$9 sm:$0xff] %v2483
    %3479 = vst [vmem:[%s2972] ss:$9 sm:$0xff] %v2484
    %3480 = vst [vmem:[%s2974] ss:$9 sm:$0xff] %v2485
    %3481 = vst [vmem:[%s2976] ss:$9 sm:$0xff] %v2486
    %v3482 = vld [vmem:[#allocation1] sm:$0xff]
    %3483 = vst [vmem:[#allocation1] ss:$9 sm:$0xff] %v1895
    %3484 = vst [vmem:[%s2964] ss:$9 sm:$0xff] %v2487
    %3485 = vst [vmem:[%s2966] ss:$9 sm:$0xff] %v2488
    %3486 = vst [vmem:[%s2968] ss:$9 sm:$0xff] %v2489
    %3487 = vst [vmem:[%s2970] ss:$9 sm:$0xff] %v2490
    %3488 = vst [vmem:[%s2972] ss:$9 sm:$0xff] %v2491
    %3489 = vst [vmem:[%s2974] ss:$9 sm:$0xff] %v2492
    %3490 = vst [vmem:[%s2976] ss:$9 sm:$0xff] %v2493
    %v3491 = vld [vmem:[#allocation1] sm:$0xff]
    %3492 = vst [vmem:[#allocation1] ss:$9 sm:$0xff] %v1896
    %3493 = vst [vmem:[%s2964] ss:$9 sm:$0xff] %v2494
    %3494 = vst [vmem:[%s2966] ss:$9 sm:$0xff] %v2495
    %3495 = vst [vmem:[%s2968] ss:$9 sm:$0xff] %v2496
    %3496 = vst [vmem:[%s2970] ss:$9 sm:$0xff] %v2497
    %3497 = vst [vmem:[%s2972] ss:$9 sm:$0xff] %v2498
    %3498 = vst [vmem:[%s2974] ss:$9 sm:$0xff] %v2499
    %3499 = vst [vmem:[%s2976] ss:$9 sm:$0xff] %v2500
    %v3500 = vld [vmem:[#allocation1] sm:$0xff]
    %3501 = vst [vmem:[#allocation1] ss:$9 sm:$0xff] %v1897
    %3502 = vst [vmem:[%s2964] ss:$9 sm:$0xff] %v2501
    %3503 = vst [vmem:[%s2966] ss:$9 sm:$0xff] %v2502
    %3504 = vst [vmem:[%s2968] ss:$9 sm:$0xff] %v2503
    %3505 = vst [vmem:[%s2970] ss:$9 sm:$0xff] %v2504
    %3506 = vst [vmem:[%s2972] ss:$9 sm:$0xff] %v2505
    %3507 = vst [vmem:[%s2974] ss:$9 sm:$0xff] %v2506
    %3508 = vst [vmem:[%s2976] ss:$9 sm:$0xff] %v2507
    %v3509 = vld [vmem:[#allocation1] sm:$0xff]
    %3510 = vst [vmem:[#allocation1] ss:$9 sm:$0xff] %v1898
    %3511 = vst [vmem:[%s2964] ss:$9 sm:$0xff] %v2508
    %3512 = vst [vmem:[%s2966] ss:$9 sm:$0xff] %v2509
    %3513 = vst [vmem:[%s2968] ss:$9 sm:$0xff] %v2510
    %3514 = vst [vmem:[%s2970] ss:$9 sm:$0xff] %v2511
    %3515 = vst [vmem:[%s2972] ss:$9 sm:$0xff] %v2512
    %3516 = vst [vmem:[%s2974] ss:$9 sm:$0xff] %v2513
    %3517 = vst [vmem:[%s2976] ss:$9 sm:$0xff] %v2514
    %v3518 = vld [vmem:[#allocation1] sm:$0xff]
    %3519 = vst [vmem:[#allocation1] ss:$9 sm:$0xff] %v1899
    %3520 = vst [vmem:[%s2964] ss:$9 sm:$0xff] %v2515
    %3521 = vst [vmem:[%s2966] ss:$9 sm:$0xff] %v2516
    %3522 = vst [vmem:[%s2968] ss:$9 sm:$0xff] %v2517
    %3523 = vst [vmem:[%s2970] ss:$9 sm:$0xff] %v2518
    %3524 = vst [vmem:[%s2972] ss:$9 sm:$0xff] %v2519
    %3525 = vst [vmem:[%s2974] ss:$9 sm:$0xff] %v2520
    %3526 = vst [vmem:[%s2976] ss:$9 sm:$0xff] %v2521
    %v3527 = vld [vmem:[#allocation1] sm:$0xff]
    %3528 = vst [vmem:[#allocation1] ss:$9 sm:$0xff] %v1900
    %3529 = vst [vmem:[%s2964] ss:$9 sm:$0xff] %v2522
    %3530 = vst [vmem:[%s2966] ss:$9 sm:$0xff] %v2523
    %3531 = vst [vmem:[%s2968] ss:$9 sm:$0xff] %v2524
    %3532 = vst [vmem:[%s2970] ss:$9 sm:$0xff] %v2525
    %3533 = vst [vmem:[%s2972] ss:$9 sm:$0xff] %v2526
    %3534 = vst [vmem:[%s2974] ss:$9 sm:$0xff] %v2527
    %3535 = vst [vmem:[%s2976] ss:$9 sm:$0xff] %v2528
    %v3536 = vld [vmem:[#allocation1] sm:$0xff]
    %3537 = vst [vmem:[#allocation1] ss:$9 sm:$0xff] %v1901
    %3538 = vst [vmem:[%s2964] ss:$9 sm:$0xff] %v2529
    %3539 = vst [vmem:[%s2966] ss:$9 sm:$0xff] %v2530
    %3540 = vst [vmem:[%s2968] ss:$9 sm:$0xff] %v2531
    %3541 = vst [vmem:[%s2970] ss:$9 sm:$0xff] %v2532
    %3542 = vst [vmem:[%s2972] ss:$9 sm:$0xff] %v2533
    %3543 = vst [vmem:[%s2974] ss:$9 sm:$0xff] %v2534
    %3544 = vst [vmem:[%s2976] ss:$9 sm:$0xff] %v2535
    %v3545 = vld [vmem:[#allocation1] sm:$0xff]
    %3546 = vst [vmem:[#allocation1] ss:$9 sm:$0xff] %v1902
    %3547 = vst [vmem:[%s2964] ss:$9 sm:$0xff] %v2536
    %3548 = vst [vmem:[%s2966] ss:$9 sm:$0xff] %v2537
    %3549 = vst [vmem:[%s2968] ss:$9 sm:$0xff] %v2538
    %3550 = vst [vmem:[%s2970] ss:$9 sm:$0xff] %v2539
    %3551 = vst [vmem:[%s2972] ss:$9 sm:$0xff] %v2540
    %3552 = vst [vmem:[%s2974] ss:$9 sm:$0xff] %v2541
    %3553 = vst [vmem:[%s2976] ss:$9 sm:$0xff] %v2542
    %v3554 = vld [vmem:[#allocation1] sm:$0xff]
    %3555 = vst [vmem:[#allocation1] ss:$9 sm:$0xff] %v1903
    %3556 = vst [vmem:[%s2964] ss:$9 sm:$0xff] %v2543
    %3557 = vst [vmem:[%s2966] ss:$9 sm:$0xff] %v2544
    %3558 = vst [vmem:[%s2968] ss:$9 sm:$0xff] %v2545
    %3559 = vst [vmem:[%s2970] ss:$9 sm:$0xff] %v2546
    %3560 = vst [vmem:[%s2972] ss:$9 sm:$0xff] %v2547
    %3561 = vst [vmem:[%s2974] ss:$9 sm:$0xff] %v2548
    %3562 = vst [vmem:[%s2976] ss:$9 sm:$0xff] %v2549
    %v3563 = vld [vmem:[#allocation1] sm:$0xff]
    %3564 = vst [vmem:[#allocation1] ss:$9 sm:$0xff] %v1904
    %3565 = vst [vmem:[%s2964] ss:$9 sm:$0xff] %v2550
    %3566 = vst [vmem:[%s2966] ss:$9 sm:$0xff] %v2551
    %3567 = vst [vmem:[%s2968] ss:$9 sm:$0xff] %v2552
    %3568 = vst [vmem:[%s2970] ss:$9 sm:$0xff] %v2553
    %3569 = vst [vmem:[%s2972] ss:$9 sm:$0xff] %v2554
    %3570 = vst [vmem:[%s2974] ss:$9 sm:$0xff] %v2555
    %3571 = vst [vmem:[%s2976] ss:$9 sm:$0xff] %v2556
    %v3572 = vld [vmem:[#allocation1] sm:$0xff]
    %3573 = vst [vmem:[#allocation1] ss:$9 sm:$0xff] %v1905
    %3574 = vst [vmem:[%s2964] ss:$9 sm:$0xff] %v2557
    %3575 = vst [vmem:[%s2966] ss:$9 sm:$0xff] %v2558
    %3576 = vst [vmem:[%s2968] ss:$9 sm:$0xff] %v2559
    %3577 = vst [vmem:[%s2970] ss:$9 sm:$0xff] %v2560
    %3578 = vst [vmem:[%s2972] ss:$9 sm:$0xff] %v2561
    %3579 = vst [vmem:[%s2974] ss:$9 sm:$0xff] %v2562
    %3580 = vst [vmem:[%s2976] ss:$9 sm:$0xff] %v2563
    %v3581 = vld [vmem:[#allocation1] sm:$0xff]
    %3582 = vst [vmem:[#allocation1] ss:$9 sm:$0xff] %v1906
    %3583 = vst [vmem:[%s2964] ss:$9 sm:$0xff] %v2564
    %3584 = vst [vmem:[%s2966] ss:$9 sm:$0xff] %v2565
    %3585 = vst [vmem:[%s2968] ss:$9 sm:$0xff] %v2566
    %3586 = vst [vmem:[%s2970] ss:$9 sm:$0xff] %v2567
    %3587 = vst [vmem:[%s2972] ss:$9 sm:$0xff] %v2568
    %3588 = vst [vmem:[%s2974] ss:$9 sm:$0xff] %v2569
    %3589 = vst [vmem:[%s2976] ss:$9 sm:$0xff] %v2570
    %v3590 = vld [vmem:[#allocation1] sm:$0xff]
    %3591 = vst [vmem:[#allocation1] ss:$9 sm:$0xff] %v1907
    %3592 = vst [vmem:[%s2964] ss:$9 sm:$0xff] %v2571
    %3593 = vst [vmem:[%s2966] ss:$9 sm:$0xff] %v2572
    %3594 = vst [vmem:[%s2968] ss:$9 sm:$0xff] %v2573
    %3595 = vst [vmem:[%s2970] ss:$9 sm:$0xff] %v2574
    %3596 = vst [vmem:[%s2972] ss:$9 sm:$0xff] %v2575
    %3597 = vst [vmem:[%s2974] ss:$9 sm:$0xff] %v2576
    %3598 = vst [vmem:[%s2976] ss:$9 sm:$0xff] %v2577
    %v3599 = vld [vmem:[#allocation1] sm:$0xff]
    %3600 = vst [vmem:[#allocation1] ss:$9 sm:$0xff] %v1908
    %3601 = vst [vmem:[%s2964] ss:$9 sm:$0xff] %v2578
    %3602 = vst [vmem:[%s2966] ss:$9 sm:$0xff] %v2579
    %3603 = vst [vmem:[%s2968] ss:$9 sm:$0xff] %v2580
    %3604 = vst [vmem:[%s2970] ss:$9 sm:$0xff] %v2581
    %3605 = vst [vmem:[%s2972] ss:$9 sm:$0xff] %v2582
    %3606 = vst [vmem:[%s2974] ss:$9 sm:$0xff] %v2583
    %3607 = vst [vmem:[%s2976] ss:$9 sm:$0xff] %v2584
    %v3608 = vld [vmem:[#allocation1] sm:$0xff]
    %3609 = vst [vmem:[#allocation1] ss:$9 sm:$0xff] %v1909
    %3610 = vst [vmem:[%s2964] ss:$9 sm:$0xff] %v2585
    %3611 = vst [vmem:[%s2966] ss:$9 sm:$0xff] %v2586
    %3612 = vst [vmem:[%s2968] ss:$9 sm:$0xff] %v2587
    %3613 = vst [vmem:[%s2970] ss:$9 sm:$0xff] %v2588
    %3614 = vst [vmem:[%s2972] ss:$9 sm:$0xff] %v2589
    %3615 = vst [vmem:[%s2974] ss:$9 sm:$0xff] %v2590
    %3616 = vst [vmem:[%s2976] ss:$9 sm:$0xff] %v2591
    %v3617 = vld [vmem:[#allocation1] sm:$0xff]
    %3618 = vst [vmem:[#allocation1] ss:$9 sm:$0xff] %v1910
    %3619 = vst [vmem:[%s2964] ss:$9 sm:$0xff] %v2592
    %3620 = vst [vmem:[%s2966] ss:$9 sm:$0xff] %v2593
    %3621 = vst [vmem:[%s2968] ss:$9 sm:$0xff] %v2594
    %3622 = vst [vmem:[%s2970] ss:$9 sm:$0xff] %v2595
    %3623 = vst [vmem:[%s2972] ss:$9 sm:$0xff] %v2596
    %3624 = vst [vmem:[%s2974] ss:$9 sm:$0xff] %v2597
    %3625 = vst [vmem:[%s2976] ss:$9 sm:$0xff] %v2598
    %v3626 = vld [vmem:[#allocation1] sm:$0xff]
    %3627 = vst [vmem:[#allocation1] ss:$9 sm:$0xff] %v1911
    %3628 = vst [vmem:[%s2964] ss:$9 sm:$0xff] %v2599
    %3629 = vst [vmem:[%s2966] ss:$9 sm:$0xff] %v2600
    %3630 = vst [vmem:[%s2968] ss:$9 sm:$0xff] %v2601
    %3631 = vst [vmem:[%s2970] ss:$9 sm:$0xff] %v2602
    %3632 = vst [vmem:[%s2972] ss:$9 sm:$0xff] %v2603
    %3633 = vst [vmem:[%s2974] ss:$9 sm:$0xff] %v2604
    %3634 = vst [vmem:[%s2976] ss:$9 sm:$0xff] %v2605
    %v3635 = vld [vmem:[#allocation1] sm:$0xff]
    %3636 = vst [vmem:[#allocation1] ss:$9 sm:$0xff] %v1912
    %3637 = vst [vmem:[%s2964] ss:$9 sm:$0xff] %v2606
    %3638 = vst [vmem:[%s2966] ss:$9 sm:$0xff] %v2607
    %3639 = vst [vmem:[%s2968] ss:$9 sm:$0xff] %v2608
    %3640 = vst [vmem:[%s2970] ss:$9 sm:$0xff] %v2609
    %3641 = vst [vmem:[%s2972] ss:$9 sm:$0xff] %v2610
    %3642 = vst [vmem:[%s2974] ss:$9 sm:$0xff] %v2611
    %3643 = vst [vmem:[%s2976] ss:$9 sm:$0xff] %v2612
    %v3644 = vld [vmem:[#allocation1] sm:$0xff]
    %3645 = vst [vmem:[#allocation1] ss:$9 sm:$0xff] %v1913
    %3646 = vst [vmem:[%s2964] ss:$9 sm:$0xff] %v2613
    %3647 = vst [vmem:[%s2966] ss:$9 sm:$0xff] %v2614
    %3648 = vst [vmem:[%s2968] ss:$9 sm:$0xff] %v2615
    %3649 = vst [vmem:[%s2970] ss:$9 sm:$0xff] %v2616
    %3650 = vst [vmem:[%s2972] ss:$9 sm:$0xff] %v2617
    %3651 = vst [vmem:[%s2974] ss:$9 sm:$0xff] %v2618
    %3652 = vst [vmem:[%s2976] ss:$9 sm:$0xff] %v2619
    %v3653 = vld [vmem:[#allocation1] sm:$0xff]
    %3654 = vst [vmem:[#allocation1] ss:$9 sm:$0xff] %v1914
    %3655 = vst [vmem:[%s2964] ss:$9 sm:$0xff] %v2620
    %3656 = vst [vmem:[%s2966] ss:$9 sm:$0xff] %v2621
    %3657 = vst [vmem:[%s2968] ss:$9 sm:$0xff] %v2622
    %3658 = vst [vmem:[%s2970] ss:$9 sm:$0xff] %v2623
    %3659 = vst [vmem:[%s2972] ss:$9 sm:$0xff] %v2624
    %3660 = vst [vmem:[%s2974] ss:$9 sm:$0xff] %v2625
    %3661 = vst [vmem:[%s2976] ss:$9 sm:$0xff] %v2626
    %v3662 = vld [vmem:[#allocation1] sm:$0xff]
    %3663 = vst [vmem:[#allocation1] ss:$9 sm:$0xff] %v1915
    %3664 = vst [vmem:[%s2964] ss:$9 sm:$0xff] %v2627
    %3665 = vst [vmem:[%s2966] ss:$9 sm:$0xff] %v2628
    %3666 = vst [vmem:[%s2968] ss:$9 sm:$0xff] %v2629
    %3667 = vst [vmem:[%s2970] ss:$9 sm:$0xff] %v2630
    %3668 = vst [vmem:[%s2972] ss:$9 sm:$0xff] %v2631
    %3669 = vst [vmem:[%s2974] ss:$9 sm:$0xff] %v2632
    %3670 = vst [vmem:[%s2976] ss:$9 sm:$0xff] %v2633
    %v3671 = vld [vmem:[#allocation1] sm:$0xff]
    %3672 = vst [vmem:[#allocation1] ss:$9 sm:$0xff] %v1916
    %3673 = vst [vmem:[%s2964] ss:$9 sm:$0xff] %v2634
    %3674 = vst [vmem:[%s2966] ss:$9 sm:$0xff] %v2635
    %3675 = vst [vmem:[%s2968] ss:$9 sm:$0xff] %v2636
    %3676 = vst [vmem:[%s2970] ss:$9 sm:$0xff] %v2637
    %3677 = vst [vmem:[%s2972] ss:$9 sm:$0xff] %v2638
    %3678 = vst [vmem:[%s2974] ss:$9 sm:$0xff] %v2639
    %3679 = vst [vmem:[%s2976] ss:$9 sm:$0xff] %v2640
    %v3680 = vld [vmem:[#allocation1] sm:$0xff]
    %3681 = vst [vmem:[#allocation1] ss:$9 sm:$0xff] %v1917
    %3682 = vst [vmem:[%s2964] ss:$9 sm:$0xff] %v2641
    %3683 = vst [vmem:[%s2966] ss:$9 sm:$0xff] %v2642
    %3684 = vst [vmem:[%s2968] ss:$9 sm:$0xff] %v2643
    %3685 = vst [vmem:[%s2970] ss:$9 sm:$0xff] %v2644
    %3686 = vst [vmem:[%s2972] ss:$9 sm:$0xff] %v2645
    %3687 = vst [vmem:[%s2974] ss:$9 sm:$0xff] %v2646
    %3688 = vst [vmem:[%s2976] ss:$9 sm:$0xff] %v2647
    %v3689 = vld [vmem:[#allocation1] sm:$0xff]
    %3690 = vst [vmem:[#allocation1] ss:$9 sm:$0xff] %v1918
    %3691 = vst [vmem:[%s2964] ss:$9 sm:$0xff] %v2648
    %3692 = vst [vmem:[%s2966] ss:$9 sm:$0xff] %v2649
    %3693 = vst [vmem:[%s2968] ss:$9 sm:$0xff] %v2650
    %3694 = vst [vmem:[%s2970] ss:$9 sm:$0xff] %v2651
    %3695 = vst [vmem:[%s2972] ss:$9 sm:$0xff] %v2652
    %3696 = vst [vmem:[%s2974] ss:$9 sm:$0xff] %v2653
    %3697 = vst [vmem:[%s2976] ss:$9 sm:$0xff] %v2654
    %v3698 = vld [vmem:[#allocation1] sm:$0xff]
    %3699 = vst [vmem:[#allocation1] ss:$9 sm:$0xff] %v1919
    %3700 = vst [vmem:[%s2964] ss:$9 sm:$0xff] %v2655
    %3701 = vst [vmem:[%s2966] ss:$9 sm:$0xff] %v2656
    %3702 = vst [vmem:[%s2968] ss:$9 sm:$0xff] %v2657
    %3703 = vst [vmem:[%s2970] ss:$9 sm:$0xff] %v2658
    %3704 = vst [vmem:[%s2972] ss:$9 sm:$0xff] %v2659
    %3705 = vst [vmem:[%s2974] ss:$9 sm:$0xff] %v2660
    %3706 = vst [vmem:[%s2976] ss:$9 sm:$0xff] %v2661
    %v3707 = vld [vmem:[#allocation1] sm:$0xff]
    %3708 = vst [vmem:[#allocation1] ss:$9 sm:$0xff] %v1920
    %3709 = vst [vmem:[%s2964] ss:$9 sm:$0xff] %v2662
    %3710 = vst [vmem:[%s2966] ss:$9 sm:$0xff] %v2663
    %3711 = vst [vmem:[%s2968] ss:$9 sm:$0xff] %v2664
    %3712 = vst [vmem:[%s2970] ss:$9 sm:$0xff] %v2665
    %3713 = vst [vmem:[%s2972] ss:$9 sm:$0xff] %v2666
    %3714 = vst [vmem:[%s2974] ss:$9 sm:$0xff] %v2667
    %3715 = vst [vmem:[%s2976] ss:$9 sm:$0xff] %v2668
    %v3716 = vld [vmem:[#allocation1] sm:$0xff]
    %3717 = vst [vmem:[#allocation1] ss:$9 sm:$0xff] %v1921
    %3718 = vst [vmem:[%s2964] ss:$9 sm:$0xff] %v2669
    %3719 = vst [vmem:[%s2966] ss:$9 sm:$0xff] %v2670
    %3720 = vst [vmem:[%s2968] ss:$9 sm:$0xff] %v2671
    %3721 = vst [vmem:[%s2970] ss:$9 sm:$0xff] %v2672
    %3722 = vst [vmem:[%s2972] ss:$9 sm:$0xff] %v2673
    %3723 = vst [vmem:[%s2974] ss:$9 sm:$0xff] %v2674
    %3724 = vst [vmem:[%s2976] ss:$9 sm:$0xff] %v2675
    %v3725 = vld [vmem:[#allocation1] sm:$0xff]
    %3726 = vst [vmem:[#allocation1] ss:$9 sm:$0xff] %v1922
    %3727 = vst [vmem:[%s2964] ss:$9 sm:$0xff] %v2676
    %3728 = vst [vmem:[%s2966] ss:$9 sm:$0xff] %v2677
    %3729 = vst [vmem:[%s2968] ss:$9 sm:$0xff] %v2678
    %3730 = vst [vmem:[%s2970] ss:$9 sm:$0xff] %v2679
    %3731 = vst [vmem:[%s2972] ss:$9 sm:$0xff] %v2680
    %3732 = vst [vmem:[%s2974] ss:$9 sm:$0xff] %v2681
    %3733 = vst [vmem:[%s2976] ss:$9 sm:$0xff] %v2682
    %v3734 = vld [vmem:[#allocation1] sm:$0xff]
    %3735 = vst [vmem:[#allocation1] ss:$9 sm:$0xff] %v1923
    %3736 = vst [vmem:[%s2964] ss:$9 sm:$0xff] %v2683
    %3737 = vst [vmem:[%s2966] ss:$9 sm:$0xff] %v2684
    %3738 = vst [vmem:[%s2968] ss:$9 sm:$0xff] %v2685
    %3739 = vst [vmem:[%s2970] ss:$9 sm:$0xff] %v2686
    %3740 = vst [vmem:[%s2972] ss:$9 sm:$0xff] %v2687
    %3741 = vst [vmem:[%s2974] ss:$9 sm:$0xff] %v2688
    %3742 = vst [vmem:[%s2976] ss:$9 sm:$0xff] %v2689
    %v3743 = vld [vmem:[#allocation1] sm:$0xff]
    %3744 = vst [vmem:[#allocation1] ss:$9 sm:$0xff] %v1924
    %3745 = vst [vmem:[%s2964] ss:$9 sm:$0xff] %v2690
    %3746 = vst [vmem:[%s2966] ss:$9 sm:$0xff] %v2691
    %3747 = vst [vmem:[%s2968] ss:$9 sm:$0xff] %v2692
    %3748 = vst [vmem:[%s2970] ss:$9 sm:$0xff] %v2693
    %3749 = vst [vmem:[%s2972] ss:$9 sm:$0xff] %v2694
    %3750 = vst [vmem:[%s2974] ss:$9 sm:$0xff] %v2695
    %3751 = vst [vmem:[%s2976] ss:$9 sm:$0xff] %v2696
    %v3752 = vld [vmem:[#allocation1] sm:$0xff]
    %3753 = vst [vmem:[#allocation1] ss:$9 sm:$0xff] %v1925
    %3754 = vst [vmem:[%s2964] ss:$9 sm:$0xff] %v2697
    %3755 = vst [vmem:[%s2966] ss:$9 sm:$0xff] %v2698
    %3756 = vst [vmem:[%s2968] ss:$9 sm:$0xff] %v2699
    %3757 = vst [vmem:[%s2970] ss:$9 sm:$0xff] %v2700
    %3758 = vst [vmem:[%s2972] ss:$9 sm:$0xff] %v2701
    %3759 = vst [vmem:[%s2974] ss:$9 sm:$0xff] %v2702
    %3760 = vst [vmem:[%s2976] ss:$9 sm:$0xff] %v2703
    %v3761 = vld [vmem:[#allocation1] sm:$0xff]
    %3762 = vst [vmem:[#allocation1] ss:$9 sm:$0xff] %v1926
    %3763 = vst [vmem:[%s2964] ss:$9 sm:$0xff] %v2704
    %3764 = vst [vmem:[%s2966] ss:$9 sm:$0xff] %v2705
    %3765 = vst [vmem:[%s2968] ss:$9 sm:$0xff] %v2706
    %3766 = vst [vmem:[%s2970] ss:$9 sm:$0xff] %v2707
    %3767 = vst [vmem:[%s2972] ss:$9 sm:$0xff] %v2708
    %3768 = vst [vmem:[%s2974] ss:$9 sm:$0xff] %v2709
    %3769 = vst [vmem:[%s2976] ss:$9 sm:$0xff] %v2710
    %v3770 = vld [vmem:[#allocation1] sm:$0xff]
    %3771 = vst [vmem:[#allocation1] ss:$9 sm:$0xff] %v1927
    %3772 = vst [vmem:[%s2964] ss:$9 sm:$0xff] %v2711
    %3773 = vst [vmem:[%s2966] ss:$9 sm:$0xff] %v2712
    %3774 = vst [vmem:[%s2968] ss:$9 sm:$0xff] %v2713
    %3775 = vst [vmem:[%s2970] ss:$9 sm:$0xff] %v2714
    %3776 = vst [vmem:[%s2972] ss:$9 sm:$0xff] %v2715
    %3777 = vst [vmem:[%s2974] ss:$9 sm:$0xff] %v2716
    %3778 = vst [vmem:[%s2976] ss:$9 sm:$0xff] %v2717
    %v3779 = vld [vmem:[#allocation1] sm:$0xff]
    %3780 = vst [vmem:[#allocation1] ss:$9 sm:$0xff] %v1928
    %3781 = vst [vmem:[%s2964] ss:$9 sm:$0xff] %v2718
    %3782 = vst [vmem:[%s2966] ss:$9 sm:$0xff] %v2719
    %3783 = vst [vmem:[%s2968] ss:$9 sm:$0xff] %v2720
    %3784 = vst [vmem:[%s2970] ss:$9 sm:$0xff] %v2721
    %3785 = vst [vmem:[%s2972] ss:$9 sm:$0xff] %v2722
    %3786 = vst [vmem:[%s2974] ss:$9 sm:$0xff] %v2723
    %3787 = vst [vmem:[%s2976] ss:$9 sm:$0xff] %v2724
    %v3788 = vld [vmem:[#allocation1] sm:$0xff]
    %3789 = vst [vmem:[#allocation1] ss:$9 sm:$0xff] %v1929
    %3790 = vst [vmem:[%s2964] ss:$9 sm:$0xff] %v2725
    %3791 = vst [vmem:[%s2966] ss:$9 sm:$0xff] %v2726
    %3792 = vst [vmem:[%s2968] ss:$9 sm:$0xff] %v2727
    %3793 = vst [vmem:[%s2970] ss:$9 sm:$0xff] %v2728
    %3794 = vst [vmem:[%s2972] ss:$9 sm:$0xff] %v2729
    %3795 = vst [vmem:[%s2974] ss:$9 sm:$0xff] %v2730
    %3796 = vst [vmem:[%s2976] ss:$9 sm:$0xff] %v2731
    %v3797 = vld [vmem:[#allocation1] sm:$0xff]
    %3798 = vst [vmem:[#allocation1] ss:$9 sm:$0xff] %v1930
    %3799 = vst [vmem:[%s2964] ss:$9 sm:$0xff] %v2732
    %3800 = vst [vmem:[%s2966] ss:$9 sm:$0xff] %v2733
    %3801 = vst [vmem:[%s2968] ss:$9 sm:$0xff] %v2734
    %3802 = vst [vmem:[%s2970] ss:$9 sm:$0xff] %v2735
    %3803 = vst [vmem:[%s2972] ss:$9 sm:$0xff] %v2736
    %3804 = vst [vmem:[%s2974] ss:$9 sm:$0xff] %v2737
    %3805 = vst [vmem:[%s2976] ss:$9 sm:$0xff] %v2738
    %v3806 = vld [vmem:[#allocation1] sm:$0xff]
    %3807 = vst [vmem:[#allocation1] ss:$9 sm:$0xff] %v1931
    %3808 = vst [vmem:[%s2964] ss:$9 sm:$0xff] %v2739
    %3809 = vst [vmem:[%s2966] ss:$9 sm:$0xff] %v2740
    %3810 = vst [vmem:[%s2968] ss:$9 sm:$0xff] %v2741
    %3811 = vst [vmem:[%s2970] ss:$9 sm:$0xff] %v2742
    %3812 = vst [vmem:[%s2972] ss:$9 sm:$0xff] %v2743
    %3813 = vst [vmem:[%s2974] ss:$9 sm:$0xff] %v2744
    %3814 = vst [vmem:[%s2976] ss:$9 sm:$0xff] %v2745
    %v3815 = vld [vmem:[#allocation1] sm:$0xff]
    %3816 = vst [vmem:[#allocation1] ss:$9 sm:$0xff] %v1932
    %3817 = vst [vmem:[%s2964] ss:$9 sm:$0xff] %v2746
    %3818 = vst [vmem:[%s2966] ss:$9 sm:$0xff] %v2747
    %3819 = vst [vmem:[%s2968] ss:$9 sm:$0xff] %v2748
    %3820 = vst [vmem:[%s2970] ss:$9 sm:$0xff] %v2749
    %3821 = vst [vmem:[%s2972] ss:$9 sm:$0xff] %v2750
    %3822 = vst [vmem:[%s2974] ss:$9 sm:$0xff] %v2751
    %3823 = vst [vmem:[%s2976] ss:$9 sm:$0xff] %v2752
    %v3824 = vld [vmem:[#allocation1] sm:$0xff]
    %3825 = vst [vmem:[#allocation1] ss:$9 sm:$0xff] %v1933
    %3826 = vst [vmem:[%s2964] ss:$9 sm:$0xff] %v2753
    %3827 = vst [vmem:[%s2966] ss:$9 sm:$0xff] %v2754
    %3828 = vst [vmem:[%s2968] ss:$9 sm:$0xff] %v2755
    %3829 = vst [vmem:[%s2970] ss:$9 sm:$0xff] %v2756
    %3830 = vst [vmem:[%s2972] ss:$9 sm:$0xff] %v2757
    %3831 = vst [vmem:[%s2974] ss:$9 sm:$0xff] %v2758
    %3832 = vst [vmem:[%s2976] ss:$9 sm:$0xff] %v2759
    %v3833 = vld [vmem:[#allocation1] sm:$0xff]
    %3834 = vst [vmem:[#allocation1] ss:$9 sm:$0xff] %v1934
    %3835 = vst [vmem:[%s2964] ss:$9 sm:$0xff] %v2760
    %3836 = vst [vmem:[%s2966] ss:$9 sm:$0xff] %v2761
    %3837 = vst [vmem:[%s2968] ss:$9 sm:$0xff] %v2762
    %3838 = vst [vmem:[%s2970] ss:$9 sm:$0xff] %v2763
    %3839 = vst [vmem:[%s2972] ss:$9 sm:$0xff] %v2764
    %3840 = vst [vmem:[%s2974] ss:$9 sm:$0xff] %v2765
    %3841 = vst [vmem:[%s2976] ss:$9 sm:$0xff] %v2766
    %v3842 = vld [vmem:[#allocation1] sm:$0xff]
    %3843 = vst [vmem:[#allocation1] ss:$9 sm:$0xff] %v1935
    %3844 = vst [vmem:[%s2964] ss:$9 sm:$0xff] %v2767
    %3845 = vst [vmem:[%s2966] ss:$9 sm:$0xff] %v2768
    %3846 = vst [vmem:[%s2968] ss:$9 sm:$0xff] %v2769
    %3847 = vst [vmem:[%s2970] ss:$9 sm:$0xff] %v2770
    %3848 = vst [vmem:[%s2972] ss:$9 sm:$0xff] %v2771
    %3849 = vst [vmem:[%s2974] ss:$9 sm:$0xff] %v2772
    %3850 = vst [vmem:[%s2976] ss:$9 sm:$0xff] %v2773
    %v3851 = vld [vmem:[#allocation1] sm:$0xff]
    %3852 = vst [vmem:[#allocation1] ss:$9 sm:$0xff] %v1936
    %3853 = vst [vmem:[%s2964] ss:$9 sm:$0xff] %v2774
    %3854 = vst [vmem:[%s2966] ss:$9 sm:$0xff] %v2775
    %3855 = vst [vmem:[%s2968] ss:$9 sm:$0xff] %v2776
    %3856 = vst [vmem:[%s2970] ss:$9 sm:$0xff] %v2777
    %3857 = vst [vmem:[%s2972] ss:$9 sm:$0xff] %v2778
    %3858 = vst [vmem:[%s2974] ss:$9 sm:$0xff] %v2779
    %3859 = vst [vmem:[%s2976] ss:$9 sm:$0xff] %v2780
    %v3860 = vld [vmem:[#allocation1] sm:$0xff]
    %3861 = vst [vmem:[#allocation1] ss:$9 sm:$0xff] %v1937
    %3862 = vst [vmem:[%s2964] ss:$9 sm:$0xff] %v2781
    %3863 = vst [vmem:[%s2966] ss:$9 sm:$0xff] %v2782
    %3864 = vst [vmem:[%s2968] ss:$9 sm:$0xff] %v2783
    %3865 = vst [vmem:[%s2970] ss:$9 sm:$0xff] %v2784
    %3866 = vst [vmem:[%s2972] ss:$9 sm:$0xff] %v2785
    %3867 = vst [vmem:[%s2974] ss:$9 sm:$0xff] %v2786
    %3868 = vst [vmem:[%s2976] ss:$9 sm:$0xff] %v2787
    %v3869 = vld [vmem:[#allocation1] sm:$0xff]
    %3870 = vst [vmem:[#allocation1] ss:$9 sm:$0xff] %v1938
    %3871 = vst [vmem:[%s2964] ss:$9 sm:$0xff] %v2788
    %3872 = vst [vmem:[%s2966] ss:$9 sm:$0xff] %v2789
    %3873 = vst [vmem:[%s2968] ss:$9 sm:$0xff] %v2790
    %3874 = vst [vmem:[%s2970] ss:$9 sm:$0xff] %v2791
    %3875 = vst [vmem:[%s2972] ss:$9 sm:$0xff] %v2792
    %3876 = vst [vmem:[%s2974] ss:$9 sm:$0xff] %v2793
    %3877 = vst [vmem:[%s2976] ss:$9 sm:$0xff] %v2794
    %v3878 = vld [vmem:[#allocation1] sm:$0xff]
    %3879 = vst [vmem:[#allocation1] ss:$9 sm:$0xff] %v1939
    %3880 = vst [vmem:[%s2964] ss:$9 sm:$0xff] %v2795
    %3881 = vst [vmem:[%s2966] ss:$9 sm:$0xff] %v2796
    %3882 = vst [vmem:[%s2968] ss:$9 sm:$0xff] %v2797
    %3883 = vst [vmem:[%s2970] ss:$9 sm:$0xff] %v2798
    %3884 = vst [vmem:[%s2972] ss:$9 sm:$0xff] %v2799
    %3885 = vst [vmem:[%s2974] ss:$9 sm:$0xff] %v2800
    %3886 = vst [vmem:[%s2976] ss:$9 sm:$0xff] %v2801
    %v3887 = vld [vmem:[#allocation1] sm:$0xff]
    %3888 = vst [vmem:[#allocation1] ss:$9 sm:$0xff] %v1940
    %3889 = vst [vmem:[%s2964] ss:$9 sm:$0xff] %v2802
    %3890 = vst [vmem:[%s2966] ss:$9 sm:$0xff] %v2803
    %3891 = vst [vmem:[%s2968] ss:$9 sm:$0xff] %v2804
    %3892 = vst [vmem:[%s2970] ss:$9 sm:$0xff] %v2805
    %3893 = vst [vmem:[%s2972] ss:$9 sm:$0xff] %v2806
    %3894 = vst [vmem:[%s2974] ss:$9 sm:$0xff] %v2807
    %3895 = vst [vmem:[%s2976] ss:$9 sm:$0xff] %v2808
    %v3896 = vld [vmem:[#allocation1] sm:$0xff]
    %3897 = vst [vmem:[#allocation1] ss:$9 sm:$0xff] %v1941
    %3898 = vst [vmem:[%s2964] ss:$9 sm:$0xff] %v2809
    %3899 = vst [vmem:[%s2966] ss:$9 sm:$0xff] %v2810
    %3900 = vst [vmem:[%s2968] ss:$9 sm:$0xff] %v2811
    %3901 = vst [vmem:[%s2970] ss:$9 sm:$0xff] %v2812
    %3902 = vst [vmem:[%s2972] ss:$9 sm:$0xff] %v2813
    %3903 = vst [vmem:[%s2974] ss:$9 sm:$0xff] %v2814
    %3904 = vst [vmem:[%s2976] ss:$9 sm:$0xff] %v2815
    %v3905 = vld [vmem:[#allocation1] sm:$0xff]
    %3906 = vst [vmem:[#allocation1] ss:$9 sm:$0xff] %v1942
    %3907 = vst [vmem:[%s2964] ss:$9 sm:$0xff] %v2816
    %3908 = vst [vmem:[%s2966] ss:$9 sm:$0xff] %v2817
    %3909 = vst [vmem:[%s2968] ss:$9 sm:$0xff] %v2818
    %3910 = vst [vmem:[%s2970] ss:$9 sm:$0xff] %v2819
    %3911 = vst [vmem:[%s2972] ss:$9 sm:$0xff] %v2820
    %3912 = vst [vmem:[%s2974] ss:$9 sm:$0xff] %v2821
    %3913 = vst [vmem:[%s2976] ss:$9 sm:$0xff] %v2822
    %v3914 = vld [vmem:[#allocation1] sm:$0xff]
    %3915 = vst [vmem:[#allocation1] ss:$9 sm:$0xff] %v1943
    %3916 = vst [vmem:[%s2964] ss:$9 sm:$0xff] %v2823
    %3917 = vst [vmem:[%s2966] ss:$9 sm:$0xff] %v2824
    %3918 = vst [vmem:[%s2968] ss:$9 sm:$0xff] %v2825
    %3919 = vst [vmem:[%s2970] ss:$9 sm:$0xff] %v2826
    %3920 = vst [vmem:[%s2972] ss:$9 sm:$0xff] %v2827
    %3921 = vst [vmem:[%s2974] ss:$9 sm:$0xff] %v2828
    %3922 = vst [vmem:[%s2976] ss:$9 sm:$0xff] %v2829
    %v3923 = vld [vmem:[#allocation1] sm:$0xff]
    %3924 = vst [vmem:[#allocation1] ss:$9 sm:$0xff] %v1944
    %3925 = vst [vmem:[%s2964] ss:$9 sm:$0xff] %v2830
    %3926 = vst [vmem:[%s2966] ss:$9 sm:$0xff] %v2831
    %3927 = vst [vmem:[%s2968] ss:$9 sm:$0xff] %v2832
    %3928 = vst [vmem:[%s2970] ss:$9 sm:$0xff] %v2833
    %3929 = vst [vmem:[%s2972] ss:$9 sm:$0xff] %v2834
    %3930 = vst [vmem:[%s2974] ss:$9 sm:$0xff] %v2835
    %3931 = vst [vmem:[%s2976] ss:$9 sm:$0xff] %v2836
    %v3932 = vld [vmem:[#allocation1] sm:$0xff]
    %3933 = vst [vmem:[#allocation1] ss:$9 sm:$0xff] %v1945
    %3934 = vst [vmem:[%s2964] ss:$9 sm:$0xff] %v2837
    %3935 = vst [vmem:[%s2966] ss:$9 sm:$0xff] %v2838
    %3936 = vst [vmem:[%s2968] ss:$9 sm:$0xff] %v2839
    %3937 = vst [vmem:[%s2970] ss:$9 sm:$0xff] %v2840
    %3938 = vst [vmem:[%s2972] ss:$9 sm:$0xff] %v2841
    %3939 = vst [vmem:[%s2974] ss:$9 sm:$0xff] %v2842
    %3940 = vst [vmem:[%s2976] ss:$9 sm:$0xff] %v2843
    %v3941 = vld [vmem:[#allocation1] sm:$0xff]
    %3942 = vst [vmem:[#allocation1] ss:$9 sm:$0xff] %v1946
    %3943 = vst [vmem:[%s2964] ss:$9 sm:$0xff] %v2844
    %3944 = vst [vmem:[%s2966] ss:$9 sm:$0xff] %v2845
    %3945 = vst [vmem:[%s2968] ss:$9 sm:$0xff] %v2846
    %3946 = vst [vmem:[%s2970] ss:$9 sm:$0xff] %v2847
    %3947 = vst [vmem:[%s2972] ss:$9 sm:$0xff] %v2848
    %3948 = vst [vmem:[%s2974] ss:$9 sm:$0xff] %v2849
    %3949 = vst [vmem:[%s2976] ss:$9 sm:$0xff] %v2850
    %v3950 = vld [vmem:[#allocation1] sm:$0xff]
    %3951 = vst [vmem:[#allocation1] ss:$9 sm:$0xff] %v1947
    %3952 = vst [vmem:[%s2964] ss:$9 sm:$0xff] %v2851
    %3953 = vst [vmem:[%s2966] ss:$9 sm:$0xff] %v2852
    %3954 = vst [vmem:[%s2968] ss:$9 sm:$0xff] %v2853
    %3955 = vst [vmem:[%s2970] ss:$9 sm:$0xff] %v2854
    %3956 = vst [vmem:[%s2972] ss:$9 sm:$0xff] %v2855
    %3957 = vst [vmem:[%s2974] ss:$9 sm:$0xff] %v2856
    %3958 = vst [vmem:[%s2976] ss:$9 sm:$0xff] %v2857
    %v3959 = vld [vmem:[#allocation1] sm:$0xff]
    %3960 = vst [vmem:[#allocation1] ss:$9 sm:$0xff] %v1948
    %3961 = vst [vmem:[%s2964] ss:$9 sm:$0xff] %v2858
    %3962 = vst [vmem:[%s2966] ss:$9 sm:$0xff] %v2859
    %3963 = vst [vmem:[%s2968] ss:$9 sm:$0xff] %v2860
    %3964 = vst [vmem:[%s2970] ss:$9 sm:$0xff] %v2861
    %3965 = vst [vmem:[%s2972] ss:$9 sm:$0xff] %v2862
    %3966 = vst [vmem:[%s2974] ss:$9 sm:$0xff] %v2863
    %3967 = vst [vmem:[%s2976] ss:$9 sm:$0xff] %v2864
    %v3968 = vld [vmem:[#allocation1] sm:$0xff]
    %3969 = vst [vmem:[#allocation1] ss:$9 sm:$0xff] %v1949
    %3970 = vst [vmem:[%s2964] ss:$9 sm:$0xff] %v2865
    %3971 = vst [vmem:[%s2966] ss:$9 sm:$0xff] %v2866
    %3972 = vst [vmem:[%s2968] ss:$9 sm:$0xff] %v2867
    %3973 = vst [vmem:[%s2970] ss:$9 sm:$0xff] %v2868
    %3974 = vst [vmem:[%s2972] ss:$9 sm:$0xff] %v2869
    %3975 = vst [vmem:[%s2974] ss:$9 sm:$0xff] %v2870
    %3976 = vst [vmem:[%s2976] ss:$9 sm:$0xff] %v2871
    %v3977 = vld [vmem:[#allocation1] sm:$0xff]
    %3978 = vst [vmem:[#allocation1] ss:$9 sm:$0xff] %v1950
    %3979 = vst [vmem:[%s2964] ss:$9 sm:$0xff] %v2872
    %3980 = vst [vmem:[%s2966] ss:$9 sm:$0xff] %v2873
    %3981 = vst [vmem:[%s2968] ss:$9 sm:$0xff] %v2874
    %3982 = vst [vmem:[%s2970] ss:$9 sm:$0xff] %v2875
    %3983 = vst [vmem:[%s2972] ss:$9 sm:$0xff] %v2876
    %3984 = vst [vmem:[%s2974] ss:$9 sm:$0xff] %v2877
    %3985 = vst [vmem:[%s2976] ss:$9 sm:$0xff] %v2878
    %v3986 = vld [vmem:[#allocation1] sm:$0xff]
    %3987 = vst [vmem:[#allocation1] ss:$9 sm:$0xff] %v1951
    %3988 = vst [vmem:[%s2964] ss:$9 sm:$0xff] %v2879
    %3989 = vst [vmem:[%s2966] ss:$9 sm:$0xff] %v2880
    %3990 = vst [vmem:[%s2968] ss:$9 sm:$0xff] %v2881
    %3991 = vst [vmem:[%s2970] ss:$9 sm:$0xff] %v2882
    %3992 = vst [vmem:[%s2972] ss:$9 sm:$0xff] %v2883
    %3993 = vst [vmem:[%s2974] ss:$9 sm:$0xff] %v2884
    %3994 = vst [vmem:[%s2976] ss:$9 sm:$0xff] %v2885
    %v3995 = vld [vmem:[#allocation1] sm:$0xff]
    %3996 = vst [vmem:[#allocation1] ss:$9 sm:$0xff] %v1952
    %3997 = vst [vmem:[%s2964] ss:$9 sm:$0xff] %v2886
    %3998 = vst [vmem:[%s2966] ss:$9 sm:$0xff] %v2887
    %3999 = vst [vmem:[%s2968] ss:$9 sm:$0xff] %v2888
    %4000 = vst [vmem:[%s2970] ss:$9 sm:$0xff] %v2889
    %4001 = vst [vmem:[%s2972] ss:$9 sm:$0xff] %v2890
    %4002 = vst [vmem:[%s2974] ss:$9 sm:$0xff] %v2891
    %4003 = vst [vmem:[%s2976] ss:$9 sm:$0xff] %v2892
    %v4004 = vld [vmem:[#allocation1] sm:$0xff]
    %4005 = vst [vmem:[#allocation1] ss:$9 sm:$0xff] %v1953
    %4006 = vst [vmem:[%s2964] ss:$9 sm:$0xff] %v2893
    %4007 = vst [vmem:[%s2966] ss:$9 sm:$0xff] %v2894
    %4008 = vst [vmem:[%s2968] ss:$9 sm:$0xff] %v2895
    %4009 = vst [vmem:[%s2970] ss:$9 sm:$0xff] %v2896
    %4010 = vst [vmem:[%s2972] ss:$9 sm:$0xff] %v2897
    %4011 = vst [vmem:[%s2974] ss:$9 sm:$0xff] %v2898
    %4012 = vst [vmem:[%s2976] ss:$9 sm:$0xff] %v2899
    %v4013 = vld [vmem:[#allocation1] sm:$0xff]
    %4014 = vst [vmem:[#allocation1] ss:$9 sm:$0xff] %v1954
    %4015 = vst [vmem:[%s2964] ss:$9 sm:$0xff] %v2900
    %4016 = vst [vmem:[%s2966] ss:$9 sm:$0xff] %v2901
    %4017 = vst [vmem:[%s2968] ss:$9 sm:$0xff] %v2902
    %4018 = vst [vmem:[%s2970] ss:$9 sm:$0xff] %v2903
    %4019 = vst [vmem:[%s2972] ss:$9 sm:$0xff] %v2904
    %4020 = vst [vmem:[%s2974] ss:$9 sm:$0xff] %v2905
    %4021 = vst [vmem:[%s2976] ss:$9 sm:$0xff] %v2906
    %v4022 = vld [vmem:[#allocation1] sm:$0xff]
    %4023 = vst [vmem:[#allocation1] ss:$9 sm:$0xff] %v1955
    %4024 = vst [vmem:[%s2964] ss:$9 sm:$0xff] %v2907
    %4025 = vst [vmem:[%s2966] ss:$9 sm:$0xff] %v2908
    %4026 = vst [vmem:[%s2968] ss:$9 sm:$0xff] %v2909
    %4027 = vst [vmem:[%s2970] ss:$9 sm:$0xff] %v2910
    %4028 = vst [vmem:[%s2972] ss:$9 sm:$0xff] %v2911
    %4029 = vst [vmem:[%s2974] ss:$9 sm:$0xff] %v2912
    %4030 = vst [vmem:[%s2976] ss:$9 sm:$0xff] %v2913
    %v4031 = vld [vmem:[#allocation1] sm:$0xff]
    %4032 = vst [vmem:[#allocation1] ss:$9 sm:$0xff] %v1956
    %4033 = vst [vmem:[%s2964] ss:$9 sm:$0xff] %v2914
    %4034 = vst [vmem:[%s2966] ss:$9 sm:$0xff] %v2915
    %4035 = vst [vmem:[%s2968] ss:$9 sm:$0xff] %v2916
    %4036 = vst [vmem:[%s2970] ss:$9 sm:$0xff] %v2917
    %4037 = vst [vmem:[%s2972] ss:$9 sm:$0xff] %v2918
    %4038 = vst [vmem:[%s2974] ss:$9 sm:$0xff] %v2919
    %4039 = vst [vmem:[%s2976] ss:$9 sm:$0xff] %v2920
    %v4040 = vld [vmem:[#allocation1] sm:$0xff]
    %4041 = vst [vmem:[#allocation1] ss:$9 sm:$0xff] %v1957
    %4042 = vst [vmem:[%s2964] ss:$9 sm:$0xff] %v2921
    %4043 = vst [vmem:[%s2966] ss:$9 sm:$0xff] %v2922
    %4044 = vst [vmem:[%s2968] ss:$9 sm:$0xff] %v2923
    %4045 = vst [vmem:[%s2970] ss:$9 sm:$0xff] %v2924
    %4046 = vst [vmem:[%s2972] ss:$9 sm:$0xff] %v2925
    %4047 = vst [vmem:[%s2974] ss:$9 sm:$0xff] %v2926
    %4048 = vst [vmem:[%s2976] ss:$9 sm:$0xff] %v2927
    %v4049 = vld [vmem:[#allocation1] sm:$0xff]
    %4050 = vst [vmem:[#allocation1] ss:$9 sm:$0xff] %v1958
    %4051 = vst [vmem:[%s2964] ss:$9 sm:$0xff] %v2928
    %4052 = vst [vmem:[%s2966] ss:$9 sm:$0xff] %v2929
    %4053 = vst [vmem:[%s2968] ss:$9 sm:$0xff] %v2930
    %4054 = vst [vmem:[%s2970] ss:$9 sm:$0xff] %v2931
    %4055 = vst [vmem:[%s2972] ss:$9 sm:$0xff] %v2932
    %4056 = vst [vmem:[%s2974] ss:$9 sm:$0xff] %v2933
    %4057 = vst [vmem:[%s2976] ss:$9 sm:$0xff] %v2934
    %v4058 = vld [vmem:[#allocation1] sm:$0xff]
    %4059 = vst [vmem:[#allocation1] ss:$9 sm:$0xff] %v1959
    %4060 = vst [vmem:[%s2964] ss:$9 sm:$0xff] %v2935
    %4061 = vst [vmem:[%s2966] ss:$9 sm:$0xff] %v2936
    %4062 = vst [vmem:[%s2968] ss:$9 sm:$0xff] %v2937
    %4063 = vst [vmem:[%s2970] ss:$9 sm:$0xff] %v2938
    %4064 = vst [vmem:[%s2972] ss:$9 sm:$0xff] %v2939
    %4065 = vst [vmem:[%s2974] ss:$9 sm:$0xff] %v2940
    %4066 = vst [vmem:[%s2976] ss:$9 sm:$0xff] %v2941
    %v4067 = vld [vmem:[#allocation1] sm:$0xff]
    %4068 = vst [vmem:[#allocation1] ss:$9 sm:$0xff] %v1960
    %4069 = vst [vmem:[%s2964] ss:$9 sm:$0xff] %v2942
    %4070 = vst [vmem:[%s2966] ss:$9 sm:$0xff] %v2943
    %4071 = vst [vmem:[%s2968] ss:$9 sm:$0xff] %v2944
    %4072 = vst [vmem:[%s2970] ss:$9 sm:$0xff] %v2945
    %4073 = vst [vmem:[%s2972] ss:$9 sm:$0xff] %v2946
    %4074 = vst [vmem:[%s2974] ss:$9 sm:$0xff] %v2947
    %4075 = vst [vmem:[%s2976] ss:$9 sm:$0xff] %v2948
    %v4076 = vld [vmem:[#allocation1] sm:$0xff]
    %4077 = vst [vmem:[#allocation1] ss:$9 sm:$0xff] %v1961
    %4078 = vst [vmem:[%s2964] ss:$9 sm:$0xff] %v2949
    %4079 = vst [vmem:[%s2966] ss:$9 sm:$0xff] %v2950
    %4080 = vst [vmem:[%s2968] ss:$9 sm:$0xff] %v2951
    %4081 = vst [vmem:[%s2970] ss:$9 sm:$0xff] %v2952
    %4082 = vst [vmem:[%s2972] ss:$9 sm:$0xff] %v2953
    %4083 = vst [vmem:[%s2974] ss:$9 sm:$0xff] %v2954
    %4084 = vst [vmem:[%s2976] ss:$9 sm:$0xff] %v2955
    %v4085 = vld [vmem:[#allocation1] sm:$0xff]
    %4086 = vst [vmem:[#allocation1] ss:$9 sm:$0xff] %v1962
    %4087 = vst [vmem:[%s2964] ss:$9 sm:$0xff] %v2956
    %4088 = vst [vmem:[%s2966] ss:$9 sm:$0xff] %v2957
    %4089 = vst [vmem:[%s2968] ss:$9 sm:$0xff] %v2958
    %4090 = vst [vmem:[%s2970] ss:$9 sm:$0xff] %v2959
    %4091 = vst [vmem:[%s2972] ss:$9 sm:$0xff] %v2960
    %4092 = vst [vmem:[%s2974] ss:$9 sm:$0xff] %v2961
    %4093 = vst [vmem:[%s2976] ss:$9 sm:$0xff] %v2962
    %v4094 = vld [vmem:[#allocation1] sm:$0xff]
    %4095 = vset.pattern.permute.xlu0 0
    %4096 = vperm.xlu0 %4095, %v2978
    %v4097 = vpop.permute.xlu0 %4096
    %4098 = vset.pattern.permute.xlu0 0
    %4099 = vperm.xlu0 %4098, %v2987
    %v4100 = vpop.permute.xlu0 %4099
    %4101 = vset.pattern.permute.xlu0 0
    %4102 = vperm.xlu0 %4101, %v2996
    %v4103 = vpop.permute.xlu0 %4102
    %4104 = vset.pattern.permute.xlu0 0
    %4105 = vperm.xlu0 %4104, %v3005
    %v4106 = vpop.permute.xlu0 %4105
    %4107 = vset.pattern.permute.xlu0 0
    %4108 = vperm.xlu0 %4107, %v3014
    %v4109 = vpop.permute.xlu0 %4108
    %4110 = vset.pattern.permute.xlu0 0
    %4111 = vperm.xlu0 %4110, %v3023
    %v4112 = vpop.permute.xlu0 %4111
    %4113 = vset.pattern.permute.xlu0 0
    %4114 = vperm.xlu0 %4113, %v3032
    %v4115 = vpop.permute.xlu0 %4114
    %4116 = vset.pattern.permute.xlu0 0
    %4117 = vperm.xlu0 %4116, %v3041
    %v4118 = vpop.permute.xlu0 %4117
    %4119 = vset.pattern.permute.xlu0 0
    %4120 = vperm.xlu0 %4119, %v3050
    %v4121 = vpop.permute.xlu0 %4120
    %4122 = vset.pattern.permute.xlu0 0
    %4123 = vperm.xlu0 %4122, %v3059
    %v4124 = vpop.permute.xlu0 %4123
    %4125 = vset.pattern.permute.xlu0 0
    %4126 = vperm.xlu0 %4125, %v3068
    %v4127 = vpop.permute.xlu0 %4126
    %4128 = vset.pattern.permute.xlu0 0
    %4129 = vperm.xlu0 %4128, %v3077
    %v4130 = vpop.permute.xlu0 %4129
    %4131 = vset.pattern.permute.xlu0 0
    %4132 = vperm.xlu0 %4131, %v3086
    %v4133 = vpop.permute.xlu0 %4132
    %4134 = vset.pattern.permute.xlu0 0
    %4135 = vperm.xlu0 %4134, %v3095
    %v4136 = vpop.permute.xlu0 %4135
    %4137 = vset.pattern.permute.xlu0 0
    %4138 = vperm.xlu0 %4137, %v3104
    %v4139 = vpop.permute.xlu0 %4138
    %4140 = vset.pattern.permute.xlu0 0
    %4141 = vperm.xlu0 %4140, %v3113
    %v4142 = vpop.permute.xlu0 %4141
    %4143 = vset.pattern.permute.xlu0 0
    %4144 = vperm.xlu0 %4143, %v3122
    %v4145 = vpop.permute.xlu0 %4144
    %4146 = vset.pattern.permute.xlu0 0
    %4147 = vperm.xlu0 %4146, %v3131
    %v4148 = vpop.permute.xlu0 %4147
    %4149 = vset.pattern.permute.xlu0 0
    %4150 = vperm.xlu0 %4149, %v3140
    %v4151 = vpop.permute.xlu0 %4150
    %4152 = vset.pattern.permute.xlu0 0
    %4153 = vperm.xlu0 %4152, %v3149
    %v4154 = vpop.permute.xlu0 %4153
    %4155 = vset.pattern.permute.xlu0 0
    %4156 = vperm.xlu0 %4155, %v3158
    %v4157 = vpop.permute.xlu0 %4156
    %4158 = vset.pattern.permute.xlu0 0
    %4159 = vperm.xlu0 %4158, %v3167
    %v4160 = vpop.permute.xlu0 %4159
    %4161 = vset.pattern.permute.xlu0 0
    %4162 = vperm.xlu0 %4161, %v3176
    %v4163 = vpop.permute.xlu0 %4162
    %4164 = vset.pattern.permute.xlu0 0
    %4165 = vperm.xlu0 %4164, %v3185
    %v4166 = vpop.permute.xlu0 %4165
    %4167 = vset.pattern.permute.xlu0 0
    %4168 = vperm.xlu0 %4167, %v3194
    %v4169 = vpop.permute.xlu0 %4168
    %4170 = vset.pattern.permute.xlu0 0
    %4171 = vperm.xlu0 %4170, %v3203
    %v4172 = vpop.permute.xlu0 %4171
    %4173 = vset.pattern.permute.xlu0 0
    %4174 = vperm.xlu0 %4173, %v3212
    %v4175 = vpop.permute.xlu0 %4174
    %4176 = vset.pattern.permute.xlu0 0
    %4177 = vperm.xlu0 %4176, %v3221
    %v4178 = vpop.permute.xlu0 %4177
    %4179 = vset.pattern.permute.xlu0 0
    %4180 = vperm.xlu0 %4179, %v3230
    %v4181 = vpop.permute.xlu0 %4180
    %4182 = vset.pattern.permute.xlu0 0
    %4183 = vperm.xlu0 %4182, %v3239
    %v4184 = vpop.permute.xlu0 %4183
    %4185 = vset.pattern.permute.xlu0 0
    %4186 = vperm.xlu0 %4185, %v3248
    %v4187 = vpop.permute.xlu0 %4186
    %4188 = vset.pattern.permute.xlu0 0
    %4189 = vperm.xlu0 %4188, %v3257
    %v4190 = vpop.permute.xlu0 %4189
    %4191 = vset.pattern.permute.xlu0 0
    %4192 = vperm.xlu0 %4191, %v3266
    %v4193 = vpop.permute.xlu0 %4192
    %4194 = vset.pattern.permute.xlu0 0
    %4195 = vperm.xlu0 %4194, %v3275
    %v4196 = vpop.permute.xlu0 %4195
    %4197 = vset.pattern.permute.xlu0 0
    %4198 = vperm.xlu0 %4197, %v3284
    %v4199 = vpop.permute.xlu0 %4198
    %4200 = vset.pattern.permute.xlu0 0
    %4201 = vperm.xlu0 %4200, %v3293
    %v4202 = vpop.permute.xlu0 %4201
    %4203 = vset.pattern.permute.xlu0 0
    %4204 = vperm.xlu0 %4203, %v3302
    %v4205 = vpop.permute.xlu0 %4204
    %4206 = vset.pattern.permute.xlu0 0
    %4207 = vperm.xlu0 %4206, %v3311
    %v4208 = vpop.permute.xlu0 %4207
    %4209 = vset.pattern.permute.xlu0 0
    %4210 = vperm.xlu0 %4209, %v3320
    %v4211 = vpop.permute.xlu0 %4210
    %4212 = vset.pattern.permute.xlu0 0
    %4213 = vperm.xlu0 %4212, %v3329
    %v4214 = vpop.permute.xlu0 %4213
    %4215 = vset.pattern.permute.xlu0 0
    %4216 = vperm.xlu0 %4215, %v3338
    %v4217 = vpop.permute.xlu0 %4216
    %4218 = vset.pattern.permute.xlu0 0
    %4219 = vperm.xlu0 %4218, %v3347
    %v4220 = vpop.permute.xlu0 %4219
    %4221 = vset.pattern.permute.xlu0 0
    %4222 = vperm.xlu0 %4221, %v3356
    %v4223 = vpop.permute.xlu0 %4222
    %4224 = vset.pattern.permute.xlu0 0
    %4225 = vperm.xlu0 %4224, %v3365
    %v4226 = vpop.permute.xlu0 %4225
    %4227 = vset.pattern.permute.xlu0 0
    %4228 = vperm.xlu0 %4227, %v3374
    %v4229 = vpop.permute.xlu0 %4228
    %4230 = vset.pattern.permute.xlu0 0
    %4231 = vperm.xlu0 %4230, %v3383
    %v4232 = vpop.permute.xlu0 %4231
    %4233 = vset.pattern.permute.xlu0 0
    %4234 = vperm.xlu0 %4233, %v3392
    %v4235 = vpop.permute.xlu0 %4234
    %4236 = vset.pattern.permute.xlu0 0
    %4237 = vperm.xlu0 %4236, %v3401
    %v4238 = vpop.permute.xlu0 %4237
    %4239 = vset.pattern.permute.xlu0 0
    %4240 = vperm.xlu0 %4239, %v3410
    %v4241 = vpop.permute.xlu0 %4240
    %4242 = vset.pattern.permute.xlu0 0
    %4243 = vperm.xlu0 %4242, %v3419
    %v4244 = vpop.permute.xlu0 %4243
    %4245 = vset.pattern.permute.xlu0 0
    %4246 = vperm.xlu0 %4245, %v3428
    %v4247 = vpop.permute.xlu0 %4246
    %4248 = vset.pattern.permute.xlu0 0
    %4249 = vperm.xlu0 %4248, %v3437
    %v4250 = vpop.permute.xlu0 %4249
    %4251 = vset.pattern.permute.xlu0 0
    %4252 = vperm.xlu0 %4251, %v3446
    %v4253 = vpop.permute.xlu0 %4252
    %4254 = vset.pattern.permute.xlu0 0
    %4255 = vperm.xlu0 %4254, %v3455
    %v4256 = vpop.permute.xlu0 %4255
    %4257 = vset.pattern.permute.xlu0 0
    %4258 = vperm.xlu0 %4257, %v3464
    %v4259 = vpop.permute.xlu0 %4258
    %4260 = vset.pattern.permute.xlu0 0
    %4261 = vperm.xlu0 %4260, %v3473
    %v4262 = vpop.permute.xlu0 %4261
    %4263 = vset.pattern.permute.xlu0 0
    %4264 = vperm.xlu0 %4263, %v3482
    %v4265 = vpop.permute.xlu0 %4264
    %4266 = vset.pattern.permute.xlu0 0
    %4267 = vperm.xlu0 %4266, %v3491
    %v4268 = vpop.permute.xlu0 %4267
    %4269 = vset.pattern.permute.xlu0 0
    %4270 = vperm.xlu0 %4269, %v3500
    %v4271 = vpop.permute.xlu0 %4270
    %4272 = vset.pattern.permute.xlu0 0
    %4273 = vperm.xlu0 %4272, %v3509
    %v4274 = vpop.permute.xlu0 %4273
    %4275 = vset.pattern.permute.xlu0 0
    %4276 = vperm.xlu0 %4275, %v3518
    %v4277 = vpop.permute.xlu0 %4276
    %4278 = vset.pattern.permute.xlu0 0
    %4279 = vperm.xlu0 %4278, %v3527
    %v4280 = vpop.permute.xlu0 %4279
    %4281 = vset.pattern.permute.xlu0 0
    %4282 = vperm.xlu0 %4281, %v3536
    %v4283 = vpop.permute.xlu0 %4282
    %4284 = vset.pattern.permute.xlu0 0
    %4285 = vperm.xlu0 %4284, %v3545
    %v4286 = vpop.permute.xlu0 %4285
    %4287 = vset.pattern.permute.xlu0 0
    %4288 = vperm.xlu0 %4287, %v3554
    %v4289 = vpop.permute.xlu0 %4288
    %4290 = vset.pattern.permute.xlu0 0
    %4291 = vperm.xlu0 %4290, %v3563
    %v4292 = vpop.permute.xlu0 %4291
    %4293 = vset.pattern.permute.xlu0 0
    %4294 = vperm.xlu0 %4293, %v3572
    %v4295 = vpop.permute.xlu0 %4294
    %4296 = vset.pattern.permute.xlu0 0
    %4297 = vperm.xlu0 %4296, %v3581
    %v4298 = vpop.permute.xlu0 %4297
    %4299 = vset.pattern.permute.xlu0 0
    %4300 = vperm.xlu0 %4299, %v3590
    %v4301 = vpop.permute.xlu0 %4300
    %4302 = vset.pattern.permute.xlu0 0
    %4303 = vperm.xlu0 %4302, %v3599
    %v4304 = vpop.permute.xlu0 %4303
    %4305 = vset.pattern.permute.xlu0 0
    %4306 = vperm.xlu0 %4305, %v3608
    %v4307 = vpop.permute.xlu0 %4306
    %4308 = vset.pattern.permute.xlu0 0
    %4309 = vperm.xlu0 %4308, %v3617
    %v4310 = vpop.permute.xlu0 %4309
    %4311 = vset.pattern.permute.xlu0 0
    %4312 = vperm.xlu0 %4311, %v3626
    %v4313 = vpop.permute.xlu0 %4312
    %4314 = vset.pattern.permute.xlu0 0
    %4315 = vperm.xlu0 %4314, %v3635
    %v4316 = vpop.permute.xlu0 %4315
    %4317 = vset.pattern.permute.xlu0 0
    %4318 = vperm.xlu0 %4317, %v3644
    %v4319 = vpop.permute.xlu0 %4318
    %4320 = vset.pattern.permute.xlu0 0
    %4321 = vperm.xlu0 %4320, %v3653
    %v4322 = vpop.permute.xlu0 %4321
    %4323 = vset.pattern.permute.xlu0 0
    %4324 = vperm.xlu0 %4323, %v3662
    %v4325 = vpop.permute.xlu0 %4324
    %4326 = vset.pattern.permute.xlu0 0
    %4327 = vperm.xlu0 %4326, %v3671
    %v4328 = vpop.permute.xlu0 %4327
    %4329 = vset.pattern.permute.xlu0 0
    %4330 = vperm.xlu0 %4329, %v3680
    %v4331 = vpop.permute.xlu0 %4330
    %4332 = vset.pattern.permute.xlu0 0
    %4333 = vperm.xlu0 %4332, %v3689
    %v4334 = vpop.permute.xlu0 %4333
    %4335 = vset.pattern.permute.xlu0 0
    %4336 = vperm.xlu0 %4335, %v3698
    %v4337 = vpop.permute.xlu0 %4336
    %4338 = vset.pattern.permute.xlu0 0
    %4339 = vperm.xlu0 %4338, %v3707
    %v4340 = vpop.permute.xlu0 %4339
    %4341 = vset.pattern.permute.xlu0 0
    %4342 = vperm.xlu0 %4341, %v3716
    %v4343 = vpop.permute.xlu0 %4342
    %4344 = vset.pattern.permute.xlu0 0
    %4345 = vperm.xlu0 %4344, %v3725
    %v4346 = vpop.permute.xlu0 %4345
    %4347 = vset.pattern.permute.xlu0 0
    %4348 = vperm.xlu0 %4347, %v3734
    %v4349 = vpop.permute.xlu0 %4348
    %4350 = vset.pattern.permute.xlu0 0
    %4351 = vperm.xlu0 %4350, %v3743
    %v4352 = vpop.permute.xlu0 %4351
    %4353 = vset.pattern.permute.xlu0 0
    %4354 = vperm.xlu0 %4353, %v3752
    %v4355 = vpop.permute.xlu0 %4354
    %4356 = vset.pattern.permute.xlu0 0
    %4357 = vperm.xlu0 %4356, %v3761
    %v4358 = vpop.permute.xlu0 %4357
    %4359 = vset.pattern.permute.xlu0 0
    %4360 = vperm.xlu0 %4359, %v3770
    %v4361 = vpop.permute.xlu0 %4360
    %4362 = vset.pattern.permute.xlu0 0
    %4363 = vperm.xlu0 %4362, %v3779
    %v4364 = vpop.permute.xlu0 %4363
    %4365 = vset.pattern.permute.xlu0 0
    %4366 = vperm.xlu0 %4365, %v3788
    %v4367 = vpop.permute.xlu0 %4366
    %4368 = vset.pattern.permute.xlu0 0
    %4369 = vperm.xlu0 %4368, %v3797
    %v4370 = vpop.permute.xlu0 %4369
    %4371 = vset.pattern.permute.xlu0 0
    %4372 = vperm.xlu0 %4371, %v3806
    %v4373 = vpop.permute.xlu0 %4372
    %4374 = vset.pattern.permute.xlu0 0
    %4375 = vperm.xlu0 %4374, %v3815
    %v4376 = vpop.permute.xlu0 %4375
    %4377 = vset.pattern.permute.xlu0 0
    %4378 = vperm.xlu0 %4377, %v3824
    %v4379 = vpop.permute.xlu0 %4378
    %4380 = vset.pattern.permute.xlu0 0
    %4381 = vperm.xlu0 %4380, %v3833
    %v4382 = vpop.permute.xlu0 %4381
    %4383 = vset.pattern.permute.xlu0 0
    %4384 = vperm.xlu0 %4383, %v3842
    %v4385 = vpop.permute.xlu0 %4384
    %4386 = vset.pattern.permute.xlu0 0
    %4387 = vperm.xlu0 %4386, %v3851
    %v4388 = vpop.permute.xlu0 %4387
    %4389 = vset.pattern.permute.xlu0 0
    %4390 = vperm.xlu0 %4389, %v3860
    %v4391 = vpop.permute.xlu0 %4390
    %4392 = vset.pattern.permute.xlu0 0
    %4393 = vperm.xlu0 %4392, %v3869
    %v4394 = vpop.permute.xlu0 %4393
    %4395 = vset.pattern.permute.xlu0 0
    %4396 = vperm.xlu0 %4395, %v3878
    %v4397 = vpop.permute.xlu0 %4396
    %4398 = vset.pattern.permute.xlu0 0
    %4399 = vperm.xlu0 %4398, %v3887
    %v4400 = vpop.permute.xlu0 %4399
    %4401 = vset.pattern.permute.xlu0 0
    %4402 = vperm.xlu0 %4401, %v3896
    %v4403 = vpop.permute.xlu0 %4402
    %4404 = vset.pattern.permute.xlu0 0
    %4405 = vperm.xlu0 %4404, %v3905
    %v4406 = vpop.permute.xlu0 %4405
    %4407 = vset.pattern.permute.xlu0 0
    %4408 = vperm.xlu0 %4407, %v3914
    %v4409 = vpop.permute.xlu0 %4408
    %4410 = vset.pattern.permute.xlu0 0
    %4411 = vperm.xlu0 %4410, %v3923
    %v4412 = vpop.permute.xlu0 %4411
    %4413 = vset.pattern.permute.xlu0 0
    %4414 = vperm.xlu0 %4413, %v3932
    %v4415 = vpop.permute.xlu0 %4414
    %4416 = vset.pattern.permute.xlu0 0
    %4417 = vperm.xlu0 %4416, %v3941
    %v4418 = vpop.permute.xlu0 %4417
    %4419 = vset.pattern.permute.xlu0 0
    %4420 = vperm.xlu0 %4419, %v3950
    %v4421 = vpop.permute.xlu0 %4420
    %4422 = vset.pattern.permute.xlu0 0
    %4423 = vperm.xlu0 %4422, %v3959
    %v4424 = vpop.permute.xlu0 %4423
    %4425 = vset.pattern.permute.xlu0 0
    %4426 = vperm.xlu0 %4425, %v3968
    %v4427 = vpop.permute.xlu0 %4426
    %4428 = vset.pattern.permute.xlu0 0
    %4429 = vperm.xlu0 %4428, %v3977
    %v4430 = vpop.permute.xlu0 %4429
    %4431 = vset.pattern.permute.xlu0 0
    %4432 = vperm.xlu0 %4431, %v3986
    %v4433 = vpop.permute.xlu0 %4432
    %4434 = vset.pattern.permute.xlu0 0
    %4435 = vperm.xlu0 %4434, %v3995
    %v4436 = vpop.permute.xlu0 %4435
    %4437 = vset.pattern.permute.xlu0 0
    %4438 = vperm.xlu0 %4437, %v4004
    %v4439 = vpop.permute.xlu0 %4438
    %4440 = vset.pattern.permute.xlu0 0
    %4441 = vperm.xlu0 %4440, %v4013
    %v4442 = vpop.permute.xlu0 %4441
    %4443 = vset.pattern.permute.xlu0 0
    %4444 = vperm.xlu0 %4443, %v4022
    %v4445 = vpop.permute.xlu0 %4444
    %4446 = vset.pattern.permute.xlu0 0
    %4447 = vperm.xlu0 %4446, %v4031
    %v4448 = vpop.permute.xlu0 %4447
    %4449 = vset.pattern.permute.xlu0 0
    %4450 = vperm.xlu0 %4449, %v4040
    %v4451 = vpop.permute.xlu0 %4450
    %4452 = vset.pattern.permute.xlu0 0
    %4453 = vperm.xlu0 %4452, %v4049
    %v4454 = vpop.permute.xlu0 %4453
    %4455 = vset.pattern.permute.xlu0 0
    %4456 = vperm.xlu0 %4455, %v4058
    %v4457 = vpop.permute.xlu0 %4456
    %4458 = vset.pattern.permute.xlu0 0
    %4459 = vperm.xlu0 %4458, %v4067
    %v4460 = vpop.permute.xlu0 %4459
    %4461 = vset.pattern.permute.xlu0 0
    %4462 = vperm.xlu0 %4461, %v4076
    %v4463 = vpop.permute.xlu0 %4462
    %4464 = vset.pattern.permute.xlu0 0
    %4465 = vperm.xlu0 %4464, %v4085
    %v4466 = vpop.permute.xlu0 %4465
    %4467 = vset.pattern.permute.xlu0 0
    %4468 = vperm.xlu0 %4467, %v4094
    %v4469 = vpop.permute.xlu0 %4468
    %v4470 = vlaneseq
    %v4471 = vand.u32 %v4470, 127
    %v4472 = vperm.slane %v4097, %v4471
    %v4473 = vadd.s32 %v4471, 4294967288
    %v4474 = vperm.slane %v4100, %v4473
    %vm4475 = vcmask 130112
    %v4476 = vsel %vm4475, %v4474, %v4472
    %v4477 = vadd.s32 %v4471, 4294967280
    %v4478 = vperm.slane %v4103, %v4477
    %vm4479 = vcmask 195712
    %v4480 = vsel %vm4479, %v4478, %v4476
    %v4481 = vadd.s32 %v4471, 4294967272
    %v4482 = vperm.slane %v4106, %v4481
    %vm4483 = vcmask 261312
    %v4484 = vsel %vm4483, %v4482, %v4480
    %v4485 = vadd.s32 %v4471, 4294967264
    %v4486 = vperm.slane %v4109, %v4485
    %vm4487 = vcmask 326912
    %v4488 = vsel %vm4487, %v4486, %v4484
    %v4489 = vadd.s32 %v4471, 4294967256
    %v4490 = vperm.slane %v4112, %v4489
    %vm4491 = vcmask 392512
    %v4492 = vsel %vm4491, %v4490, %v4488
    %v4493 = vadd.s32 %v4471, 4294967248
    %v4494 = vperm.slane %v4115, %v4493
    %vm4495 = vcmask 458112
    %v4496 = vsel %vm4495, %v4494, %v4492
    %v4497 = vadd.s32 %v4471, 4294967240
    %v4498 = vperm.slane %v4118, %v4497
    %vm4499 = vcmask 523712
    %v4500 = vsel %vm4499, %v4498, %v4496
    %v4501 = vadd.s32 %v4471, 4294967232
    %v4502 = vperm.slane %v4121, %v4501
    %vm4503 = vcmask 589312
    %v4504 = vsel %vm4503, %v4502, %v4500
    %v4505 = vadd.s32 %v4471, 4294967224
    %v4506 = vperm.slane %v4124, %v4505
    %vm4507 = vcmask 654912
    %v4508 = vsel %vm4507, %v4506, %v4504
    %v4509 = vadd.s32 %v4471, 4294967216
    %v4510 = vperm.slane %v4127, %v4509
    %vm4511 = vcmask 720512
    %v4512 = vsel %vm4511, %v4510, %v4508
    %v4513 = vadd.s32 %v4471, 4294967208
    %v4514 = vperm.slane %v4130, %v4513
    %vm4515 = vcmask 786112
    %v4516 = vsel %vm4515, %v4514, %v4512
    %v4517 = vadd.s32 %v4471, 4294967200
    %v4518 = vperm.slane %v4133, %v4517
    %vm4519 = vcmask 851712
    %v4520 = vsel %vm4519, %v4518, %v4516
    %v4521 = vadd.s32 %v4471, 4294967192
    %v4522 = vperm.slane %v4136, %v4521
    %vm4523 = vcmask 917312
    %v4524 = vsel %vm4523, %v4522, %v4520
    %v4525 = vadd.s32 %v4471, 4294967184
    %v4526 = vperm.slane %v4139, %v4525
    %vm4527 = vcmask 982912
    %v4528 = vsel %vm4527, %v4526, %v4524
    %v4529 = vadd.s32 %v4471, 4294967176
    %v4530 = vperm.slane %v4142, %v4529
    %vm4531 = vcmask 1048512
    %v4532 = vsel %vm4531, %v4530, %v4528
    %v4533 = vperm.slane %v4145, %v4471
    %v4534 = vperm.slane %v4148, %v4473
    %v4535 = vsel %vm4475, %v4534, %v4533
    %v4536 = vperm.slane %v4151, %v4477
    %v4537 = vsel %vm4479, %v4536, %v4535
    %v4538 = vperm.slane %v4154, %v4481
    %v4539 = vsel %vm4483, %v4538, %v4537
    %v4540 = vperm.slane %v4157, %v4485
    %v4541 = vsel %vm4487, %v4540, %v4539
    %v4542 = vperm.slane %v4160, %v4489
    %v4543 = vsel %vm4491, %v4542, %v4541
    %v4544 = vperm.slane %v4163, %v4493
    %v4545 = vsel %vm4495, %v4544, %v4543
    %v4546 = vperm.slane %v4166, %v4497
    %v4547 = vsel %vm4499, %v4546, %v4545
    %v4548 = vperm.slane %v4169, %v4501
    %v4549 = vsel %vm4503, %v4548, %v4547
    %v4550 = vperm.slane %v4172, %v4505
    %v4551 = vsel %vm4507, %v4550, %v4549
    %v4552 = vperm.slane %v4175, %v4509
    %v4553 = vsel %vm4511, %v4552, %v4551
    %v4554 = vperm.slane %v4178, %v4513
    %v4555 = vsel %vm4515, %v4554, %v4553
    %v4556 = vperm.slane %v4181, %v4517
    %v4557 = vsel %vm4519, %v4556, %v4555
    %v4558 = vperm.slane %v4184, %v4521
    %v4559 = vsel %vm4523, %v4558, %v4557
    %v4560 = vperm.slane %v4187, %v4525
    %v4561 = vsel %vm4527, %v4560, %v4559
    %v4562 = vperm.slane %v4190, %v4529
    %v4563 = vsel %vm4531, %v4562, %v4561
    %v4564 = vperm.slane %v4193, %v4471
    %v4565 = vperm.slane %v4196, %v4473
    %v4566 = vsel %vm4475, %v4565, %v4564
    %v4567 = vperm.slane %v4199, %v4477
    %v4568 = vsel %vm4479, %v4567, %v4566
    %v4569 = vperm.slane %v4202, %v4481
    %v4570 = vsel %vm4483, %v4569, %v4568
    %v4571 = vperm.slane %v4205, %v4485
    %v4572 = vsel %vm4487, %v4571, %v4570
    %v4573 = vperm.slane %v4208, %v4489
    %v4574 = vsel %vm4491, %v4573, %v4572
    %v4575 = vperm.slane %v4211, %v4493
    %v4576 = vsel %vm4495, %v4575, %v4574
    %v4577 = vperm.slane %v4214, %v4497
    %v4578 = vsel %vm4499, %v4577, %v4576
    %v4579 = vperm.slane %v4217, %v4501
    %v4580 = vsel %vm4503, %v4579, %v4578
    %v4581 = vperm.slane %v4220, %v4505
    %v4582 = vsel %vm4507, %v4581, %v4580
    %v4583 = vperm.slane %v4223, %v4509
    %v4584 = vsel %vm4511, %v4583, %v4582
    %v4585 = vperm.slane %v4226, %v4513
    %v4586 = vsel %vm4515, %v4585, %v4584
    %v4587 = vperm.slane %v4229, %v4517
    %v4588 = vsel %vm4519, %v4587, %v4586
    %v4589 = vperm.slane %v4232, %v4521
    %v4590 = vsel %vm4523, %v4589, %v4588
    %v4591 = vperm.slane %v4235, %v4525
    %v4592 = vsel %vm4527, %v4591, %v4590
    %v4593 = vperm.slane %v4238, %v4529
    %v4594 = vsel %vm4531, %v4593, %v4592
    %v4595 = vperm.slane %v4241, %v4471
    %v4596 = vperm.slane %v4244, %v4473
    %v4597 = vsel %vm4475, %v4596, %v4595
    %v4598 = vperm.slane %v4247, %v4477
    %v4599 = vsel %vm4479, %v4598, %v4597
    %v4600 = vperm.slane %v4250, %v4481
    %v4601 = vsel %vm4483, %v4600, %v4599
    %v4602 = vperm.slane %v4253, %v4485
    %v4603 = vsel %vm4487, %v4602, %v4601
    %v4604 = vperm.slane %v4256, %v4489
    %v4605 = vsel %vm4491, %v4604, %v4603
    %v4606 = vperm.slane %v4259, %v4493
    %v4607 = vsel %vm4495, %v4606, %v4605
    %v4608 = vperm.slane %v4262, %v4497
    %v4609 = vsel %vm4499, %v4608, %v4607
    %v4610 = vperm.slane %v4265, %v4501
    %v4611 = vsel %vm4503, %v4610, %v4609
    %v4612 = vperm.slane %v4268, %v4505
    %v4613 = vsel %vm4507, %v4612, %v4611
    %v4614 = vperm.slane %v4271, %v4509
    %v4615 = vsel %vm4511, %v4614, %v4613
    %v4616 = vperm.slane %v4274, %v4513
    %v4617 = vsel %vm4515, %v4616, %v4615
    %v4618 = vperm.slane %v4277, %v4517
    %v4619 = vsel %vm4519, %v4618, %v4617
    %v4620 = vperm.slane %v4280, %v4521
    %v4621 = vsel %vm4523, %v4620, %v4619
    %v4622 = vperm.slane %v4283, %v4525
    %v4623 = vsel %vm4527, %v4622, %v4621
    %v4624 = vperm.slane %v4286, %v4529
    %v4625 = vsel %vm4531, %v4624, %v4623
    %v4626 = vperm.slane %v4289, %v4471
    %v4627 = vperm.slane %v4292, %v4473
    %v4628 = vsel %vm4475, %v4627, %v4626
    %v4629 = vperm.slane %v4295, %v4477
    %v4630 = vsel %vm4479, %v4629, %v4628
    %v4631 = vperm.slane %v4298, %v4481
    %v4632 = vsel %vm4483, %v4631, %v4630
    %v4633 = vperm.slane %v4301, %v4485
    %v4634 = vsel %vm4487, %v4633, %v4632
    %v4635 = vperm.slane %v4304, %v4489
    %v4636 = vsel %vm4491, %v4635, %v4634
    %v4637 = vperm.slane %v4307, %v4493
    %v4638 = vsel %vm4495, %v4637, %v4636
    %v4639 = vperm.slane %v4310, %v4497
    %v4640 = vsel %vm4499, %v4639, %v4638
    %v4641 = vperm.slane %v4313, %v4501
    %v4642 = vsel %vm4503, %v4641, %v4640
    %v4643 = vperm.slane %v4316, %v4505
    %v4644 = vsel %vm4507, %v4643, %v4642
    %v4645 = vperm.slane %v4319, %v4509
    %v4646 = vsel %vm4511, %v4645, %v4644
    %v4647 = vperm.slane %v4322, %v4513
    %v4648 = vsel %vm4515, %v4647, %v4646
    %v4649 = vperm.slane %v4325, %v4517
    %v4650 = vsel %vm4519, %v4649, %v4648
    %v4651 = vperm.slane %v4328, %v4521
    %v4652 = vsel %vm4523, %v4651, %v4650
    %v4653 = vperm.slane %v4331, %v4525
    %v4654 = vsel %vm4527, %v4653, %v4652
    %v4655 = vperm.slane %v4334, %v4529
    %v4656 = vsel %vm4531, %v4655, %v4654
    %v4657 = vperm.slane %v4337, %v4471
    %v4658 = vperm.slane %v4340, %v4473
    %v4659 = vsel %vm4475, %v4658, %v4657
    %v4660 = vperm.slane %v4343, %v4477
    %v4661 = vsel %vm4479, %v4660, %v4659
    %v4662 = vperm.slane %v4346, %v4481
    %v4663 = vsel %vm4483, %v4662, %v4661
    %v4664 = vperm.slane %v4349, %v4485
    %v4665 = vsel %vm4487, %v4664, %v4663
    %v4666 = vperm.slane %v4352, %v4489
    %v4667 = vsel %vm4491, %v4666, %v4665
    %v4668 = vperm.slane %v4355, %v4493
    %v4669 = vsel %vm4495, %v4668, %v4667
    %v4670 = vperm.slane %v4358, %v4497
    %v4671 = vsel %vm4499, %v4670, %v4669
    %v4672 = vperm.slane %v4361, %v4501
    %v4673 = vsel %vm4503, %v4672, %v4671
    %v4674 = vperm.slane %v4364, %v4505
    %v4675 = vsel %vm4507, %v4674, %v4673
    %v4676 = vperm.slane %v4367, %v4509
    %v4677 = vsel %vm4511, %v4676, %v4675
    %v4678 = vperm.slane %v4370, %v4513
    %v4679 = vsel %vm4515, %v4678, %v4677
    %v4680 = vperm.slane %v4373, %v4517
    %v4681 = vsel %vm4519, %v4680, %v4679
    %v4682 = vperm.slane %v4376, %v4521
    %v4683 = vsel %vm4523, %v4682, %v4681
    %v4684 = vperm.slane %v4379, %v4525
    %v4685 = vsel %vm4527, %v4684, %v4683
    %v4686 = vperm.slane %v4382, %v4529
    %v4687 = vsel %vm4531, %v4686, %v4685
    %v4688 = vperm.slane %v4385, %v4471
    %v4689 = vperm.slane %v4388, %v4473
    %v4690 = vsel %vm4475, %v4689, %v4688
    %v4691 = vperm.slane %v4391, %v4477
    %v4692 = vsel %vm4479, %v4691, %v4690
    %v4693 = vperm.slane %v4394, %v4481
    %v4694 = vsel %vm4483, %v4693, %v4692
    %v4695 = vperm.slane %v4397, %v4485
    %v4696 = vsel %vm4487, %v4695, %v4694
    %v4697 = vperm.slane %v4400, %v4489
    %v4698 = vsel %vm4491, %v4697, %v4696
    %v4699 = vperm.slane %v4403, %v4493
    %v4700 = vsel %vm4495, %v4699, %v4698
    %v4701 = vperm.slane %v4406, %v4497
    %v4702 = vsel %vm4499, %v4701, %v4700
    %v4703 = vperm.slane %v4409, %v4501
    %v4704 = vsel %vm4503, %v4703, %v4702
    %v4705 = vperm.slane %v4412, %v4505
    %v4706 = vsel %vm4507, %v4705, %v4704
    %v4707 = vperm.slane %v4415, %v4509
    %v4708 = vsel %vm4511, %v4707, %v4706
    %v4709 = vperm.slane %v4418, %v4513
    %v4710 = vsel %vm4515, %v4709, %v4708
    %v4711 = vperm.slane %v4421, %v4517
    %v4712 = vsel %vm4519, %v4711, %v4710
    %v4713 = vperm.slane %v4424, %v4521
    %v4714 = vsel %vm4523, %v4713, %v4712
    %v4715 = vperm.slane %v4427, %v4525
    %v4716 = vsel %vm4527, %v4715, %v4714
    %v4717 = vperm.slane %v4430, %v4529
    %v4718 = vsel %vm4531, %v4717, %v4716
    %v4719 = vperm.slane %v4433, %v4471
    %v4720 = vperm.slane %v4436, %v4473
    %v4721 = vsel %vm4475, %v4720, %v4719
    %v4722 = vperm.slane %v4439, %v4477
    %v4723 = vsel %vm4479, %v4722, %v4721
    %v4724 = vperm.slane %v4442, %v4481
    %v4725 = vsel %vm4483, %v4724, %v4723
    %v4726 = vperm.slane %v4445, %v4485
    %v4727 = vsel %vm4487, %v4726, %v4725
    %v4728 = vperm.slane %v4448, %v4489
    %v4729 = vsel %vm4491, %v4728, %v4727
    %v4730 = vperm.slane %v4451, %v4493
    %v4731 = vsel %vm4495, %v4730, %v4729
    %v4732 = vperm.slane %v4454, %v4497
    %v4733 = vsel %vm4499, %v4732, %v4731
    %v4734 = vperm.slane %v4457, %v4501
    %v4735 = vsel %vm4503, %v4734, %v4733
    %v4736 = vperm.slane %v4460, %v4505
    %v4737 = vsel %vm4507, %v4736, %v4735
    %v4738 = vperm.slane %v4463, %v4509
    %v4739 = vsel %vm4511, %v4738, %v4737
    %v4740 = vperm.slane %v4466, %v4513
    %v4741 = vsel %vm4515, %v4740, %v4739
    %v4742 = vperm.slane %v4469, %v4517
    %v4743 = vsel %vm4519, %v4742, %v4741
    %v4744 = vrot.slane %v4563, 7
    %v4745 = vrot.slane %v4594, 6
    %v4746 = vrot.slane %v4625, 5
    %v4747 = vrot.slane %v4656, 4
    %v4748 = vrot.slane %v4687, 3
    %v4749 = vrot.slane %v4718, 2
    %v4750 = vrot.slane %v4743, 1
    %vm4751 = vcmask 1040384
    %v4752 = vsel %vm4751, %v4532, %v4744
    %vm4753 = vcmask 1042434
    %v4754 = vsel %vm4753, %v4745, %v4746
    %vm4755 = vcmask 1041408
    %v4756 = vsel %vm4755, %v4752, %v4754
    %vm4757 = vcmask 1044484
    %v4758 = vsel %vm4757, %v4747, %v4748
    %vm4759 = vcmask 1046534
    %v4760 = vsel %vm4759, %v4749, %v4750
    %vm4761 = vcmask 1045508
    %v4762 = vsel %vm4761, %v4758, %v4760
    %vm4763 = vcmask 1043456
    %v4764 = vsel %vm4763, %v4756, %v4762
    %v4766 = vlaneseq
    %vm4767 = vcmp.ge.s32.totalorder %v4766, 0
    %vm4768 = vcmp.lt.s32.totalorder %v4766, 1000
    %vm4769 = vmand %vm4767, %vm4768
    %4770 = vst.msk [vmem:[#allocation3] sm:$0xff] %vm4769, %v4764
    // Predicated region
    $region30: #{sales_model_forward.1} parent=1 // pred_check
      _
    $region31: #{sales_model_forward.1} parent=1 // pred_check_branch
      %4772 = sbr.rel (0) target = $region33
    $region32: #{sales_model_forward.1} parent=1 // pred_region
      %4774 = vsyncadd [#allocation4], 0
      %s4776 = sshll.u32 [#allocation3], 4
      %s4777 = int_to_ptr.vmem [resolvable:$true] %s4776
      %s4778 = sshll.u32 %s7, 4
      %s4779 = int_to_ptr.hbm [resolvable:$true] %s4778
      %4781 = dma.vmem_to_hbm [thread:$0]  %s4777, 128, %s4779, [#allocation4]
    $region33: #{sales_model_forward.1} parent=1 // pred_fallthru
      _
    // Predicated region
    $region34: #{sales_model_forward.1} parent=1 // pred_check
      _
    $region35: #{sales_model_forward.1} parent=1 // pred_check_branch
      %4783 = sbr.rel (0) target = $region37
    $region36: #{sales_model_forward.1} parent=1 // pred_region
      %4785 = dma.done [#allocation4], 128
    $region37: #{sales_model_forward.1} parent=1 // pred_fallthru
      _
    %4786 = vsyncpa [#allocation4], 1

</llo_original>
